<compile_context>
chip_gen: v5e
topology: v5e:2x2
jax: 0.10.0
libtpu: 0.0.40
codegen_flags: <defaults>
</compile_context>

<pallas_src>
import numpy as np
import jax
import jax.numpy as jnp
from jax.experimental import pallas as pl
from jax.experimental.pallas import tpu as pltpu


# ----------------------------------------------------------------------------
# Kernel
# ----------------------------------------------------------------------------
def svega_forward_kernel(
    x_ref, w1_ref, b1_ref, w2_ref, b2_ref,
    wmv_ref, bmv_ref, eps_ref, wdm_ref, bd_ref,
    wrf_ref, brf_ref, cut_ref,
    xrec_ref, aux_ref,
):
    # --- encoder (FCLayers, 2 layers, hidden padded 800 -> 896) -------------
    # Eval-mode BatchNorm1d (default running stats, eps=1e-3, gamma=1, beta=0)
    # is already folded into w1/b1/w2/b2 at parameter-prep time.
    # TODO(synk): train-mode BatchNorm (batch statistics) and dropout are not
    # modeled; this is the deterministic eval forward.
    x = x_ref[...].astype(jnp.bfloat16)
    h = jnp.dot(x, w1_ref[...], preferred_element_type=jnp.float32) + b1_ref[...]
    h = jnp.maximum(h, 0.0)
    h = jnp.dot(h.astype(jnp.bfloat16), w2_ref[...],
                preferred_element_type=jnp.float32) + b2_ref[...]
    h = jnp.maximum(h, 0.0)

    # --- latent heads: fused mu|logvar matmul (H, 2M) -----------------------
    mlv = jnp.dot(h.astype(jnp.bfloat16), wmv_ref[...],
                  preferred_element_type=jnp.float32) + bmv_ref[...]
    M = eps_ref.shape[-1]
    mu = mlv[:, :M]
    logvar = mlv[:, M:]

    # --- reparameterization trick -------------------------------------------
    std = jnp.exp(0.5 * logvar)
    z = eps_ref[...] * std + mu

    # --- VEGA masked decoder (mask pre-folded into weights) -----------------
    xrec_ref[...] = (
        jnp.dot(z.astype(jnp.bfloat16), wdm_ref[...],
                preferred_element_type=jnp.float32) + bd_ref[...]
    )

    # --- ordinal logistic regressor (Linear(M,M)->Linear(M,1) pre-fused) ----
    pred = jnp.sum(z * wrf_ref[...], axis=-1, keepdims=True) + brf_ref[...]
    pred = jnp.maximum(pred, 0.0)                       # ReLU per torch spec

    # LogisticCumulativeLink via padded cutpoints: sigmoid(-BIG)=0, (+BIG)=1,
    # so a single lane difference reproduces [sig0, diffs..., 1 - sig_last].
    sig = jax.nn.sigmoid(cut_ref[...] - pred)           # (bB, C+1)
    dose = sig[:, 1:] - sig[:, :-1]                     # (bB, C)

    # --- single lane-dense auxiliary output slab: [ mu | logvar | dose | 0 ] -
    C = cut_ref.shape[-1] - 1
    aux_ref[...] = jnp.zeros_like(aux_ref)
    aux_ref[:, :2 * M] = mlv
    aux_ref[:, 2 * M:2 * M + C] = dose


# ----------------------------------------------------------------------------
# Parameter preparation (fold / fuse / pad / cast) -- done once, off-kernel
# ----------------------------------------------------------------------------
def prepare_params(params, bn_eps=1e-3):
    H = params["w1"].shape[1]
    Hp = ((H + 127) // 128) * 128          # 800 -> 896, lane-aligned
    ph = Hp - H

    # eval-mode BatchNorm1d with default running stats (mean=0, var=1) and
    # affine defaults (gamma=1, beta=0) is a pure scalar rescale -> fold it
    # into the preceding Linear weights/bias (exact, applied before ReLU).
    # TODO(synk): for real checkpoints fold per-feature running stats and
    # gamma/beta vectors here instead of the default-stat scalar.
    s_bn = float(1.0 / np.sqrt(1.0 + bn_eps))

    w1 = jnp.pad(params["w1"] * s_bn, ((0, 0), (0, ph))).astype(jnp.bfloat16)
    b1 = jnp.pad(params["b1"] * s_bn, ((0, 0), (0, ph)))
    w2 = jnp.pad(params["w2"] * s_bn, ((0, ph), (0, ph))).astype(jnp.bfloat16)
    b2 = jnp.pad(params["b2"] * s_bn, ((0, 0), (0, ph)))

    # fused mean|logvar head: (Hp, 2M) weight, (1, 2M) bias
    wmv = jnp.pad(jnp.concatenate([params["wm"], params["wv"]], axis=1),
                  ((0, ph), (0, 0))).astype(jnp.bfloat16)
    bmv = jnp.concatenate([params["bm"], params["bv"]], axis=1)

    # decoder mask folded into the weights (one masked-linear weight)
    # TODO(synk): positive-weight constraint is assumed already enforced on wd.
    wdm = (params["wd"] * params["mask"]).astype(jnp.bfloat16)
    bd = params["bd"]

    # ordinal regressor fusion: Linear(M,M) -> Linear(M,1) has no nonlinearity
    # in between, so collapse to a single (1, M) vector + scalar bias.
    wrf = (params["wr1"] @ params["wr2"]).T                     # (1, M)
    brf = params["br1"] @ params["wr2"] + params["br2"]         # (1, 1)

    # padded cutpoints for the concat-free cumulative-link formulation
    big = jnp.full((1, 1), 1e9, jnp.float32)
    cut_pad = jnp.concatenate([-big, params["cut"], big], axis=1)

    return dict(w1=w1, b1=b1, w2=w2, b2=b2, wmv=wmv, bmv=bmv,
                wdm=wdm, bd=bd, wrf=wrf, brf=brf,
                cut_pad=cut_pad, cut_raw=params["cut"])


# ----------------------------------------------------------------------------
# Wrapper
# ----------------------------------------------------------------------------
def svega_forward(x, prep, eps, block_b=None):
    """Runs the whole SVEGA forward pass as one batch-tiled Pallas kernel."""
    B, G = x.shape
    M = eps.shape[1]
    C = prep["cut_pad"].shape[1] - 1
    AUXW = ((2 * M + C + 127) // 128) * 128        # lane-dense aux slab width

    if block_b is None:
        block_b = min(B, 256)
    block_b = max(8, ((min(block_b, 256) + 7) // 8) * 8)   # sublane-aligned
    Bp = ((B + block_b - 1) // block_b) * block_b
    if Bp != B:
        x = jnp.pad(x, ((0, Bp - B), (0, 0)))
        eps = jnp.pad(eps, ((0, Bp - B), (0, 0)))
    grid = (Bp // block_b,)

    def resident(arr):
        # whole-array block with a constant index map: DMA'd once, stays in VMEM
        return pl.BlockSpec(arr.shape, lambda i: (0,) * arr.ndim)

    in_specs = [
        pl.BlockSpec((block_b, G), lambda i: (i, 0)),      # x     (batch-tiled)
        resident(prep["w1"]), resident(prep["b1"]),
        resident(prep["w2"]), resident(prep["b2"]),
        resident(prep["wmv"]), resident(prep["bmv"]),
        pl.BlockSpec((block_b, M), lambda i: (i, 0)),      # eps   (batch-tiled)
        resident(prep["wdm"]), resident(prep["bd"]),
        resident(prep["wrf"]), resident(prep["brf"]),
        resident(prep["cut_pad"]),
    ]
    out_specs = (
        pl.BlockSpec((block_b, G), lambda i: (i, 0)),      # X_rec
        pl.BlockSpec((block_b, AUXW), lambda i: (i, 0)),   # [mu|logvar|dose|0]
    )

    xrec, aux = pl.pallas_call(
        svega_forward_kernel,
        grid=grid,
        out_shape=(
            jax.ShapeDtypeStruct((Bp, G), jnp.float32),
            jax.ShapeDtypeStruct((Bp, AUXW), jnp.float32),
        ),
        in_specs=in_specs,
        out_specs=out_specs,
        compiler_params=pltpu.CompilerParams(
            dimension_semantics=("parallel",),   # megacore-shard batch on v7x
            vmem_limit_bytes=16 << 20,           # actual footprint ~5 MiB
        ),
    )(x, prep["w1"], prep["b1"], prep["w2"], prep["b2"],
      prep["wmv"], prep["bmv"], eps, prep["wdm"], prep["bd"],
      prep["wrf"], prep["brf"], prep["cut_pad"])

    xrec = xrec[:B]
    mu = aux[:B, :M]
    logvar = aux[:B, M:2 * M]
    dose = aux[:B, 2 * M:2 * M + C]
    cutpoints = np.asarray(prep["cut_raw"]).reshape(-1)
    return dose, xrec, mu, logvar, cutpoints


# ----------------------------------------------------------------------------
# Synthetic parameters (no checkpoint / GMT / CSV files)
# ----------------------------------------------------------------------------
def init_params(key, G, M, H, C):
    ks = jax.random.split(key, 10)
    s = lambda fan_in: 1.0 / np.sqrt(fan_in)

    # synthetic gene-module mask (n_gmvs, input_dim): block structure plus one
    # fully-connected "add_node", standing in for create_mask(gmt_paths, ...)
    genes_per_mod = G // M
    mod_idx = jnp.arange(M)[:, None]
    gene_idx = jnp.arange(G)[None, :]
    mask = (gene_idx // genes_per_mod == mod_idx).astype(jnp.float32)
    mask = mask.at[M - 1, :].set(1.0)     # add_nodes=1 -> fully connected node

    params = {
        "w1": jax.random.normal(ks[0], (G, H), jnp.float32) * s(G),
        "b1": jnp.zeros((1, H), jnp.float32),
        "w2": jax.random.normal(ks[1], (H, H), jnp.float32) * s(H),
        "b2": jnp.zeros((1, H), jnp.float32),
        "wm": jax.random.normal(ks[2], (H, M), jnp.float32) * s(H),
        "bm": jnp.zeros((1, M), jnp.float32),
        "wv": jax.random.normal(ks[3], (H, M), jnp.float32) * s(H),
        "bv": jnp.zeros((1, M), jnp.float32),
        # positive_decoder=True -> weights constrained non-negative
        "wd": jnp.abs(jax.random.normal(ks[4], (M, G), jnp.float32) * s(M)),
        "bd": jnp.zeros((1, G), jnp.float32),
        "wr1": jax.random.normal(ks[5], (M, M), jnp.float32) * s(M),
        "br1": jnp.zeros((1, M), jnp.float32),
        "wr2": jax.random.normal(ks[6], (M, 1), jnp.float32) * s(M),
        "br2": jnp.zeros((1, 1), jnp.float32),
        # ascending cutpoints, as in spacecutter's LogisticCumulativeLink init
        "cut": (jnp.arange(C - 1, dtype=jnp.float32) - (C - 1) / 2.0).reshape(1, C - 1),
        "mask": mask,
    }
    return params


if __name__ == "__main__":
    # small shapes consistent with the module (encoder hidden fixed at 800)
    B, G, M, H, C = 16, 256, 32, 800, 9

    key = jax.random.PRNGKey(0)
    k_param, k_x, k_eps = jax.random.split(key, 3)

    params = init_params(k_param, G, M, H, C)
    prep = prepare_params(params)

    x = jax.random.normal(k_x, (B, G), jnp.float32)
    # deterministic stand-in for torch.FloatTensor(std.size()).normal_()
    eps = jax.random.normal(k_eps, (B, M), jnp.float32)

    dose_hat, x_rec, mu, logvar, cutpoints = svega_forward(x, prep, eps, block_b=8)
    jax.block_until_ready((dose_hat, x_rec, mu, logvar))

    assert dose_hat.shape == (B, C)
    assert x_rec.shape == (B, G)
    assert mu.shape == (B, M)
    assert logvar.shape == (B, M)
    assert cutpoints.shape == (C - 1,)
    assert bool(jnp.all(jnp.isfinite(dose_hat)))
    assert bool(jnp.all(jnp.isfinite(x_rec)))
    # cumulative-link probabilities should sum to 1 per row
    assert bool(jnp.all(jnp.abs(jnp.sum(dose_hat, axis=-1) - 1.0) < 1e-4))

    # TODO(synk): dropout / train-mode BatchNorm batch statistics are not
    # modeled (eval-mode forward only); eps noise is supplied externally.
    print("KERNEL_OK")
</pallas_src>

<mosaic_0001>
module attributes {stable_mosaic.version = 11 : i64} {
  func.func @svega_forward_kernel(%arg0: i32, %arg1: memref<8x256xf32, #tpu.memory_space<vmem>>, %arg2: memref<256x896xbf16, #tpu.memory_space<vmem>>, %arg3: memref<1x896xf32, #tpu.memory_space<vmem>>, %arg4: memref<896x896xbf16, #tpu.memory_space<vmem>>, %arg5: memref<1x896xf32, #tpu.memory_space<vmem>>, %arg6: memref<896x64xbf16, #tpu.memory_space<vmem>>, %arg7: memref<1x64xf32, #tpu.memory_space<vmem>>, %arg8: memref<8x32xf32, #tpu.memory_space<vmem>>, %arg9: memref<32x256xbf16, #tpu.memory_space<vmem>>, %arg10: memref<1x256xf32, #tpu.memory_space<vmem>>, %arg11: memref<1x32xf32, #tpu.memory_space<vmem>>, %arg12: memref<1x1xf32, #tpu.memory_space<vmem>>, %arg13: memref<1x10xf32, #tpu.memory_space<vmem>>, %arg14: memref<8x256xf32, #tpu.memory_space<vmem>>, %arg15: memref<8x128xf32, #tpu.memory_space<vmem>>) attributes {dimension_semantics = [#tpu.dimension_semantics<parallel>], iteration_bounds = array<i64: 2>, scalar_prefetch = 0 : i64, scratch_operands = 0 : i64, tpu.core_type = #tpu.core_type<tc>, window_params = [{transform_indices = @transform_0, window_bounds = array<i64: 8, 256>}, {pipeline_mode = #tpu.pipeline_mode<synchronous>, transform_indices = @transform_1, window_bounds = array<i64: 256, 896>}, {pipeline_mode = #tpu.pipeline_mode<synchronous>, transform_indices = @transform_2, window_bounds = array<i64: 1, 896>}, {pipeline_mode = #tpu.pipeline_mode<synchronous>, transform_indices = @transform_3, window_bounds = array<i64: 896, 896>}, {pipeline_mode = #tpu.pipeline_mode<synchronous>, transform_indices = @transform_4, window_bounds = array<i64: 1, 896>}, {pipeline_mode = #tpu.pipeline_mode<synchronous>, transform_indices = @transform_5, window_bounds = array<i64: 896, 64>}, {pipeline_mode = #tpu.pipeline_mode<synchronous>, transform_indices = @transform_6, window_bounds = array<i64: 1, 64>}, {transform_indices = @transform_7, window_bounds = array<i64: 8, 32>}, {pipeline_mode = #tpu.pipeline_mode<synchronous>, transform_indices = @transform_8, window_bounds = array<i64: 32, 256>}, {pipeline_mode = #tpu.pipeline_mode<synchronous>, transform_indices = @transform_9, window_bounds = array<i64: 1, 256>}, {pipeline_mode = #tpu.pipeline_mode<synchronous>, transform_indices = @transform_10, window_bounds = array<i64: 1, 32>}, {pipeline_mode = #tpu.pipeline_mode<synchronous>, transform_indices = @transform_11, window_bounds = array<i64: 1, 1>}, {pipeline_mode = #tpu.pipeline_mode<synchronous>, transform_indices = @transform_12, window_bounds = array<i64: 1, 10>}, {transform_indices = @transform_13, window_bounds = array<i64: 8, 256>}, {transform_indices = @transform_14, window_bounds = array<i64: 8, 128>}]} {
    %c0 = arith.constant 0 : index
    %c0_0 = arith.constant 0 : index
    %0 = vector.load %arg1[%c0, %c0_0] : memref<8x256xf32, #tpu.memory_space<vmem>>, vector<8x256xf32>
    %1 = arith.truncf %0 : vector<8x256xf32> to vector<8x256xbf16>
    %c0_1 = arith.constant 0 : index
    %c0_2 = arith.constant 0 : index
    %2 = vector.load %arg2[%c0_1, %c0_2] : memref<256x896xbf16, #tpu.memory_space<vmem>>, vector<256x896xbf16>
    %cst = arith.constant dense<0.000000e+00> : vector<8x896xf32>
    %3 = tpu.matmul %1, %2, %cst {dimension_numbers = #tpu.dot_dimension_numbers<[1], [0], [0], [1], [0, 0, 1, 1], [], []>} : vector<8x256xbf16>, vector<256x896xbf16>, vector<8x896xf32> -> vector<8x896xf32>
    %c0_3 = arith.constant 0 : index
    %c0_4 = arith.constant 0 : index
    %4 = vector.load %arg3[%c0_3, %c0_4] : memref<1x896xf32, #tpu.memory_space<vmem>>, vector<1x896xf32>
    %5 = vector.broadcast %4 : vector<1x896xf32> to vector<8x896xf32>
    %6 = arith.addf %3, %5 : vector<8x896xf32>
    %cst_5 = arith.constant 0.000000e+00 : f32
    %7 = vector.broadcast %cst_5 : f32 to vector<8x896xf32>
    %8 = arith.maximumf %6, %7 : vector<8x896xf32>
    %9 = arith.truncf %8 : vector<8x896xf32> to vector<8x896xbf16>
    %c0_6 = arith.constant 0 : index
    %c0_7 = arith.constant 0 : index
    %10 = vector.load %arg4[%c0_6, %c0_7] : memref<896x896xbf16, #tpu.memory_space<vmem>>, vector<896x896xbf16>
    %cst_8 = arith.constant dense<0.000000e+00> : vector<8x896xf32>
    %11 = tpu.matmul %9, %10, %cst_8 {dimension_numbers = #tpu.dot_dimension_numbers<[1], [0], [0], [1], [0, 0, 1, 1], [], []>} : vector<8x896xbf16>, vector<896x896xbf16>, vector<8x896xf32> -> vector<8x896xf32>
    %c0_9 = arith.constant 0 : index
    %c0_10 = arith.constant 0 : index
    %12 = vector.load %arg5[%c0_9, %c0_10] : memref<1x896xf32, #tpu.memory_space<vmem>>, vector<1x896xf32>
    %13 = vector.broadcast %12 : vector<1x896xf32> to vector<8x896xf32>
    %14 = arith.addf %11, %13 : vector<8x896xf32>
    %cst_11 = arith.constant 0.000000e+00 : f32
    %15 = vector.broadcast %cst_11 : f32 to vector<8x896xf32>
    %16 = arith.maximumf %14, %15 : vector<8x896xf32>
    %17 = arith.truncf %16 : vector<8x896xf32> to vector<8x896xbf16>
    %c0_12 = arith.constant 0 : index
    %c0_13 = arith.constant 0 : index
    %18 = vector.load %arg6[%c0_12, %c0_13] : memref<896x64xbf16, #tpu.memory_space<vmem>>, vector<896x64xbf16>
    %cst_14 = arith.constant dense<0.000000e+00> : vector<8x64xf32>
    %19 = tpu.matmul %17, %18, %cst_14 {dimension_numbers = #tpu.dot_dimension_numbers<[1], [0], [0], [1], [0, 0, 1, 1], [], []>} : vector<8x896xbf16>, vector<896x64xbf16>, vector<8x64xf32> -> vector<8x64xf32>
    %c0_15 = arith.constant 0 : index
    %c0_16 = arith.constant 0 : index
    %20 = vector.load %arg7[%c0_15, %c0_16] : memref<1x64xf32, #tpu.memory_space<vmem>>, vector<1x64xf32>
    %21 = vector.broadcast %20 : vector<1x64xf32> to vector<8x64xf32>
    %22 = arith.addf %19, %21 : vector<8x64xf32>
    %23 = vector.extract_strided_slice %22 {offsets = [0, 0], sizes = [8, 32], strides = [1, 1]} : vector<8x64xf32> to vector<8x32xf32>
    %24 = vector.extract_strided_slice %22 {offsets = [0, 32], sizes = [8, 32], strides = [1, 1]} : vector<8x64xf32> to vector<8x32xf32>
    %cst_17 = arith.constant 5.000000e-01 : f32
    %25 = vector.broadcast %cst_17 : f32 to vector<8x32xf32>
    %26 = arith.mulf %25, %24 : vector<8x32xf32>
    %27 = math.exp %26 : vector<8x32xf32>
    %c0_18 = arith.constant 0 : index
    %c0_19 = arith.constant 0 : index
    %28 = vector.load %arg8[%c0_18, %c0_19] : memref<8x32xf32, #tpu.memory_space<vmem>>, vector<8x32xf32>
    %29 = arith.mulf %28, %27 : vector<8x32xf32>
    %30 = arith.addf %29, %23 : vector<8x32xf32>
    %31 = arith.truncf %30 : vector<8x32xf32> to vector<8x32xbf16>
    %c0_20 = arith.constant 0 : index
    %c0_21 = arith.constant 0 : index
    %32 = vector.load %arg9[%c0_20, %c0_21] : memref<32x256xbf16, #tpu.memory_space<vmem>>, vector<32x256xbf16>
    %cst_22 = arith.constant dense<0.000000e+00> : vector<8x256xf32>
    %33 = tpu.matmul %31, %32, %cst_22 {dimension_numbers = #tpu.dot_dimension_numbers<[1], [0], [0], [1], [0, 0, 1, 1], [], []>} : vector<8x32xbf16>, vector<32x256xbf16>, vector<8x256xf32> -> vector<8x256xf32>
    %c0_23 = arith.constant 0 : index
    %c0_24 = arith.constant 0 : index
    %34 = vector.load %arg10[%c0_23, %c0_24] : memref<1x256xf32, #tpu.memory_space<vmem>>, vector<1x256xf32>
    %35 = vector.broadcast %34 : vector<1x256xf32> to vector<8x256xf32>
    %36 = arith.addf %33, %35 : vector<8x256xf32>
    %c0_25 = arith.constant 0 : index
    %c0_26 = arith.constant 0 : index
    %37 = vector.load %arg14[%c0_25, %c0_26] : memref<8x256xf32, #tpu.memory_space<vmem>>, vector<8x256xf32>
    tpu.vector_store %arg14[%c0_25, %c0_26], %36 {strides = array<i32>} : memref<8x256xf32, #tpu.memory_space<vmem>>, vector<8x256xf32>,
    %c0_27 = arith.constant 0 : index
    %c0_28 = arith.constant 0 : index
    %38 = vector.load %arg11[%c0_27, %c0_28] : memref<1x32xf32, #tpu.memory_space<vmem>>, vector<1x32xf32>
    %39 = vector.broadcast %38 : vector<1x32xf32> to vector<8x32xf32>
    %40 = arith.mulf %30, %39 : vector<8x32xf32>
    %cst_29 = arith.constant dense<0.000000e+00> : vector<8xf32>
    %41 = vector.multi_reduction <add>, %40, %cst_29 [1] : vector<8x32xf32> to vector<8xf32>
    %42 = vector.shape_cast %41 : vector<8xf32> to vector<8x1xf32>
    %c0_30 = arith.constant 0 : index
    %c0_31 = arith.constant 0 : index
    %43 = vector.load %arg12[%c0_30, %c0_31] : memref<1x1xf32, #tpu.memory_space<vmem>>, vector<1x1xf32>
    %44 = vector.broadcast %43 : vector<1x1xf32> to vector<8x1xf32>
    %45 = arith.addf %42, %44 : vector<8x1xf32>
    %cst_32 = arith.constant 0.000000e+00 : f32
    %46 = vector.broadcast %cst_32 : f32 to vector<8x1xf32>
    %47 = arith.maximumf %45, %46 : vector<8x1xf32>
    %c0_33 = arith.constant 0 : index
    %c0_34 = arith.constant 0 : index
    %48 = vector.load %arg13[%c0_33, %c0_34] : memref<1x10xf32, #tpu.memory_space<vmem>>, vector<1x10xf32>
    %49 = vector.broadcast %48 : vector<1x10xf32> to vector<8x10xf32>
    %50 = vector.broadcast %47 : vector<8x1xf32> to vector<8x10xf32>
    %51 = arith.subf %49, %50 : vector<8x10xf32>
    %52 = arith.negf %51 : vector<8x10xf32>
    %53 = math.exp %52 : vector<8x10xf32>
    %cst_35 = arith.constant 1.000000e+00 : f32
    %54 = vector.broadcast %cst_35 : f32 to vector<8x10xf32>
    %55 = arith.addf %54, %53 : vector<8x10xf32>
    %56 = arith.divf %54, %55 : vector<8x10xf32>
    %57 = vector.extract_strided_slice %56 {offsets = [0, 1], sizes = [8, 9], strides = [1, 1]} : vector<8x10xf32> to vector<8x9xf32>
    %58 = vector.extract_strided_slice %56 {offsets = [0, 0], sizes = [8, 9], strides = [1, 1]} : vector<8x10xf32> to vector<8x9xf32>
    %59 = arith.subf %57, %58 : vector<8x9xf32>
    %cst_36 = arith.constant 0.000000e+00 : f32
    %60 = vector.broadcast %cst_36 : f32 to vector<8x128xf32>
    %c0_37 = arith.constant 0 : index
    %c0_38 = arith.constant 0 : index
    %61 = vector.load %arg15[%c0_37, %c0_38] : memref<8x128xf32, #tpu.memory_space<vmem>>, vector<8x128xf32>
    tpu.vector_store %arg15[%c0_37, %c0_38], %60 {strides = array<i32>} : memref<8x128xf32, #tpu.memory_space<vmem>>, vector<8x128xf32>,
    %c0_39 = arith.constant 0 : index
    %c0_40 = arith.constant 0 : index
    %62 = vector.load %arg15[%c0_39, %c0_40] : memref<8x128xf32, #tpu.memory_space<vmem>>, vector<8x64xf32>
    tpu.vector_store %arg15[%c0_39, %c0_40], %22 {strides = array<i32>} : memref<8x128xf32, #tpu.memory_space<vmem>>, vector<8x64xf32>,
    %c0_41 = arith.constant 0 : index
    %c64 = arith.constant 64 : index
    %63 = vector.load %arg15[%c0_41, %c64] : memref<8x128xf32, #tpu.memory_space<vmem>>, vector<8x9xf32>
    tpu.vector_store %arg15[%c0_41, %c64], %59 {strides = array<i32>} : memref<8x128xf32, #tpu.memory_space<vmem>>, vector<8x9xf32>,
    return
  }
  func.func @transform_0(%arg0: i32) -> (i32, i32) {
    %c0_i32 = arith.constant 0 : i32
    %c0_i32_0 = arith.constant 0 : i32
    return %arg0, %c0_i32 : i32, i32
  }
  func.func @transform_1(%arg0: i32) -> (i32, i32) {
    %c0_i32 = arith.constant 0 : i32
    %c0_i32_0 = arith.constant 0 : i32
    %c0_i32_1 = arith.constant 0 : i32
    return %c0_i32, %c0_i32_0 : i32, i32
  }
  func.func @transform_2(%arg0: i32) -> (i32, i32) {
    %c0_i32 = arith.constant 0 : i32
    %c0_i32_0 = arith.constant 0 : i32
    %c0_i32_1 = arith.constant 0 : i32
    return %c0_i32, %c0_i32_0 : i32, i32
  }
  func.func @transform_3(%arg0: i32) -> (i32, i32) {
    %c0_i32 = arith.constant 0 : i32
    %c0_i32_0 = arith.constant 0 : i32
    %c0_i32_1 = arith.constant 0 : i32
    return %c0_i32, %c0_i32_0 : i32, i32
  }
  func.func @transform_4(%arg0: i32) -> (i32, i32) {
    %c0_i32 = arith.constant 0 : i32
    %c0_i32_0 = arith.constant 0 : i32
    %c0_i32_1 = arith.constant 0 : i32
    return %c0_i32, %c0_i32_0 : i32, i32
  }
  func.func @transform_5(%arg0: i32) -> (i32, i32) {
    %c0_i32 = arith.constant 0 : i32
    %c0_i32_0 = arith.constant 0 : i32
    %c0_i32_1 = arith.constant 0 : i32
    return %c0_i32, %c0_i32_0 : i32, i32
  }
  func.func @transform_6(%arg0: i32) -> (i32, i32) {
    %c0_i32 = arith.constant 0 : i32
    %c0_i32_0 = arith.constant 0 : i32
    %c0_i32_1 = arith.constant 0 : i32
    return %c0_i32, %c0_i32_0 : i32, i32
  }
  func.func @transform_7(%arg0: i32) -> (i32, i32) {
    %c0_i32 = arith.constant 0 : i32
    %c0_i32_0 = arith.constant 0 : i32
    return %arg0, %c0_i32 : i32, i32
  }
  func.func @transform_8(%arg0: i32) -> (i32, i32) {
    %c0_i32 = arith.constant 0 : i32
    %c0_i32_0 = arith.constant 0 : i32
    %c0_i32_1 = arith.constant 0 : i32
    return %c0_i32, %c0_i32_0 : i32, i32
  }
  func.func @transform_9(%arg0: i32) -> (i32, i32) {
    %c0_i32 = arith.constant 0 : i32
    %c0_i32_0 = arith.constant 0 : i32
    %c0_i32_1 = arith.constant 0 : i32
    return %c0_i32, %c0_i32_0 : i32, i32
  }
  func.func @transform_10(%arg0: i32) -> (i32, i32) {
    %c0_i32 = arith.constant 0 : i32
    %c0_i32_0 = arith.constant 0 : i32
    %c0_i32_1 = arith.constant 0 : i32
    return %c0_i32, %c0_i32_0 : i32, i32
  }
  func.func @transform_11(%arg0: i32) -> (i32, i32) {
    %c0_i32 = arith.constant 0 : i32
    %c0_i32_0 = arith.constant 0 : i32
    %c0_i32_1 = arith.constant 0 : i32
    return %c0_i32, %c0_i32_0 : i32, i32
  }
  func.func @transform_12(%arg0: i32) -> (i32, i32) {
    %c0_i32 = arith.constant 0 : i32
    %c0_i32_0 = arith.constant 0 : i32
    %c0_i32_1 = arith.constant 0 : i32
    return %c0_i32, %c0_i32_0 : i32, i32
  }
  func.func @transform_13(%arg0: i32) -> (i32, i32) {
    %c0_i32 = arith.constant 0 : i32
    %c0_i32_0 = arith.constant 0 : i32
    return %arg0, %c0_i32 : i32, i32
  }
  func.func @transform_14(%arg0: i32) -> (i32, i32) {
    %c0_i32 = arith.constant 0 : i32
    %c0_i32_0 = arith.constant 0 : i32
    return %arg0, %c0_i32 : i32, i32
  }
}

</mosaic_0001>

<llo_original>
// kernel: tpu_custom_call.1
$region0: #{tpu_custom_call.1}
  #allocation0 [shape = 'u32[]', space=smem, size = 0x4, offset = 0x4, fixed_abs, tag = 'smem constant byte address 0x4 - core index']
  #allocation1 [shape = 'u32[72,128]{1,0:T(1,128)}', space=vmem, size = 0x9000, scoped, tag = 'internal scratch']
  #allocation2 [shape = 'f32[1,1]{1,0:T(1,128)S(1)}', space=vmem, size = 0x200, scoped, tag = 'scoped memory for tpu_custom_call.1']
  %s0 = inlined_call_operand.hbm [shape: f32[16,256], index: 0, kind: input, shape index: {}]
  %s1 = inlined_call_operand.hbm [shape: bf16[256,896], index: 1, kind: input, shape index: {}]
  %s2 = inlined_call_operand.hbm [shape: f32[1,896], index: 2, kind: input, shape index: {}]
  %s3 = inlined_call_operand.hbm [shape: bf16[896,896], index: 3, kind: input, shape index: {}]
  %s4 = inlined_call_operand.hbm [shape: f32[1,896], index: 4, kind: input, shape index: {}]
  %s5 = inlined_call_operand.vmem [shape: bf16[896,64], index: 5, kind: input, shape index: {}]
  %s6 = inlined_call_operand.hbm [shape: f32[1,64], index: 6, kind: input, shape index: {}]
  %s7 = inlined_call_operand.hbm [shape: f32[16,32], index: 7, kind: input, shape index: {}]
  %s8 = inlined_call_operand.hbm [shape: bf16[32,256], index: 8, kind: input, shape index: {}]
  %s9 = inlined_call_operand.hbm [shape: f32[1,256], index: 9, kind: input, shape index: {}]
  %s10 = inlined_call_operand.hbm [shape: f32[1,32], index: 10, kind: input, shape index: {}]
  %s11 = inlined_call_operand.<no memory space> [shape: f32[1,1], index: 11, kind: input, shape index: {}]
  %s12 = inlined_call_operand.hbm [shape: f32[1,10], index: 12, kind: input, shape index: {}]
  %s13 = inlined_call_operand.hbm [shape: f32[16,256], index: 13, kind: output, shape index: {0}]
  %s14 = inlined_call_operand.hbm [shape: f32[16,128], index: 14, kind: output, shape index: {1}]
  %15 = xla_tuple %s13, %s14
  %s16 = sld [smem:[#allocation0]]
  $region137: #{tpu_custom_call.1} parent=0
    _
  %s18 = ssub.s32 1, %s16
  %s19 = scalar_select 0, %s18, %s16
  %v20 = vstv %s11
  %21 = vst [vmem:[#allocation2] sm:$0x1] %v20
  $region1: #{tpu_custom_call.1} parent=0
    #allocation3 [shape = 'u8[16384]{0}', space=vmem, size = 0x4000, scoped, tag = 'input window, operand 0']
    #allocation4 [shape = 's32[2]{0}', space=sflag, size = 0x8, scoped, tag = 'scoped memory for tpu_custom_call.1']
    #allocation5 [shape = 's32[2]{0}', space=sflag, size = 0x8, scoped, tag = 'scoped memory for tpu_custom_call.1']
    #allocation6 [shape = 'u8[458752]{0}', space=vmem, size = 0x70000, scoped, tag = 'input window, operand 1, single buffered']
    #allocation7 [shape = 's32[1]{0}', space=sflag, size = 0x4, scoped, tag = 'scoped memory for tpu_custom_call.1']
    #allocation8 [shape = 'u8[3584]{0}', space=vmem, size = 0x1000, scoped, tag = 'input window, operand 2, single buffered']
    #allocation9 [shape = 'u8[1605632]{0}', space=vmem, size = 0x188000, scoped, tag = 'input window, operand 3, single buffered']
    #allocation10 [shape = 's32[1]{0}', space=sflag, size = 0x4, scoped, tag = 'scoped memory for tpu_custom_call.1']
    #allocation11 [shape = 'u8[3584]{0}', space=vmem, size = 0x1000, scoped, tag = 'input window, operand 4, single buffered']
    #allocation12 [shape = 'u8[512]{0}', space=vmem, size = 0x400, scoped, tag = 'input window, operand 6, single buffered']
    #allocation13 [shape = 's32[1]{0}', space=sflag, size = 0x4, scoped, tag = 'scoped memory for tpu_custom_call.1']
    #allocation14 [shape = 'u8[8192]{0}', space=vmem, size = 0x2000, scoped, tag = 'input window, operand 7']
    #allocation15 [shape = 'u8[16384]{0}', space=vmem, size = 0x4000, scoped, tag = 'input window, operand 8, single buffered']
    #allocation16 [shape = 'u8[1024]{0}', space=vmem, size = 0x400, scoped, tag = 'input window, operand 9, single buffered']
    #allocation17 [shape = 'u8[512]{0}', space=vmem, size = 0x400, scoped, tag = 'input window, operand 10, single buffered']
    #allocation18 [shape = 'u8[512]{0}', space=vmem, size = 0x400, scoped, tag = 'input window, operand 12, single buffered']
    #allocation19 [shape = 's32[1]{0}', space=sflag, size = 0x4, scoped, tag = 'scoped memory for tpu_custom_call.1']
    #allocation20 [shape = 'u8[16384]{0}', space=vmem, size = 0x4000, scoped, tag = 'output window, operand 0']
    #allocation21 [shape = 'u8[8192]{0}', space=vmem, size = 0x2000, scoped, tag = 'output window, operand 1']
    #allocation22 [shape = 's32[2]{0}', space=sflag, size = 0x8, scoped, tag = 'scoped memory for tpu_custom_call.1']
    %22 = vsyncpa [#allocation4], 0
    %s23 = scalar_lea.sflag [#allocation4], 1
    %24 = vsyncpa %s23, 0
    %25 = vsyncpa [#allocation7], 0
    %26 = vsyncpa [#allocation10], 0
    %27 = vsyncpa [#allocation13], 0
    %28 = vsyncpa [#allocation19], 0
    %29 = vsyncpa [#allocation5], 0
    %s30 = scalar_lea.sflag [#allocation5], 1
    %31 = vsyncpa %s30, 0
    %32 = vsyncpa [#allocation22], 0
    %s33 = scalar_lea.sflag [#allocation22], 1
    %34 = vsyncpa %s33, 0
    loop: start=0, step=1, limit=4
    $region2: #{tpu_custom_call.1} parent=1 // loop_pre_header
      _
    $region3: #{tpu_custom_call.1} parent=1 // loop_header
      %s36 = sphi 0, %s40
      %p37 = scmp.ge.s32.totalorder %s36, 4
      %s46 = sphi 0, %s48
      %s49 = sphi 0, %s46
      %s50 = sphi 0, %s49
      %s66 = sphi 0, %s50
      %s70 = sphi 0, %s70
      %s72 = sphi 0, %s70
      %s73 = sphi 0, %s72
      %s87 = sphi 0, %s73
      %s91 = sphi 0, %s91
      %s93 = sphi 0, %s91
      %s94 = sphi 0, %s93
      %s108 = sphi 0, %s94
      %s112 = sphi 0, %s112
      %s114 = sphi 0, %s112
      %s115 = sphi 0, %s114
      %s129 = sphi 0, %s115
      %s133 = sphi 0, %s133
      %s135 = sphi 0, %s133
      %s136 = sphi 0, %s135
      %s150 = sphi 0, %s136
      %s154 = sphi 0, %s154
      %s156 = sphi 0, %s154
      %s157 = sphi 0, %s156
      %s171 = sphi 0, %s157
      %s175 = sphi 0, %s175
      %s177 = sphi 0, %s175
      %s178 = sphi 0, %s177
      %s192 = sphi 0, %s178
      %s198 = sphi 0, %s200
      %s201 = sphi 0, %s198
      %s202 = sphi 0, %s201
      %s218 = sphi 0, %s202
      %s222 = sphi 0, %s222
      %s224 = sphi 0, %s222
      %s225 = sphi 0, %s224
      %s239 = sphi 0, %s225
      %s243 = sphi 0, %s243
      %s245 = sphi 0, %s243
      %s246 = sphi 0, %s245
      %s260 = sphi 0, %s246
      %s264 = sphi 0, %s264
      %s266 = sphi 0, %s264
      %s267 = sphi 0, %s266
      %s281 = sphi 0, %s267
      %s285 = sphi 0, %s285
      %s287 = sphi 0, %s285
      %s288 = sphi 0, %s287
      %s302 = sphi 0, %s288
      %s306 = sphi 0, %s306
      %s308 = sphi 0, %s306
      %s309 = sphi 0, %s308
      %s323 = sphi 0, %s309
      %s329 = sphi 0, %s331
      %s332 = sphi 0, %s329
      %s333 = sphi 0, %s332
      %s349 = sphi 0, %s333
      %s355 = sphi 0, %s357
      %s358 = sphi 0, %s355
      %s359 = sphi 0, %s358
      %s375 = sphi 0, %s359
    $region4: #{tpu_custom_call.1} parent=1 // loop_header_branch
      %39 = sbr.rel (%p37) target = $region8
    $region5: #{tpu_custom_call.1} parent=1 // loop_body
      %s41 = ssub.s32 %s36, 1
      %s42 = ssub.s32 %s36, 2
      %s43 = sadd.s32 %s36, 1
      %s44 = ssub.s32 %s36, %s43
      %p45 = scmp.eq.s32.totalorder %s44, 0
      %s47 = sadd.s32 %s46, 1
      %s48 = scalar_select %p45, %s46, %s47
      %p51 = pneg %p45
      %p52 = scmp.eq.s32.totalorder %s36, 1
      %p53 = por %p51, %p52
      %p54 = scmp.ne.s32.totalorder %s46, %s49
      %p55 = scmp.eq.s32.totalorder %s36, 0
      %p56 = por %p54, %p55
      %p57 = scmp.ne.s32.totalorder %s46, %s49
      %p58 = scmp.eq.s32.totalorder %s41, 1
      %p59 = por %p57, %p58
      %p60 = scmp.ne.s32.totalorder %s49, %s50
      %p61 = scmp.eq.s32.totalorder %s41, 0
      %p62 = por %p60, %p61
      %p63 = scmp.ne.s32.totalorder %s49, %s50
      %p64 = scmp.eq.s32.totalorder %s42, 1
      %p65 = por %p63, %p64
      %p67 = scmp.ne.s32.totalorder %s50, %s66
      %p68 = scmp.eq.s32.totalorder %s42, 0
      %p69 = por %p67, %p68
      %s71 = sadd.s32 %s70, 1
      %p74 = scmp.eq.s32.totalorder %s36, 1
      %p75 = scmp.ne.s32.totalorder %s70, %s72
      %p76 = scmp.eq.s32.totalorder %s36, 0
      %p77 = por %p75, %p76
      %p78 = scmp.ne.s32.totalorder %s70, %s72
      %p79 = scmp.eq.s32.totalorder %s41, 1
      %p80 = por %p78, %p79
      %p81 = scmp.ne.s32.totalorder %s72, %s73
      %p82 = scmp.eq.s32.totalorder %s41, 0
      %p83 = por %p81, %p82
      %p84 = scmp.ne.s32.totalorder %s72, %s73
      %p85 = scmp.eq.s32.totalorder %s42, 1
      %p86 = por %p84, %p85
      %p88 = scmp.ne.s32.totalorder %s73, %s87
      %p89 = scmp.eq.s32.totalorder %s42, 0
      %p90 = por %p88, %p89
      %s92 = sadd.s32 %s91, 1
      %p95 = scmp.eq.s32.totalorder %s36, 1
      %p96 = scmp.ne.s32.totalorder %s91, %s93
      %p97 = scmp.eq.s32.totalorder %s36, 0
      %p98 = por %p96, %p97
      %p99 = scmp.ne.s32.totalorder %s91, %s93
      %p100 = scmp.eq.s32.totalorder %s41, 1
      %p101 = por %p99, %p100
      %p102 = scmp.ne.s32.totalorder %s93, %s94
      %p103 = scmp.eq.s32.totalorder %s41, 0
      %p104 = por %p102, %p103
      %p105 = scmp.ne.s32.totalorder %s93, %s94
      %p106 = scmp.eq.s32.totalorder %s42, 1
      %p107 = por %p105, %p106
      %p109 = scmp.ne.s32.totalorder %s94, %s108
      %p110 = scmp.eq.s32.totalorder %s42, 0
      %p111 = por %p109, %p110
      %s113 = sadd.s32 %s112, 1
      %p116 = scmp.eq.s32.totalorder %s36, 1
      %p117 = scmp.ne.s32.totalorder %s112, %s114
      %p118 = scmp.eq.s32.totalorder %s36, 0
      %p119 = por %p117, %p118
      %p120 = scmp.ne.s32.totalorder %s112, %s114
      %p121 = scmp.eq.s32.totalorder %s41, 1
      %p122 = por %p120, %p121
      %p123 = scmp.ne.s32.totalorder %s114, %s115
      %p124 = scmp.eq.s32.totalorder %s41, 0
      %p125 = por %p123, %p124
      %p126 = scmp.ne.s32.totalorder %s114, %s115
      %p127 = scmp.eq.s32.totalorder %s42, 1
      %p128 = por %p126, %p127
      %p130 = scmp.ne.s32.totalorder %s115, %s129
      %p131 = scmp.eq.s32.totalorder %s42, 0
      %p132 = por %p130, %p131
      %s134 = sadd.s32 %s133, 1
      %p137 = scmp.eq.s32.totalorder %s36, 1
      %p138 = scmp.ne.s32.totalorder %s133, %s135
      %p139 = scmp.eq.s32.totalorder %s36, 0
      %p140 = por %p138, %p139
      %p141 = scmp.ne.s32.totalorder %s133, %s135
      %p142 = scmp.eq.s32.totalorder %s41, 1
      %p143 = por %p141, %p142
      %p144 = scmp.ne.s32.totalorder %s135, %s136
      %p145 = scmp.eq.s32.totalorder %s41, 0
      %p146 = por %p144, %p145
      %p147 = scmp.ne.s32.totalorder %s135, %s136
      %p148 = scmp.eq.s32.totalorder %s42, 1
      %p149 = por %p147, %p148
      %p151 = scmp.ne.s32.totalorder %s136, %s150
      %p152 = scmp.eq.s32.totalorder %s42, 0
      %p153 = por %p151, %p152
      %s155 = sadd.s32 %s154, 1
      %p158 = scmp.eq.s32.totalorder %s36, 1
      %p159 = scmp.ne.s32.totalorder %s154, %s156
      %p160 = scmp.eq.s32.totalorder %s36, 0
      %p161 = por %p159, %p160
      %p162 = scmp.ne.s32.totalorder %s154, %s156
      %p163 = scmp.eq.s32.totalorder %s41, 1
      %p164 = por %p162, %p163
      %p165 = scmp.ne.s32.totalorder %s156, %s157
      %p166 = scmp.eq.s32.totalorder %s41, 0
      %p167 = por %p165, %p166
      %p168 = scmp.ne.s32.totalorder %s156, %s157
      %p169 = scmp.eq.s32.totalorder %s42, 1
      %p170 = por %p168, %p169
      %p172 = scmp.ne.s32.totalorder %s157, %s171
      %p173 = scmp.eq.s32.totalorder %s42, 0
      %p174 = por %p172, %p173
      %s176 = sadd.s32 %s175, 1
      %p179 = scmp.eq.s32.totalorder %s36, 1
      %p180 = scmp.ne.s32.totalorder %s175, %s177
      %p181 = scmp.eq.s32.totalorder %s36, 0
      %p182 = por %p180, %p181
      %p183 = scmp.ne.s32.totalorder %s175, %s177
      %p184 = scmp.eq.s32.totalorder %s41, 1
      %p185 = por %p183, %p184
      %p186 = scmp.ne.s32.totalorder %s177, %s178
      %p187 = scmp.eq.s32.totalorder %s41, 0
      %p188 = por %p186, %p187
      %p189 = scmp.ne.s32.totalorder %s177, %s178
      %p190 = scmp.eq.s32.totalorder %s42, 1
      %p191 = por %p189, %p190
      %p193 = scmp.ne.s32.totalorder %s178, %s192
      %p194 = scmp.eq.s32.totalorder %s42, 0
      %p195 = por %p193, %p194
      %s196 = ssub.s32 %s36, %s43
      %p197 = scmp.eq.s32.totalorder %s196, 0
      %s199 = sadd.s32 %s198, 1
      %s200 = scalar_select %p197, %s198, %s199
      %p203 = pneg %p197
      %p204 = scmp.eq.s32.totalorder %s36, 1
      %p205 = por %p203, %p204
      %p206 = scmp.ne.s32.totalorder %s198, %s201
      %p207 = scmp.eq.s32.totalorder %s36, 0
      %p208 = por %p206, %p207
      %p209 = scmp.ne.s32.totalorder %s198, %s201
      %p210 = scmp.eq.s32.totalorder %s41, 1
      %p211 = por %p209, %p210
      %p212 = scmp.ne.s32.totalorder %s201, %s202
      %p213 = scmp.eq.s32.totalorder %s41, 0
      %p214 = por %p212, %p213
      %p215 = scmp.ne.s32.totalorder %s201, %s202
      %p216 = scmp.eq.s32.totalorder %s42, 1
      %p217 = por %p215, %p216
      %p219 = scmp.ne.s32.totalorder %s202, %s218
      %p220 = scmp.eq.s32.totalorder %s42, 0
      %p221 = por %p219, %p220
      %s223 = sadd.s32 %s222, 1
      %p226 = scmp.eq.s32.totalorder %s36, 1
      %p227 = scmp.ne.s32.totalorder %s222, %s224
      %p228 = scmp.eq.s32.totalorder %s36, 0
      %p229 = por %p227, %p228
      %p230 = scmp.ne.s32.totalorder %s222, %s224
      %p231 = scmp.eq.s32.totalorder %s41, 1
      %p232 = por %p230, %p231
      %p233 = scmp.ne.s32.totalorder %s224, %s225
      %p234 = scmp.eq.s32.totalorder %s41, 0
      %p235 = por %p233, %p234
      %p236 = scmp.ne.s32.totalorder %s224, %s225
      %p237 = scmp.eq.s32.totalorder %s42, 1
      %p238 = por %p236, %p237
      %p240 = scmp.ne.s32.totalorder %s225, %s239
      %p241 = scmp.eq.s32.totalorder %s42, 0
      %p242 = por %p240, %p241
      %s244 = sadd.s32 %s243, 1
      %p247 = scmp.eq.s32.totalorder %s36, 1
      %p248 = scmp.ne.s32.totalorder %s243, %s245
      %p249 = scmp.eq.s32.totalorder %s36, 0
      %p250 = por %p248, %p249
      %p251 = scmp.ne.s32.totalorder %s243, %s245
      %p252 = scmp.eq.s32.totalorder %s41, 1
      %p253 = por %p251, %p252
      %p254 = scmp.ne.s32.totalorder %s245, %s246
      %p255 = scmp.eq.s32.totalorder %s41, 0
      %p256 = por %p254, %p255
      %p257 = scmp.ne.s32.totalorder %s245, %s246
      %p258 = scmp.eq.s32.totalorder %s42, 1
      %p259 = por %p257, %p258
      %p261 = scmp.ne.s32.totalorder %s246, %s260
      %p262 = scmp.eq.s32.totalorder %s42, 0
      %p263 = por %p261, %p262
      %s265 = sadd.s32 %s264, 1
      %p268 = scmp.eq.s32.totalorder %s36, 1
      %p269 = scmp.ne.s32.totalorder %s264, %s266
      %p270 = scmp.eq.s32.totalorder %s36, 0
      %p271 = por %p269, %p270
      %p272 = scmp.ne.s32.totalorder %s264, %s266
      %p273 = scmp.eq.s32.totalorder %s41, 1
      %p274 = por %p272, %p273
      %p275 = scmp.ne.s32.totalorder %s266, %s267
      %p276 = scmp.eq.s32.totalorder %s41, 0
      %p277 = por %p275, %p276
      %p278 = scmp.ne.s32.totalorder %s266, %s267
      %p279 = scmp.eq.s32.totalorder %s42, 1
      %p280 = por %p278, %p279
      %p282 = scmp.ne.s32.totalorder %s267, %s281
      %p283 = scmp.eq.s32.totalorder %s42, 0
      %p284 = por %p282, %p283
      %s286 = sadd.s32 %s285, 1
      %p289 = scmp.eq.s32.totalorder %s36, 1
      %p290 = scmp.ne.s32.totalorder %s285, %s287
      %p291 = scmp.eq.s32.totalorder %s36, 0
      %p292 = por %p290, %p291
      %p293 = scmp.ne.s32.totalorder %s285, %s287
      %p294 = scmp.eq.s32.totalorder %s41, 1
      %p295 = por %p293, %p294
      %p296 = scmp.ne.s32.totalorder %s287, %s288
      %p297 = scmp.eq.s32.totalorder %s41, 0
      %p298 = por %p296, %p297
      %p299 = scmp.ne.s32.totalorder %s287, %s288
      %p300 = scmp.eq.s32.totalorder %s42, 1
      %p301 = por %p299, %p300
      %p303 = scmp.ne.s32.totalorder %s288, %s302
      %p304 = scmp.eq.s32.totalorder %s42, 0
      %p305 = por %p303, %p304
      %s307 = sadd.s32 %s306, 1
      %p310 = scmp.eq.s32.totalorder %s36, 1
      %p311 = scmp.ne.s32.totalorder %s306, %s308
      %p312 = scmp.eq.s32.totalorder %s36, 0
      %p313 = por %p311, %p312
      %p314 = scmp.ne.s32.totalorder %s306, %s308
      %p315 = scmp.eq.s32.totalorder %s41, 1
      %p316 = por %p314, %p315
      %p317 = scmp.ne.s32.totalorder %s308, %s309
      %p318 = scmp.eq.s32.totalorder %s41, 0
      %p319 = por %p317, %p318
      %p320 = scmp.ne.s32.totalorder %s308, %s309
      %p321 = scmp.eq.s32.totalorder %s42, 1
      %p322 = por %p320, %p321
      %p324 = scmp.ne.s32.totalorder %s309, %s323
      %p325 = scmp.eq.s32.totalorder %s42, 0
      %p326 = por %p324, %p325
      %s327 = ssub.s32 %s36, %s43
      %p328 = scmp.eq.s32.totalorder %s327, 0
      %s330 = sadd.s32 %s329, 1
      %s331 = scalar_select %p328, %s329, %s330
      %p334 = pneg %p328
      %p335 = scmp.eq.s32.totalorder %s36, 1
      %p336 = por %p334, %p335
      %p337 = scmp.ne.s32.totalorder %s329, %s332
      %p338 = scmp.eq.s32.totalorder %s36, 0
      %p339 = por %p337, %p338
      %p340 = scmp.ne.s32.totalorder %s329, %s332
      %p341 = scmp.eq.s32.totalorder %s41, 1
      %p342 = por %p340, %p341
      %p343 = scmp.ne.s32.totalorder %s332, %s333
      %p344 = scmp.eq.s32.totalorder %s41, 0
      %p345 = por %p343, %p344
      %p346 = scmp.ne.s32.totalorder %s332, %s333
      %p347 = scmp.eq.s32.totalorder %s42, 1
      %p348 = por %p346, %p347
      %p350 = scmp.ne.s32.totalorder %s333, %s349
      %p351 = scmp.eq.s32.totalorder %s42, 0
      %p352 = por %p350, %p351
      %s353 = ssub.s32 %s36, %s43
      %p354 = scmp.eq.s32.totalorder %s353, 0
      %s356 = sadd.s32 %s355, 1
      %s357 = scalar_select %p354, %s355, %s356
      %p360 = pneg %p354
      %p361 = scmp.eq.s32.totalorder %s36, 1
      %p362 = por %p360, %p361
      %p363 = scmp.ne.s32.totalorder %s355, %s358
      %p364 = scmp.eq.s32.totalorder %s36, 0
      %p365 = por %p363, %p364
      %p366 = scmp.ne.s32.totalorder %s355, %s358
      %p367 = scmp.eq.s32.totalorder %s41, 1
      %p368 = por %p366, %p367
      %p369 = scmp.ne.s32.totalorder %s358, %s359
      %p370 = scmp.eq.s32.totalorder %s41, 0
      %p371 = por %p369, %p370
      %p372 = scmp.ne.s32.totalorder %s358, %s359
      %p373 = scmp.eq.s32.totalorder %s42, 1
      %p374 = por %p372, %p373
      %p376 = scmp.ne.s32.totalorder %s359, %s375
      %p377 = scmp.eq.s32.totalorder %s42, 0
      %p378 = por %p376, %p377
      %p379 = scmp.le.s32.totalorder 1, %s36
      %p380 = scmp.lt.s32.totalorder %s36, 3
      %p381 = pnand %p379, %p380
      %p382 = pneg %p381
      // Predicated region
      $region9: #{tpu_custom_call.1} parent=5 // pred_check
        _
      $region10: #{tpu_custom_call.1} parent=5 // pred_check_branch
        %384 = sbr.rel (%p381) target = $region12
      $region11: #{tpu_custom_call.1} parent=5 // pred_region
        %s385 = ssub.s32 %s36, 1
        // Predicated region
        $region13: #{tpu_custom_call.1} parent=11 // pred_check
          %p386 = pneg %p83
        $region14: #{tpu_custom_call.1} parent=11 // pred_check_branch
          %388 = sbr.rel (%p386) target = $region16
        $region15: #{tpu_custom_call.1} parent=11 // pred_region
          %390 = vsyncadd [#allocation7], 0
          %s391 = sshll.u32 %s1, 4
          %s392 = int_to_ptr.hbm [resolvable:$true] %s391
          %s393 = sshll.u32 [#allocation6], 4
          %s394 = int_to_ptr.vmem [resolvable:$true] %s393
          %399 = dma.hbm_to_vmem [thread:$0]  %s392, 14336, %s394, [#allocation7], 448, 448, 28
        $region16: #{tpu_custom_call.1} parent=11 // pred_fallthru
          _
        // Predicated region
        $region17: #{tpu_custom_call.1} parent=11 // pred_check
          %p400 = pneg %p104
        $region18: #{tpu_custom_call.1} parent=11 // pred_check_branch
          %402 = sbr.rel (%p400) target = $region20
        $region19: #{tpu_custom_call.1} parent=11 // pred_region
          %404 = vsyncadd [#allocation7], 0
          %s406 = sshll.u32 %s2, 4
          %s407 = int_to_ptr.hbm [resolvable:$true] %s406
          %s408 = sshll.u32 [#allocation8], 4
          %s409 = int_to_ptr.vmem [resolvable:$true] %s408
          %411 = dma.hbm_to_vmem [thread:$0]  %s407, 112, %s409, [#allocation7]
        $region20: #{tpu_custom_call.1} parent=11 // pred_fallthru
          _
        // Predicated region
        $region21: #{tpu_custom_call.1} parent=11 // pred_check
          %p412 = pneg %p125
        $region22: #{tpu_custom_call.1} parent=11 // pred_check_branch
          %414 = sbr.rel (%p412) target = $region24
        $region23: #{tpu_custom_call.1} parent=11 // pred_region
          %416 = vsyncadd [#allocation10], 0
          %s417 = sshll.u32 %s3, 4
          %s418 = int_to_ptr.hbm [resolvable:$true] %s417
          %s419 = sshll.u32 [#allocation9], 4
          %s420 = int_to_ptr.vmem [resolvable:$true] %s419
          %425 = dma.hbm_to_vmem [thread:$0]  %s418, 50176, %s420, [#allocation10], 448, 448, 28
        $region24: #{tpu_custom_call.1} parent=11 // pred_fallthru
          _
        // Predicated region
        $region25: #{tpu_custom_call.1} parent=11 // pred_check
          %p426 = pneg %p146
        $region26: #{tpu_custom_call.1} parent=11 // pred_check_branch
          %428 = sbr.rel (%p426) target = $region28
        $region27: #{tpu_custom_call.1} parent=11 // pred_region
          %430 = vsyncadd [#allocation10], 0
          %s432 = sshll.u32 %s4, 4
          %s433 = int_to_ptr.hbm [resolvable:$true] %s432
          %s434 = sshll.u32 [#allocation11], 4
          %s435 = int_to_ptr.vmem [resolvable:$true] %s434
          %437 = dma.hbm_to_vmem [thread:$0]  %s433, 112, %s435, [#allocation10]
        $region28: #{tpu_custom_call.1} parent=11 // pred_fallthru
          _
        // Predicated region
        $region29: #{tpu_custom_call.1} parent=11 // pred_check
          %p438 = pneg %p167
        $region30: #{tpu_custom_call.1} parent=11 // pred_check_branch
          %440 = sbr.rel (%p438) target = $region32
        $region31: #{tpu_custom_call.1} parent=11 // pred_region
          _
        $region32: #{tpu_custom_call.1} parent=11 // pred_fallthru
          _
        // Predicated region
        $region33: #{tpu_custom_call.1} parent=11 // pred_check
          %p441 = pneg %p188
        $region34: #{tpu_custom_call.1} parent=11 // pred_check_branch
          %443 = sbr.rel (%p441) target = $region36
        $region35: #{tpu_custom_call.1} parent=11 // pred_region
          %445 = vsyncadd [#allocation13], 0
          %s447 = sshll.u32 %s6, 4
          %s448 = int_to_ptr.hbm [resolvable:$true] %s447
          %s449 = sshll.u32 [#allocation12], 4
          %s450 = int_to_ptr.vmem [resolvable:$true] %s449
          %452 = dma.hbm_to_vmem [thread:$0]  %s448, 16, %s450, [#allocation13]
        $region36: #{tpu_custom_call.1} parent=11 // pred_fallthru
          _
        // Predicated region
        $region37: #{tpu_custom_call.1} parent=11 // pred_check
          %p453 = pneg %p235
        $region38: #{tpu_custom_call.1} parent=11 // pred_check_branch
          %455 = sbr.rel (%p453) target = $region40
        $region39: #{tpu_custom_call.1} parent=11 // pred_region
          %457 = vsyncadd [#allocation7], 0
          %s458 = sshll.u32 %s8, 4
          %s459 = int_to_ptr.hbm [resolvable:$true] %s458
          %s460 = sshll.u32 [#allocation15], 4
          %s461 = int_to_ptr.vmem [resolvable:$true] %s460
          %466 = dma.hbm_to_vmem [thread:$0]  %s459, 512, %s461, [#allocation7], 128, 128, 8
        $region40: #{tpu_custom_call.1} parent=11 // pred_fallthru
          _
        // Predicated region
        $region41: #{tpu_custom_call.1} parent=11 // pred_check
          %p467 = pneg %p256
        $region42: #{tpu_custom_call.1} parent=11 // pred_check_branch
          %469 = sbr.rel (%p467) target = $region44
        $region43: #{tpu_custom_call.1} parent=11 // pred_region
          %471 = vsyncadd [#allocation10], 0
          %s473 = sshll.u32 %s9, 4
          %s474 = int_to_ptr.hbm [resolvable:$true] %s473
          %s475 = sshll.u32 [#allocation16], 4
          %s476 = int_to_ptr.vmem [resolvable:$true] %s475
          %478 = dma.hbm_to_vmem [thread:$0]  %s474, 32, %s476, [#allocation10]
        $region44: #{tpu_custom_call.1} parent=11 // pred_fallthru
          _
        // Predicated region
        $region45: #{tpu_custom_call.1} parent=11 // pred_check
          %p479 = pneg %p277
        $region46: #{tpu_custom_call.1} parent=11 // pred_check_branch
          %481 = sbr.rel (%p479) target = $region48
        $region47: #{tpu_custom_call.1} parent=11 // pred_region
          %483 = vsyncadd [#allocation13], 0
          %s485 = sshll.u32 %s10, 4
          %s486 = int_to_ptr.hbm [resolvable:$true] %s485
          %s487 = sshll.u32 [#allocation17], 4
          %s488 = int_to_ptr.vmem [resolvable:$true] %s487
          %490 = dma.hbm_to_vmem [thread:$0]  %s486, 16, %s488, [#allocation13]
        $region48: #{tpu_custom_call.1} parent=11 // pred_fallthru
          _
        // Predicated region
        $region49: #{tpu_custom_call.1} parent=11 // pred_check
          %p491 = pneg %p298
        $region50: #{tpu_custom_call.1} parent=11 // pred_check_branch
          %493 = sbr.rel (%p491) target = $region52
        $region51: #{tpu_custom_call.1} parent=11 // pred_region
          _
        $region52: #{tpu_custom_call.1} parent=11 // pred_fallthru
          _
        // Predicated region
        $region53: #{tpu_custom_call.1} parent=11 // pred_check
          %p494 = pneg %p319
        $region54: #{tpu_custom_call.1} parent=11 // pred_check_branch
          %496 = sbr.rel (%p494) target = $region56
        $region55: #{tpu_custom_call.1} parent=11 // pred_region
          %498 = vsyncadd [#allocation19], 0
          %s500 = sshll.u32 %s12, 4
          %s501 = int_to_ptr.hbm [resolvable:$true] %s500
          %s502 = sshll.u32 [#allocation18], 4
          %s503 = int_to_ptr.vmem [resolvable:$true] %s502
          %505 = dma.hbm_to_vmem [thread:$0]  %s501, 16, %s503, [#allocation19]
        $region56: #{tpu_custom_call.1} parent=11 // pred_fallthru
          _
      $region12: #{tpu_custom_call.1} parent=5 // pred_fallthru
        _
      %p506 = scmp.lt.s32.totalorder %s36, 2
      // Predicated region
      $region57: #{tpu_custom_call.1} parent=5 // pred_check
        %p507 = pneg %p506
      $region58: #{tpu_custom_call.1} parent=5 // pred_check_branch
        %509 = sbr.rel (%p507) target = $region60
      $region59: #{tpu_custom_call.1} parent=5 // pred_region
        // Predicated region
        $region61: #{tpu_custom_call.1} parent=59 // pred_check
          %p510 = pneg %p56
        $region62: #{tpu_custom_call.1} parent=59 // pred_check_branch
          %512 = sbr.rel (%p510) target = $region64
        $region63: #{tpu_custom_call.1} parent=59 // pred_region
          %s513 = sand.u32 %s36, 1
          %s514 = scalar_lea.sflag [#allocation4], %s513
          %s515 = sand.u32 %s46, 1
          %s516 = smul.addr %s515, 16
          %s517 = scalar_lea.vmem [#allocation3], %s516
          %519 = vsyncadd %s514, 0
          %s520 = smul.addr %s36, 2
          %s521 = smul.addr %s520, 8
          %s522 = scalar_lea.hbm %s0, %s521
          %s524 = sshll.u32 %s522, 4
          %s525 = int_to_ptr.hbm [resolvable:$true] %s524
          %s526 = sshll.u32 %s517, 4
          %s527 = int_to_ptr.vmem [resolvable:$true] %s526
          %529 = dma.hbm_to_vmem [thread:$0]  %s525, 256, %s527, %s514
        $region64: #{tpu_custom_call.1} parent=59 // pred_fallthru
          _
        // Predicated region
        $region65: #{tpu_custom_call.1} parent=59 // pred_check
          %p530 = pneg %p208
        $region66: #{tpu_custom_call.1} parent=59 // pred_check_branch
          %532 = sbr.rel (%p530) target = $region68
        $region67: #{tpu_custom_call.1} parent=59 // pred_region
          %s533 = sand.u32 %s36, 1
          %s534 = scalar_lea.sflag [#allocation4], %s533
          %s535 = sand.u32 %s198, 1
          %s536 = smul.addr %s535, 8
          %s537 = scalar_lea.vmem [#allocation14], %s536
          %539 = vsyncadd %s534, 0
          %s540 = smul.addr %s36, 8
          %s541 = scalar_lea.hbm %s7, %s540
          %s543 = sshll.u32 %s541, 4
          %s544 = int_to_ptr.hbm [resolvable:$true] %s543
          %s545 = sshll.u32 %s537, 4
          %s546 = int_to_ptr.vmem [resolvable:$true] %s545
          %548 = dma.hbm_to_vmem [thread:$0]  %s544, 128, %s546, %s534
        $region68: #{tpu_custom_call.1} parent=59 // pred_fallthru
          _
      $region60: #{tpu_custom_call.1} parent=5 // pred_fallthru
        _
      %p549 = scmp.le.s32.totalorder 1, %s36
      %p550 = scmp.lt.s32.totalorder %s36, 3
      %p551 = pnand %p549, %p550
      %p552 = pneg %p551
      // Predicated region
      $region69: #{tpu_custom_call.1} parent=5 // pred_check
        _
      $region70: #{tpu_custom_call.1} parent=5 // pred_check_branch
        %554 = sbr.rel (%p551) target = $region72
      $region71: #{tpu_custom_call.1} parent=5 // pred_region
        %s555 = ssub.s32 %s36, 1
        %s556 = sand.u32 %s41, 1
        %s557 = scalar_lea.sflag [#allocation4], %s556
        %s558 = sand.u32 %s49, 1
        %s559 = smul.addr %s558, 16
        %s560 = scalar_lea.vmem [#allocation3], %s559
        // Predicated region
        $region73: #{tpu_custom_call.1} parent=71 // pred_check
          %p561 = pneg %p62
        $region74: #{tpu_custom_call.1} parent=71 // pred_check_branch
          %563 = sbr.rel (%p561) target = $region76
        $region75: #{tpu_custom_call.1} parent=71 // pred_region
          %565 = dma.done %s557, 256
        $region76: #{tpu_custom_call.1} parent=71 // pred_fallthru
          _
        // Predicated region
        $region77: #{tpu_custom_call.1} parent=71 // pred_check
          %p566 = pneg %p83
        $region78: #{tpu_custom_call.1} parent=71 // pred_check_branch
          %568 = sbr.rel (%p566) target = $region80
        $region79: #{tpu_custom_call.1} parent=71 // pred_region
          %570 = dma.done [#allocation7], 14336
        $region80: #{tpu_custom_call.1} parent=71 // pred_fallthru
          _
        // Predicated region
        $region81: #{tpu_custom_call.1} parent=71 // pred_check
          %p571 = pneg %p104
        $region82: #{tpu_custom_call.1} parent=71 // pred_check_branch
          %573 = sbr.rel (%p571) target = $region84
        $region83: #{tpu_custom_call.1} parent=71 // pred_region
          %575 = dma.done [#allocation7], 112
        $region84: #{tpu_custom_call.1} parent=71 // pred_fallthru
          _
        // Predicated region
        $region85: #{tpu_custom_call.1} parent=71 // pred_check
          %p576 = pneg %p125
        $region86: #{tpu_custom_call.1} parent=71 // pred_check_branch
          %578 = sbr.rel (%p576) target = $region88
        $region87: #{tpu_custom_call.1} parent=71 // pred_region
          %580 = dma.done [#allocation10], 50176
        $region88: #{tpu_custom_call.1} parent=71 // pred_fallthru
          _
        // Predicated region
        $region89: #{tpu_custom_call.1} parent=71 // pred_check
          %p581 = pneg %p146
        $region90: #{tpu_custom_call.1} parent=71 // pred_check_branch
          %583 = sbr.rel (%p581) target = $region92
        $region91: #{tpu_custom_call.1} parent=71 // pred_region
          %585 = dma.done [#allocation10], 112
        $region92: #{tpu_custom_call.1} parent=71 // pred_fallthru
          _
        // Predicated region
        $region93: #{tpu_custom_call.1} parent=71 // pred_check
          %p586 = pneg %p188
        $region94: #{tpu_custom_call.1} parent=71 // pred_check_branch
          %588 = sbr.rel (%p586) target = $region96
        $region95: #{tpu_custom_call.1} parent=71 // pred_region
          %590 = dma.done [#allocation13], 16
        $region96: #{tpu_custom_call.1} parent=71 // pred_fallthru
          _
        %s591 = sand.u32 %s41, 1
        %s592 = scalar_lea.sflag [#allocation4], %s591
        %s593 = sand.u32 %s201, 1
        %s594 = smul.addr %s593, 8
        %s595 = scalar_lea.vmem [#allocation14], %s594
        // Predicated region
        $region97: #{tpu_custom_call.1} parent=71 // pred_check
          %p596 = pneg %p214
        $region98: #{tpu_custom_call.1} parent=71 // pred_check_branch
          %598 = sbr.rel (%p596) target = $region100
        $region99: #{tpu_custom_call.1} parent=71 // pred_region
          %600 = dma.done %s592, 128
        $region100: #{tpu_custom_call.1} parent=71 // pred_fallthru
          _
        // Predicated region
        $region101: #{tpu_custom_call.1} parent=71 // pred_check
          %p601 = pneg %p235
        $region102: #{tpu_custom_call.1} parent=71 // pred_check_branch
          %603 = sbr.rel (%p601) target = $region104
        $region103: #{tpu_custom_call.1} parent=71 // pred_region
          %605 = dma.done [#allocation7], 512
        $region104: #{tpu_custom_call.1} parent=71 // pred_fallthru
          _
        // Predicated region
        $region105: #{tpu_custom_call.1} parent=71 // pred_check
          %p606 = pneg %p256
        $region106: #{tpu_custom_call.1} parent=71 // pred_check_branch
          %608 = sbr.rel (%p606) target = $region108
        $region107: #{tpu_custom_call.1} parent=71 // pred_region
          %610 = dma.done [#allocation10], 32
        $region108: #{tpu_custom_call.1} parent=71 // pred_fallthru
          _
        // Predicated region
        $region109: #{tpu_custom_call.1} parent=71 // pred_check
          %p611 = pneg %p277
        $region110: #{tpu_custom_call.1} parent=71 // pred_check_branch
          %613 = sbr.rel (%p611) target = $region112
        $region111: #{tpu_custom_call.1} parent=71 // pred_region
          %615 = dma.done [#allocation13], 16
        $region112: #{tpu_custom_call.1} parent=71 // pred_fallthru
          _
        // Predicated region
        $region113: #{tpu_custom_call.1} parent=71 // pred_check
          %p616 = pneg %p319
        $region114: #{tpu_custom_call.1} parent=71 // pred_check_branch
          %618 = sbr.rel (%p616) target = $region116
        $region115: #{tpu_custom_call.1} parent=71 // pred_region
          %620 = dma.done [#allocation19], 16
        $region116: #{tpu_custom_call.1} parent=71 // pred_fallthru
          _
        %s621 = sand.u32 %s41, 1
        %s622 = scalar_lea.sflag [#allocation4], %s621
        %s623 = sand.u32 %s49, 1
        %s624 = smul.addr %s623, 16
        %s625 = scalar_lea.vmem [#allocation3], %s624
        %p626 = pneg %p62
        %p627 = pneg %p59
        %p628 = pneg %p83
        %p629 = pneg %p80
        %p630 = pneg %p104
        %p631 = pneg %p101
        %p632 = pneg %p125
        %p633 = pneg %p122
        %p634 = pneg %p146
        %p635 = pneg %p143
        %p636 = pneg %p167
        %p637 = pneg %p164
        %p638 = pneg %p188
        %p639 = pneg %p185
        %s640 = sand.u32 %s41, 1
        %s641 = scalar_lea.sflag [#allocation4], %s640
        %s642 = sand.u32 %s201, 1
        %s643 = smul.addr %s642, 8
        %s644 = scalar_lea.vmem [#allocation14], %s643
        %p645 = pneg %p214
        %p646 = pneg %p211
        %p647 = pneg %p235
        %p648 = pneg %p232
        %p649 = pneg %p256
        %p650 = pneg %p253
        %p651 = pneg %p277
        %p652 = pneg %p274
        %p653 = pneg %p298
        %p654 = pneg %p295
        %p655 = pneg %p319
        %p656 = pneg %p316
        %p657 = pneg %p345
        %p658 = pneg %p342
        %s659 = sand.u32 %s332, 1
        %s660 = scalar_lea.sflag [#allocation5], %s659
        %s661 = sand.u32 %s332, 1
        %s662 = smul.addr %s661, 16
        %s663 = scalar_lea.vmem [#allocation20], %s662
        %p664 = pneg %p371
        %p665 = pneg %p368
        %s666 = sand.u32 %s358, 1
        %s667 = scalar_lea.sflag [#allocation22], %s666
        %s668 = sand.u32 %s358, 1
        %s669 = smul.addr %s668, 8
        %s670 = scalar_lea.vmem [#allocation21], %s669
        %v672 = vld [vmem:[%s560] sm:$0xff]
        %v673 = vld [vmem:[%s560 + $0x8] sm:$0xff]
        %v674 = vpack.c.bf16 %v672, %v672
        %v675 = vpack.c.bf16 %v673, %v673
        %v676 = vld [vmem:[#allocation6] sm:$0xff]
        %v677 = vld [vmem:[#allocation6 + $0x8] sm:$0xff]
        %v678 = vld [vmem:[#allocation6 + $0x10] sm:$0xff]
        %v679 = vld [vmem:[#allocation6 + $0x18] sm:$0xf]
        %v680 = vld [vmem:[#allocation6 + $0x1c] sm:$0xff]
        %v681 = vld [vmem:[#allocation6 + $0x24] sm:$0xff]
        %v682 = vld [vmem:[#allocation6 + $0x2c] sm:$0xff]
        %v683 = vld [vmem:[#allocation6 + $0x34] sm:$0xf]
        %v684 = vld [vmem:[#allocation6 + $0x38] sm:$0xff]
        %v685 = vld [vmem:[#allocation6 + $0x40] sm:$0xff]
        %v686 = vld [vmem:[#allocation6 + $0x48] sm:$0xff]
        %v687 = vld [vmem:[#allocation6 + $0x50] sm:$0xf]
        %v688 = vld [vmem:[#allocation6 + $0x54] sm:$0xff]
        %v689 = vld [vmem:[#allocation6 + $0x5c] sm:$0xff]
        %v690 = vld [vmem:[#allocation6 + $0x64] sm:$0xff]
        %v691 = vld [vmem:[#allocation6 + $0x6c] sm:$0xf]
        %v692 = vld [vmem:[#allocation6 + $0x70] sm:$0xff]
        %v693 = vld [vmem:[#allocation6 + $0x78] sm:$0xff]
        %v694 = vld [vmem:[#allocation6 + $0x80] sm:$0xff]
        %v695 = vld [vmem:[#allocation6 + $0x88] sm:$0xf]
        %v696 = vld [vmem:[#allocation6 + $0x8c] sm:$0xff]
        %v697 = vld [vmem:[#allocation6 + $0x94] sm:$0xff]
        %v698 = vld [vmem:[#allocation6 + $0x9c] sm:$0xff]
        %v699 = vld [vmem:[#allocation6 + $0xa4] sm:$0xf]
        %v700 = vld [vmem:[#allocation6 + $0xa8] sm:$0xff]
        %v701 = vld [vmem:[#allocation6 + $0xb0] sm:$0xff]
        %v702 = vld [vmem:[#allocation6 + $0xb8] sm:$0xff]
        %v703 = vld [vmem:[#allocation6 + $0xc0] sm:$0xf]
        %v704 = vld [vmem:[#allocation6 + $0xc4] sm:$0xff]
        %v705 = vld [vmem:[#allocation6 + $0xcc] sm:$0xff]
        %v706 = vld [vmem:[#allocation6 + $0xd4] sm:$0xff]
        %v707 = vld [vmem:[#allocation6 + $0xdc] sm:$0xf]
        %v708 = vld [vmem:[#allocation6 + $0xe0] sm:$0xff]
        %v709 = vld [vmem:[#allocation6 + $0xe8] sm:$0xff]
        %v710 = vld [vmem:[#allocation6 + $0xf0] sm:$0xff]
        %v711 = vld [vmem:[#allocation6 + $0xf8] sm:$0xf]
        %v712 = vld [vmem:[#allocation6 + $0xfc] sm:$0xff]
        %v713 = vld [vmem:[#allocation6 + $0x104] sm:$0xff]
        %v714 = vld [vmem:[#allocation6 + $0x10c] sm:$0xff]
        %v715 = vld [vmem:[#allocation6 + $0x114] sm:$0xf]
        %v716 = vld [vmem:[#allocation6 + $0x118] sm:$0xff]
        %v717 = vld [vmem:[#allocation6 + $0x120] sm:$0xff]
        %v718 = vld [vmem:[#allocation6 + $0x128] sm:$0xff]
        %v719 = vld [vmem:[#allocation6 + $0x130] sm:$0xf]
        %v720 = vld [vmem:[#allocation6 + $0x134] sm:$0xff]
        %v721 = vld [vmem:[#allocation6 + $0x13c] sm:$0xff]
        %v722 = vld [vmem:[#allocation6 + $0x144] sm:$0xff]
        %v723 = vld [vmem:[#allocation6 + $0x14c] sm:$0xf]
        %v724 = vld [vmem:[#allocation6 + $0x150] sm:$0xff]
        %v725 = vld [vmem:[#allocation6 + $0x158] sm:$0xff]
        %v726 = vld [vmem:[#allocation6 + $0x160] sm:$0xff]
        %v727 = vld [vmem:[#allocation6 + $0x168] sm:$0xf]
        %v728 = vld [vmem:[#allocation6 + $0x16c] sm:$0xff]
        %v729 = vld [vmem:[#allocation6 + $0x174] sm:$0xff]
        %v730 = vld [vmem:[#allocation6 + $0x17c] sm:$0xff]
        %v731 = vld [vmem:[#allocation6 + $0x184] sm:$0xf]
        %v732 = vld [vmem:[#allocation6 + $0x188] sm:$0xff]
        %v733 = vld [vmem:[#allocation6 + $0x190] sm:$0xff]
        %v734 = vld [vmem:[#allocation6 + $0x198] sm:$0xff]
        %v735 = vld [vmem:[#allocation6 + $0x1a0] sm:$0xf]
        %v736 = vld [vmem:[#allocation6 + $0x1a4] sm:$0xff]
        %v737 = vld [vmem:[#allocation6 + $0x1ac] sm:$0xff]
        %v738 = vld [vmem:[#allocation6 + $0x1b4] sm:$0xff]
        %v739 = vld [vmem:[#allocation6 + $0x1bc] sm:$0xf]
        %v740 = vld [vmem:[#allocation6 + $0x1c0] sm:$0xff]
        %v741 = vld [vmem:[#allocation6 + $0x1c8] sm:$0xff]
        %v742 = vld [vmem:[#allocation6 + $0x1d0] sm:$0xff]
        %v743 = vld [vmem:[#allocation6 + $0x1d8] sm:$0xf]
        %v744 = vld [vmem:[#allocation6 + $0x1dc] sm:$0xff]
        %v745 = vld [vmem:[#allocation6 + $0x1e4] sm:$0xff]
        %v746 = vld [vmem:[#allocation6 + $0x1ec] sm:$0xff]
        %v747 = vld [vmem:[#allocation6 + $0x1f4] sm:$0xf]
        %v748 = vld [vmem:[#allocation6 + $0x1f8] sm:$0xff]
        %v749 = vld [vmem:[#allocation6 + $0x200] sm:$0xff]
        %v750 = vld [vmem:[#allocation6 + $0x208] sm:$0xff]
        %v751 = vld [vmem:[#allocation6 + $0x210] sm:$0xf]
        %v752 = vld [vmem:[#allocation6 + $0x214] sm:$0xff]
        %v753 = vld [vmem:[#allocation6 + $0x21c] sm:$0xff]
        %v754 = vld [vmem:[#allocation6 + $0x224] sm:$0xff]
        %v755 = vld [vmem:[#allocation6 + $0x22c] sm:$0xf]
        %v756 = vld [vmem:[#allocation6 + $0x230] sm:$0xff]
        %v757 = vld [vmem:[#allocation6 + $0x238] sm:$0xff]
        %v758 = vld [vmem:[#allocation6 + $0x240] sm:$0xff]
        %v759 = vld [vmem:[#allocation6 + $0x248] sm:$0xf]
        %v760 = vld [vmem:[#allocation6 + $0x24c] sm:$0xff]
        %v761 = vld [vmem:[#allocation6 + $0x254] sm:$0xff]
        %v762 = vld [vmem:[#allocation6 + $0x25c] sm:$0xff]
        %v763 = vld [vmem:[#allocation6 + $0x264] sm:$0xf]
        %v764 = vld [vmem:[#allocation6 + $0x268] sm:$0xff]
        %v765 = vld [vmem:[#allocation6 + $0x270] sm:$0xff]
        %v766 = vld [vmem:[#allocation6 + $0x278] sm:$0xff]
        %v767 = vld [vmem:[#allocation6 + $0x280] sm:$0xf]
        %v768 = vld [vmem:[#allocation6 + $0x284] sm:$0xff]
        %v769 = vld [vmem:[#allocation6 + $0x28c] sm:$0xff]
        %v770 = vld [vmem:[#allocation6 + $0x294] sm:$0xff]
        %v771 = vld [vmem:[#allocation6 + $0x29c] sm:$0xf]
        %v772 = vld [vmem:[#allocation6 + $0x2a0] sm:$0xff]
        %v773 = vld [vmem:[#allocation6 + $0x2a8] sm:$0xff]
        %v774 = vld [vmem:[#allocation6 + $0x2b0] sm:$0xff]
        %v775 = vld [vmem:[#allocation6 + $0x2b8] sm:$0xf]
        %v776 = vld [vmem:[#allocation6 + $0x2bc] sm:$0xff]
        %v777 = vld [vmem:[#allocation6 + $0x2c4] sm:$0xff]
        %v778 = vld [vmem:[#allocation6 + $0x2cc] sm:$0xff]
        %v779 = vld [vmem:[#allocation6 + $0x2d4] sm:$0xf]
        %v780 = vld [vmem:[#allocation6 + $0x2d8] sm:$0xff]
        %v781 = vld [vmem:[#allocation6 + $0x2e0] sm:$0xff]
        %v782 = vld [vmem:[#allocation6 + $0x2e8] sm:$0xff]
        %v783 = vld [vmem:[#allocation6 + $0x2f0] sm:$0xf]
        %v784 = vld [vmem:[#allocation6 + $0x2f4] sm:$0xff]
        %v785 = vld [vmem:[#allocation6 + $0x2fc] sm:$0xff]
        %v786 = vld [vmem:[#allocation6 + $0x304] sm:$0xff]
        %v787 = vld [vmem:[#allocation6 + $0x30c] sm:$0xf]
        %v788 = vld [vmem:[#allocation6 + $0x310] sm:$0xff]
        %v789 = vld [vmem:[#allocation6 + $0x318] sm:$0xff]
        %v790 = vld [vmem:[#allocation6 + $0x320] sm:$0xff]
        %v791 = vld [vmem:[#allocation6 + $0x328] sm:$0xf]
        %v792 = vld [vmem:[#allocation6 + $0x32c] sm:$0xff]
        %v793 = vld [vmem:[#allocation6 + $0x334] sm:$0xff]
        %v794 = vld [vmem:[#allocation6 + $0x33c] sm:$0xff]
        %v795 = vld [vmem:[#allocation6 + $0x344] sm:$0xf]
        %v796 = vld [vmem:[#allocation6 + $0x348] sm:$0xff]
        %v797 = vld [vmem:[#allocation6 + $0x350] sm:$0xff]
        %v798 = vld [vmem:[#allocation6 + $0x358] sm:$0xff]
        %v799 = vld [vmem:[#allocation6 + $0x360] sm:$0xf]
        %v800 = vld [vmem:[#allocation6 + $0x364] sm:$0xff]
        %v801 = vld [vmem:[#allocation6 + $0x36c] sm:$0xff]
        %v802 = vld [vmem:[#allocation6 + $0x374] sm:$0xff]
        %v803 = vld [vmem:[#allocation6 + $0x37c] sm:$0xf]
        %v804 = vld [vmem:[#allocation8] sm:$0xff]
        %v806 = vperm.slane %v804, 0
        %v807 = vperm.slane %v804, 1
        %v808 = vperm.slane %v804, 2
        %v809 = vperm.slane %v804, 3
        %v810 = vperm.slane %v804, 4
        %v811 = vperm.slane %v804, 5
        %v812 = vperm.slane %v804, 6
        %v948 = vunpack.c.l.b16 %v676
        %v949 = vunpack.c.h.b16 %v676
        %v950 = vunpack.c.l.b16 %v677
        %v951 = vunpack.c.h.b16 %v677
        %v952 = vunpack.c.l.b16 %v678
        %v953 = vunpack.c.h.b16 %v678
        %v954 = vunpack.c.l.b16 %v679
        %v955 = vunpack.c.l.b16 %v680
        %v956 = vunpack.c.h.b16 %v680
        %v957 = vunpack.c.l.b16 %v681
        %v958 = vunpack.c.h.b16 %v681
        %v959 = vunpack.c.l.b16 %v682
        %v960 = vunpack.c.h.b16 %v682
        %v961 = vunpack.c.l.b16 %v683
        %v962 = vunpack.c.l.b16 %v684
        %v963 = vunpack.c.h.b16 %v684
        %v964 = vunpack.c.l.b16 %v685
        %v965 = vunpack.c.h.b16 %v685
        %v966 = vunpack.c.l.b16 %v686
        %v967 = vunpack.c.h.b16 %v686
        %v968 = vunpack.c.l.b16 %v687
        %v969 = vunpack.c.l.b16 %v688
        %v970 = vunpack.c.h.b16 %v688
        %v971 = vunpack.c.l.b16 %v689
        %v972 = vunpack.c.h.b16 %v689
        %v973 = vunpack.c.l.b16 %v690
        %v974 = vunpack.c.h.b16 %v690
        %v975 = vunpack.c.l.b16 %v691
        %v976 = vunpack.c.l.b16 %v692
        %v977 = vunpack.c.h.b16 %v692
        %v978 = vunpack.c.l.b16 %v693
        %v979 = vunpack.c.h.b16 %v693
        %v980 = vunpack.c.l.b16 %v694
        %v981 = vunpack.c.h.b16 %v694
        %v982 = vunpack.c.l.b16 %v695
        %v983 = vunpack.c.l.b16 %v696
        %v984 = vunpack.c.h.b16 %v696
        %v985 = vunpack.c.l.b16 %v697
        %v986 = vunpack.c.h.b16 %v697
        %v987 = vunpack.c.l.b16 %v698
        %v988 = vunpack.c.h.b16 %v698
        %v989 = vunpack.c.l.b16 %v699
        %v990 = vunpack.c.l.b16 %v700
        %v991 = vunpack.c.h.b16 %v700
        %v992 = vunpack.c.l.b16 %v701
        %v993 = vunpack.c.h.b16 %v701
        %v994 = vunpack.c.l.b16 %v702
        %v995 = vunpack.c.h.b16 %v702
        %v996 = vunpack.c.l.b16 %v703
        %v997 = vunpack.c.l.b16 %v704
        %v998 = vunpack.c.h.b16 %v704
        %v999 = vunpack.c.l.b16 %v705
        %v1000 = vunpack.c.h.b16 %v705
        %v1001 = vunpack.c.l.b16 %v706
        %v1002 = vunpack.c.h.b16 %v706
        %v1003 = vunpack.c.l.b16 %v707
        %v1004 = vunpack.c.l.b16 %v708
        %v1005 = vunpack.c.h.b16 %v708
        %v1006 = vunpack.c.l.b16 %v709
        %v1007 = vunpack.c.h.b16 %v709
        %v1008 = vunpack.c.l.b16 %v710
        %v1009 = vunpack.c.h.b16 %v710
        %v1010 = vunpack.c.l.b16 %v711
        %v1011 = vunpack.c.l.b16 %v712
        %v1012 = vunpack.c.h.b16 %v712
        %v1013 = vunpack.c.l.b16 %v713
        %v1014 = vunpack.c.h.b16 %v713
        %v1015 = vunpack.c.l.b16 %v714
        %v1016 = vunpack.c.h.b16 %v714
        %v1017 = vunpack.c.l.b16 %v715
        %v1018 = vunpack.c.l.b16 %v716
        %v1019 = vunpack.c.h.b16 %v716
        %v1020 = vunpack.c.l.b16 %v717
        %v1021 = vunpack.c.h.b16 %v717
        %v1022 = vunpack.c.l.b16 %v718
        %v1023 = vunpack.c.h.b16 %v718
        %v1024 = vunpack.c.l.b16 %v719
        %v1025 = vunpack.c.l.b16 %v720
        %v1026 = vunpack.c.h.b16 %v720
        %v1027 = vunpack.c.l.b16 %v721
        %v1028 = vunpack.c.h.b16 %v721
        %v1029 = vunpack.c.l.b16 %v722
        %v1030 = vunpack.c.h.b16 %v722
        %v1031 = vunpack.c.l.b16 %v723
        %v1032 = vunpack.c.l.b16 %v724
        %v1033 = vunpack.c.h.b16 %v724
        %v1034 = vunpack.c.l.b16 %v725
        %v1035 = vunpack.c.h.b16 %v725
        %v1036 = vunpack.c.l.b16 %v726
        %v1037 = vunpack.c.h.b16 %v726
        %v1038 = vunpack.c.l.b16 %v727
        %v1039 = vunpack.c.l.b16 %v728
        %v1040 = vunpack.c.h.b16 %v728
        %v1041 = vunpack.c.l.b16 %v729
        %v1042 = vunpack.c.h.b16 %v729
        %v1043 = vunpack.c.l.b16 %v730
        %v1044 = vunpack.c.h.b16 %v730
        %v1045 = vunpack.c.l.b16 %v731
        %v1046 = vunpack.c.l.b16 %v732
        %v1047 = vunpack.c.h.b16 %v732
        %v1048 = vunpack.c.l.b16 %v733
        %v1049 = vunpack.c.h.b16 %v733
        %v1050 = vunpack.c.l.b16 %v734
        %v1051 = vunpack.c.h.b16 %v734
        %v1052 = vunpack.c.l.b16 %v735
        %v1053 = vunpack.c.l.b16 %v736
        %v1054 = vunpack.c.h.b16 %v736
        %v1055 = vunpack.c.l.b16 %v737
        %v1056 = vunpack.c.h.b16 %v737
        %v1057 = vunpack.c.l.b16 %v738
        %v1058 = vunpack.c.h.b16 %v738
        %v1059 = vunpack.c.l.b16 %v739
        %v1060 = vunpack.c.l.b16 %v740
        %v1061 = vunpack.c.h.b16 %v740
        %v1062 = vunpack.c.l.b16 %v741
        %v1063 = vunpack.c.h.b16 %v741
        %v1064 = vunpack.c.l.b16 %v742
        %v1065 = vunpack.c.h.b16 %v742
        %v1066 = vunpack.c.l.b16 %v743
        %v1067 = vunpack.c.l.b16 %v744
        %v1068 = vunpack.c.h.b16 %v744
        %v1069 = vunpack.c.l.b16 %v745
        %v1070 = vunpack.c.h.b16 %v745
        %v1071 = vunpack.c.l.b16 %v746
        %v1072 = vunpack.c.h.b16 %v746
        %v1073 = vunpack.c.l.b16 %v747
        %v1074 = vunpack.c.l.b16 %v748
        %v1075 = vunpack.c.h.b16 %v748
        %v1076 = vunpack.c.l.b16 %v749
        %v1077 = vunpack.c.h.b16 %v749
        %v1078 = vunpack.c.l.b16 %v750
        %v1079 = vunpack.c.h.b16 %v750
        %v1080 = vunpack.c.l.b16 %v751
        %v1081 = vunpack.c.l.b16 %v752
        %v1082 = vunpack.c.h.b16 %v752
        %v1083 = vunpack.c.l.b16 %v753
        %v1084 = vunpack.c.h.b16 %v753
        %v1085 = vunpack.c.l.b16 %v754
        %v1086 = vunpack.c.h.b16 %v754
        %v1087 = vunpack.c.l.b16 %v755
        %v1088 = vunpack.c.l.b16 %v756
        %v1089 = vunpack.c.h.b16 %v756
        %v1090 = vunpack.c.l.b16 %v757
        %v1091 = vunpack.c.h.b16 %v757
        %v1092 = vunpack.c.l.b16 %v758
        %v1093 = vunpack.c.h.b16 %v758
        %v1094 = vunpack.c.l.b16 %v759
        %v1095 = vunpack.c.l.b16 %v760
        %v1096 = vunpack.c.h.b16 %v760
        %v1097 = vunpack.c.l.b16 %v761
        %v1098 = vunpack.c.h.b16 %v761
        %v1099 = vunpack.c.l.b16 %v762
        %v1100 = vunpack.c.h.b16 %v762
        %v1101 = vunpack.c.l.b16 %v763
        %v1102 = vunpack.c.l.b16 %v764
        %v1103 = vunpack.c.h.b16 %v764
        %v1104 = vunpack.c.l.b16 %v765
        %v1105 = vunpack.c.h.b16 %v765
        %v1106 = vunpack.c.l.b16 %v766
        %v1107 = vunpack.c.h.b16 %v766
        %v1108 = vunpack.c.l.b16 %v767
        %v1109 = vunpack.c.l.b16 %v768
        %v1110 = vunpack.c.h.b16 %v768
        %v1111 = vunpack.c.l.b16 %v769
        %v1112 = vunpack.c.h.b16 %v769
        %v1113 = vunpack.c.l.b16 %v770
        %v1114 = vunpack.c.h.b16 %v770
        %v1115 = vunpack.c.l.b16 %v771
        %v1116 = vunpack.c.l.b16 %v772
        %v1117 = vunpack.c.h.b16 %v772
        %v1118 = vunpack.c.l.b16 %v773
        %v1119 = vunpack.c.h.b16 %v773
        %v1120 = vunpack.c.l.b16 %v774
        %v1121 = vunpack.c.h.b16 %v774
        %v1122 = vunpack.c.l.b16 %v775
        %v1123 = vunpack.c.l.b16 %v776
        %v1124 = vunpack.c.h.b16 %v776
        %v1125 = vunpack.c.l.b16 %v777
        %v1126 = vunpack.c.h.b16 %v777
        %v1127 = vunpack.c.l.b16 %v778
        %v1128 = vunpack.c.h.b16 %v778
        %v1129 = vunpack.c.l.b16 %v779
        %v1130 = vunpack.c.l.b16 %v780
        %v1131 = vunpack.c.h.b16 %v780
        %v1132 = vunpack.c.l.b16 %v781
        %v1133 = vunpack.c.h.b16 %v781
        %v1134 = vunpack.c.l.b16 %v782
        %v1135 = vunpack.c.h.b16 %v782
        %v1136 = vunpack.c.l.b16 %v783
        %v1137 = vunpack.c.l.b16 %v784
        %v1138 = vunpack.c.h.b16 %v784
        %v1139 = vunpack.c.l.b16 %v785
        %v1140 = vunpack.c.h.b16 %v785
        %v1141 = vunpack.c.l.b16 %v786
        %v1142 = vunpack.c.h.b16 %v786
        %v1143 = vunpack.c.l.b16 %v787
        %v1144 = vunpack.c.l.b16 %v788
        %v1145 = vunpack.c.h.b16 %v788
        %v1146 = vunpack.c.l.b16 %v789
        %v1147 = vunpack.c.h.b16 %v789
        %v1148 = vunpack.c.l.b16 %v790
        %v1149 = vunpack.c.h.b16 %v790
        %v1150 = vunpack.c.l.b16 %v791
        %v1151 = vunpack.c.l.b16 %v792
        %v1152 = vunpack.c.h.b16 %v792
        %v1153 = vunpack.c.l.b16 %v793
        %v1154 = vunpack.c.h.b16 %v793
        %v1155 = vunpack.c.l.b16 %v794
        %v1156 = vunpack.c.h.b16 %v794
        %v1157 = vunpack.c.l.b16 %v795
        %v1158 = vunpack.c.l.b16 %v796
        %v1159 = vunpack.c.h.b16 %v796
        %v1160 = vunpack.c.l.b16 %v797
        %v1161 = vunpack.c.h.b16 %v797
        %v1162 = vunpack.c.l.b16 %v798
        %v1163 = vunpack.c.h.b16 %v798
        %v1164 = vunpack.c.l.b16 %v799
        %v1165 = vunpack.c.l.b16 %v800
        %v1166 = vunpack.c.h.b16 %v800
        %v1167 = vunpack.c.l.b16 %v801
        %v1168 = vunpack.c.h.b16 %v801
        %v1169 = vunpack.c.l.b16 %v802
        %v1170 = vunpack.c.h.b16 %v802
        %v1171 = vunpack.c.l.b16 %v803
        %v1172 = vpack.c.b16 %v955, %v948
        %v1173 = vpack.c.b16 %v956, %v949
        %v1174 = vpack.c.b16 %v957, %v950
        %v1175 = vpack.c.b16 %v958, %v951
        %v1176 = vpack.c.b16 %v959, %v952
        %v1177 = vpack.c.b16 %v960, %v953
        %v1178 = vpack.c.b16 %v961, %v954
        %v1179 = vpack.c.b16 %v969, %v962
        %v1180 = vpack.c.b16 %v970, %v963
        %v1181 = vpack.c.b16 %v971, %v964
        %v1182 = vpack.c.b16 %v972, %v965
        %v1183 = vpack.c.b16 %v973, %v966
        %v1184 = vpack.c.b16 %v974, %v967
        %v1185 = vpack.c.b16 %v975, %v968
        %v1186 = vpack.c.b16 %v983, %v976
        %v1187 = vpack.c.b16 %v984, %v977
        %v1188 = vpack.c.b16 %v985, %v978
        %v1189 = vpack.c.b16 %v986, %v979
        %v1190 = vpack.c.b16 %v987, %v980
        %v1191 = vpack.c.b16 %v988, %v981
        %v1192 = vpack.c.b16 %v989, %v982
        %v1193 = vpack.c.b16 %v997, %v990
        %v1194 = vpack.c.b16 %v998, %v991
        %v1195 = vpack.c.b16 %v999, %v992
        %v1196 = vpack.c.b16 %v1000, %v993
        %v1197 = vpack.c.b16 %v1001, %v994
        %v1198 = vpack.c.b16 %v1002, %v995
        %v1199 = vpack.c.b16 %v1003, %v996
        %v1200 = vpack.c.b16 %v1011, %v1004
        %v1201 = vpack.c.b16 %v1012, %v1005
        %v1202 = vpack.c.b16 %v1013, %v1006
        %v1203 = vpack.c.b16 %v1014, %v1007
        %v1204 = vpack.c.b16 %v1015, %v1008
        %v1205 = vpack.c.b16 %v1016, %v1009
        %v1206 = vpack.c.b16 %v1017, %v1010
        %v1207 = vpack.c.b16 %v1025, %v1018
        %v1208 = vpack.c.b16 %v1026, %v1019
        %v1209 = vpack.c.b16 %v1027, %v1020
        %v1210 = vpack.c.b16 %v1028, %v1021
        %v1211 = vpack.c.b16 %v1029, %v1022
        %v1212 = vpack.c.b16 %v1030, %v1023
        %v1213 = vpack.c.b16 %v1031, %v1024
        %v1214 = vpack.c.b16 %v1039, %v1032
        %v1215 = vpack.c.b16 %v1040, %v1033
        %v1216 = vpack.c.b16 %v1041, %v1034
        %v1217 = vpack.c.b16 %v1042, %v1035
        %v1218 = vpack.c.b16 %v1043, %v1036
        %v1219 = vpack.c.b16 %v1044, %v1037
        %v1220 = vpack.c.b16 %v1045, %v1038
        %v1221 = vpack.c.b16 %v1053, %v1046
        %v1222 = vpack.c.b16 %v1054, %v1047
        %v1223 = vpack.c.b16 %v1055, %v1048
        %v1224 = vpack.c.b16 %v1056, %v1049
        %v1225 = vpack.c.b16 %v1057, %v1050
        %v1226 = vpack.c.b16 %v1058, %v1051
        %v1227 = vpack.c.b16 %v1059, %v1052
        %v1228 = vpack.c.b16 %v1067, %v1060
        %v1229 = vpack.c.b16 %v1068, %v1061
        %v1230 = vpack.c.b16 %v1069, %v1062
        %v1231 = vpack.c.b16 %v1070, %v1063
        %v1232 = vpack.c.b16 %v1071, %v1064
        %v1233 = vpack.c.b16 %v1072, %v1065
        %v1234 = vpack.c.b16 %v1073, %v1066
        %v1235 = vpack.c.b16 %v1081, %v1074
        %v1236 = vpack.c.b16 %v1082, %v1075
        %v1237 = vpack.c.b16 %v1083, %v1076
        %v1238 = vpack.c.b16 %v1084, %v1077
        %v1239 = vpack.c.b16 %v1085, %v1078
        %v1240 = vpack.c.b16 %v1086, %v1079
        %v1241 = vpack.c.b16 %v1087, %v1080
        %v1242 = vpack.c.b16 %v1095, %v1088
        %v1243 = vpack.c.b16 %v1096, %v1089
        %v1244 = vpack.c.b16 %v1097, %v1090
        %v1245 = vpack.c.b16 %v1098, %v1091
        %v1246 = vpack.c.b16 %v1099, %v1092
        %v1247 = vpack.c.b16 %v1100, %v1093
        %v1248 = vpack.c.b16 %v1101, %v1094
        %v1249 = vpack.c.b16 %v1109, %v1102
        %v1250 = vpack.c.b16 %v1110, %v1103
        %v1251 = vpack.c.b16 %v1111, %v1104
        %v1252 = vpack.c.b16 %v1112, %v1105
        %v1253 = vpack.c.b16 %v1113, %v1106
        %v1254 = vpack.c.b16 %v1114, %v1107
        %v1255 = vpack.c.b16 %v1115, %v1108
        %v1256 = vpack.c.b16 %v1123, %v1116
        %v1257 = vpack.c.b16 %v1124, %v1117
        %v1258 = vpack.c.b16 %v1125, %v1118
        %v1259 = vpack.c.b16 %v1126, %v1119
        %v1260 = vpack.c.b16 %v1127, %v1120
        %v1261 = vpack.c.b16 %v1128, %v1121
        %v1262 = vpack.c.b16 %v1129, %v1122
        %v1263 = vpack.c.b16 %v1137, %v1130
        %v1264 = vpack.c.b16 %v1138, %v1131
        %v1265 = vpack.c.b16 %v1139, %v1132
        %v1266 = vpack.c.b16 %v1140, %v1133
        %v1267 = vpack.c.b16 %v1141, %v1134
        %v1268 = vpack.c.b16 %v1142, %v1135
        %v1269 = vpack.c.b16 %v1143, %v1136
        %v1270 = vpack.c.b16 %v1151, %v1144
        %v1271 = vpack.c.b16 %v1152, %v1145
        %v1272 = vpack.c.b16 %v1153, %v1146
        %v1273 = vpack.c.b16 %v1154, %v1147
        %v1274 = vpack.c.b16 %v1155, %v1148
        %v1275 = vpack.c.b16 %v1156, %v1149
        %v1276 = vpack.c.b16 %v1157, %v1150
        %v1277 = vpack.c.b16 %v1165, %v1158
        %v1278 = vpack.c.b16 %v1166, %v1159
        %v1279 = vpack.c.b16 %v1167, %v1160
        %v1280 = vpack.c.b16 %v1168, %v1161
        %v1281 = vpack.c.b16 %v1169, %v1162
        %v1282 = vpack.c.b16 %v1170, %v1163
        %v1283 = vpack.c.b16 %v1171, %v1164
        %1396 = vmatpush.bf16.msra.mxu0 %v1221
        %1397 = vmatpush.bf16.msra.mxu0 %v1214
        %1398 = vmatpush.bf16.msra.mxu0 %v1207
        %1399 = vmatpush.bf16.msra.mxu0 %v1200
        %1400 = vmatpush.bf16.msra.mxu0 %v1193
        %1401 = vmatpush.bf16.msra.mxu0 %v1186
        %1402 = vmatpush.bf16.msra.mxu0 %v1179
        %1403 = vmatpush.bf16.msra.mxu0 %v1172
        %1404 = vmatmul.bf16.gmra.mxu0 %v674
        %v1405 = vpop.f32.mrf.mxu0
        %v1406 = vadd.f32 %v806, %v1405
        %v1407 = vpop.f32.mrf.mxu0
        %1408 = vdwg.mxu0
        %1409 = vmatpush.bf16.msra.mxu0 %v1277
        %1410 = vmatpush.bf16.msra.mxu0 %v1270
        %1411 = vmatpush.bf16.msra.mxu0 %v1263
        %1412 = vmatpush.bf16.msra.mxu0 %v1256
        %1413 = vmatpush.bf16.msra.mxu0 %v1249
        %1414 = vmatpush.bf16.msra.mxu0 %v1242
        %1415 = vmatpush.bf16.msra.mxu0 %v1235
        %1416 = vmatpush.bf16.msra.mxu0 %v1228
        %1417 = vmatmul.bf16.gmra.mxu0 %v675
        %v1418 = vpop.f32.mrf.mxu0
        %v1419 = vadd.f32 %v1406, %v1418
        %v1420 = vpop.f32.mrf.mxu0
        %1421 = vdwg.mxu0
        %1422 = vmatpush.bf16.msra.mxu0 %v1222
        %1423 = vmatpush.bf16.msra.mxu0 %v1215
        %1424 = vmatpush.bf16.msra.mxu0 %v1208
        %1425 = vmatpush.bf16.msra.mxu0 %v1201
        %1426 = vmatpush.bf16.msra.mxu0 %v1194
        %1427 = vmatpush.bf16.msra.mxu0 %v1187
        %1428 = vmatpush.bf16.msra.mxu0 %v1180
        %1429 = vmatpush.bf16.msra.mxu0 %v1173
        %1430 = vmatmul.bf16.gmra.mxu0 %v674
        %v1431 = vpop.f32.mrf.mxu0
        %v1432 = vadd.f32 %v807, %v1431
        %v1433 = vpop.f32.mrf.mxu0
        %1434 = vdwg.mxu0
        %1435 = vmatpush.bf16.msra.mxu0 %v1278
        %1436 = vmatpush.bf16.msra.mxu0 %v1271
        %1437 = vmatpush.bf16.msra.mxu0 %v1264
        %1438 = vmatpush.bf16.msra.mxu0 %v1257
        %1439 = vmatpush.bf16.msra.mxu0 %v1250
        %1440 = vmatpush.bf16.msra.mxu0 %v1243
        %1441 = vmatpush.bf16.msra.mxu0 %v1236
        %1442 = vmatpush.bf16.msra.mxu0 %v1229
        %1443 = vmatmul.bf16.gmra.mxu0 %v675
        %v1444 = vpop.f32.mrf.mxu0
        %v1445 = vadd.f32 %v1432, %v1444
        %v1446 = vpop.f32.mrf.mxu0
        %1447 = vdwg.mxu0
        %1448 = vmatpush.bf16.msra.mxu0 %v1223
        %1449 = vmatpush.bf16.msra.mxu0 %v1216
        %1450 = vmatpush.bf16.msra.mxu0 %v1209
        %1451 = vmatpush.bf16.msra.mxu0 %v1202
        %1452 = vmatpush.bf16.msra.mxu0 %v1195
        %1453 = vmatpush.bf16.msra.mxu0 %v1188
        %1454 = vmatpush.bf16.msra.mxu0 %v1181
        %1455 = vmatpush.bf16.msra.mxu0 %v1174
        %1456 = vmatmul.bf16.gmra.mxu0 %v674
        %v1457 = vpop.f32.mrf.mxu0
        %v1458 = vadd.f32 %v808, %v1457
        %v1459 = vpop.f32.mrf.mxu0
        %1460 = vdwg.mxu0
        %1461 = vmatpush.bf16.msra.mxu0 %v1279
        %1462 = vmatpush.bf16.msra.mxu0 %v1272
        %1463 = vmatpush.bf16.msra.mxu0 %v1265
        %1464 = vmatpush.bf16.msra.mxu0 %v1258
        %1465 = vmatpush.bf16.msra.mxu0 %v1251
        %1466 = vmatpush.bf16.msra.mxu0 %v1244
        %1467 = vmatpush.bf16.msra.mxu0 %v1237
        %1468 = vmatpush.bf16.msra.mxu0 %v1230
        %1469 = vmatmul.bf16.gmra.mxu0 %v675
        %v1470 = vpop.f32.mrf.mxu0
        %v1471 = vadd.f32 %v1458, %v1470
        %v1472 = vpop.f32.mrf.mxu0
        %1473 = vdwg.mxu0
        %1474 = vmatpush.bf16.msra.mxu0 %v1224
        %1475 = vmatpush.bf16.msra.mxu0 %v1217
        %1476 = vmatpush.bf16.msra.mxu0 %v1210
        %1477 = vmatpush.bf16.msra.mxu0 %v1203
        %1478 = vmatpush.bf16.msra.mxu0 %v1196
        %1479 = vmatpush.bf16.msra.mxu0 %v1189
        %1480 = vmatpush.bf16.msra.mxu0 %v1182
        %1481 = vmatpush.bf16.msra.mxu0 %v1175
        %1482 = vmatmul.bf16.gmra.mxu0 %v674
        %v1483 = vpop.f32.mrf.mxu0
        %v1484 = vadd.f32 %v809, %v1483
        %v1485 = vpop.f32.mrf.mxu0
        %1486 = vdwg.mxu0
        %1487 = vmatpush.bf16.msra.mxu0 %v1280
        %1488 = vmatpush.bf16.msra.mxu0 %v1273
        %1489 = vmatpush.bf16.msra.mxu0 %v1266
        %1490 = vmatpush.bf16.msra.mxu0 %v1259
        %1491 = vmatpush.bf16.msra.mxu0 %v1252
        %1492 = vmatpush.bf16.msra.mxu0 %v1245
        %1493 = vmatpush.bf16.msra.mxu0 %v1238
        %1494 = vmatpush.bf16.msra.mxu0 %v1231
        %1495 = vmatmul.bf16.gmra.mxu0 %v675
        %v1496 = vpop.f32.mrf.mxu0
        %v1497 = vadd.f32 %v1484, %v1496
        %v1498 = vpop.f32.mrf.mxu0
        %1499 = vdwg.mxu0
        %1500 = vmatpush.bf16.msra.mxu0 %v1225
        %1501 = vmatpush.bf16.msra.mxu0 %v1218
        %1502 = vmatpush.bf16.msra.mxu0 %v1211
        %1503 = vmatpush.bf16.msra.mxu0 %v1204
        %1504 = vmatpush.bf16.msra.mxu0 %v1197
        %1505 = vmatpush.bf16.msra.mxu0 %v1190
        %1506 = vmatpush.bf16.msra.mxu0 %v1183
        %1507 = vmatpush.bf16.msra.mxu0 %v1176
        %1508 = vmatmul.bf16.gmra.mxu0 %v674
        %v1509 = vpop.f32.mrf.mxu0
        %v1510 = vadd.f32 %v810, %v1509
        %v1511 = vpop.f32.mrf.mxu0
        %1512 = vdwg.mxu0
        %1513 = vmatpush.bf16.msra.mxu0 %v1281
        %1514 = vmatpush.bf16.msra.mxu0 %v1274
        %1515 = vmatpush.bf16.msra.mxu0 %v1267
        %1516 = vmatpush.bf16.msra.mxu0 %v1260
        %1517 = vmatpush.bf16.msra.mxu0 %v1253
        %1518 = vmatpush.bf16.msra.mxu0 %v1246
        %1519 = vmatpush.bf16.msra.mxu0 %v1239
        %1520 = vmatpush.bf16.msra.mxu0 %v1232
        %1521 = vmatmul.bf16.gmra.mxu0 %v675
        %v1522 = vpop.f32.mrf.mxu0
        %v1523 = vadd.f32 %v1510, %v1522
        %v1524 = vpop.f32.mrf.mxu0
        %1525 = vdwg.mxu0
        %1526 = vmatpush.bf16.msra.mxu0 %v1226
        %1527 = vmatpush.bf16.msra.mxu0 %v1219
        %1528 = vmatpush.bf16.msra.mxu0 %v1212
        %1529 = vmatpush.bf16.msra.mxu0 %v1205
        %1530 = vmatpush.bf16.msra.mxu0 %v1198
        %1531 = vmatpush.bf16.msra.mxu0 %v1191
        %1532 = vmatpush.bf16.msra.mxu0 %v1184
        %1533 = vmatpush.bf16.msra.mxu0 %v1177
        %1534 = vmatmul.bf16.gmra.mxu0 %v674
        %v1535 = vpop.f32.mrf.mxu0
        %v1536 = vadd.f32 %v811, %v1535
        %v1537 = vpop.f32.mrf.mxu0
        %1538 = vdwg.mxu0
        %1539 = vmatpush.bf16.msra.mxu0 %v1282
        %1540 = vmatpush.bf16.msra.mxu0 %v1275
        %1541 = vmatpush.bf16.msra.mxu0 %v1268
        %1542 = vmatpush.bf16.msra.mxu0 %v1261
        %1543 = vmatpush.bf16.msra.mxu0 %v1254
        %1544 = vmatpush.bf16.msra.mxu0 %v1247
        %1545 = vmatpush.bf16.msra.mxu0 %v1240
        %1546 = vmatpush.bf16.msra.mxu0 %v1233
        %1547 = vmatmul.bf16.gmra.mxu0 %v675
        %v1548 = vpop.f32.mrf.mxu0
        %v1549 = vadd.f32 %v1536, %v1548
        %v1550 = vpop.f32.mrf.mxu0
        %1551 = vdwg.mxu0
        %1552 = vmatpush.bf16.msra.mxu0 %v1227
        %1553 = vmatpush.bf16.msra.mxu0 %v1220
        %1554 = vmatpush.bf16.msra.mxu0 %v1213
        %1555 = vmatpush.bf16.msra.mxu0 %v1206
        %1556 = vmatpush.bf16.msra.mxu0 %v1199
        %1557 = vmatpush.bf16.msra.mxu0 %v1192
        %1558 = vmatpush.bf16.msra.mxu0 %v1185
        %1559 = vmatpush.bf16.msra.mxu0 %v1178
        %1560 = vmatmul.bf16.gmra.mxu0 %v674
        %v1561 = vpop.f32.mrf.mxu0
        %v1562 = vadd.f32 %v812, %v1561
        %v1563 = vpop.f32.mrf.mxu0
        %1564 = vdwg.mxu0
        %1565 = vmatpush.bf16.msra.mxu0 %v1283
        %1566 = vmatpush.bf16.msra.mxu0 %v1276
        %1567 = vmatpush.bf16.msra.mxu0 %v1269
        %1568 = vmatpush.bf16.msra.mxu0 %v1262
        %1569 = vmatpush.bf16.msra.mxu0 %v1255
        %1570 = vmatpush.bf16.msra.mxu0 %v1248
        %1571 = vmatpush.bf16.msra.mxu0 %v1241
        %1572 = vmatpush.bf16.msra.mxu0 %v1234
        %1573 = vmatmul.bf16.gmra.mxu0 %v675
        %v1574 = vpop.f32.mrf.mxu0
        %v1575 = vadd.f32 %v1562, %v1574
        %v1576 = vpop.f32.mrf.mxu0
        %1577 = vdwg.mxu0
        %v1578 = vmax.f32 %v1419, 0.0
        %v1579 = vmax.f32 %v1445, 0.0
        %v1580 = vmax.f32 %v1471, 0.0
        %v1581 = vmax.f32 %v1497, 0.0
        %v1582 = vmax.f32 %v1523, 0.0
        %v1583 = vmax.f32 %v1549, 0.0
        %v1584 = vmax.f32 %v1575, 0.0
        %v1585 = vpack.c.bf16 %v1578, %v1578
        %v1586 = vpack.c.bf16 %v1579, %v1579
        %v1587 = vpack.c.bf16 %v1580, %v1580
        %v1588 = vpack.c.bf16 %v1581, %v1581
        %v1589 = vpack.c.bf16 %v1582, %v1582
        %v1590 = vpack.c.bf16 %v1583, %v1583
        %v1591 = vpack.c.bf16 %v1584, %v1584
        %v1592 = vld [vmem:[#allocation9] sm:$0xff]
        %v1593 = vld [vmem:[#allocation9 + $0x8] sm:$0xff]
        %v1594 = vld [vmem:[#allocation9 + $0x10] sm:$0xff]
        %v1595 = vld [vmem:[#allocation9 + $0x18] sm:$0xf]
        %v1596 = vld [vmem:[#allocation9 + $0x1c] sm:$0xff]
        %v1597 = vld [vmem:[#allocation9 + $0x24] sm:$0xff]
        %v1598 = vld [vmem:[#allocation9 + $0x2c] sm:$0xff]
        %v1599 = vld [vmem:[#allocation9 + $0x34] sm:$0xf]
        %v1600 = vld [vmem:[#allocation9 + $0x38] sm:$0xff]
        %v1601 = vld [vmem:[#allocation9 + $0x40] sm:$0xff]
        %v1602 = vld [vmem:[#allocation9 + $0x48] sm:$0xff]
        %v1603 = vld [vmem:[#allocation9 + $0x50] sm:$0xf]
        %v1604 = vld [vmem:[#allocation9 + $0x54] sm:$0xff]
        %v1605 = vld [vmem:[#allocation9 + $0x5c] sm:$0xff]
        %v1606 = vld [vmem:[#allocation9 + $0x64] sm:$0xff]
        %v1607 = vld [vmem:[#allocation9 + $0x6c] sm:$0xf]
        %v1608 = vld [vmem:[#allocation9 + $0x70] sm:$0xff]
        %v1609 = vld [vmem:[#allocation9 + $0x78] sm:$0xff]
        %v1610 = vld [vmem:[#allocation9 + $0x80] sm:$0xff]
        %v1611 = vld [vmem:[#allocation9 + $0x88] sm:$0xf]
        %v1612 = vld [vmem:[#allocation9 + $0x8c] sm:$0xff]
        %v1613 = vld [vmem:[#allocation9 + $0x94] sm:$0xff]
        %v1614 = vld [vmem:[#allocation9 + $0x9c] sm:$0xff]
        %v1615 = vld [vmem:[#allocation9 + $0xa4] sm:$0xf]
        %v1616 = vld [vmem:[#allocation9 + $0xa8] sm:$0xff]
        %v1617 = vld [vmem:[#allocation9 + $0xb0] sm:$0xff]
        %v1618 = vld [vmem:[#allocation9 + $0xb8] sm:$0xff]
        %v1619 = vld [vmem:[#allocation9 + $0xc0] sm:$0xf]
        %v1620 = vld [vmem:[#allocation9 + $0xc4] sm:$0xff]
        %v1621 = vld [vmem:[#allocation9 + $0xcc] sm:$0xff]
        %v1622 = vld [vmem:[#allocation9 + $0xd4] sm:$0xff]
        %v1623 = vld [vmem:[#allocation9 + $0xdc] sm:$0xf]
        %v1624 = vld [vmem:[#allocation9 + $0xe0] sm:$0xff]
        %v1625 = vld [vmem:[#allocation9 + $0xe8] sm:$0xff]
        %v1626 = vld [vmem:[#allocation9 + $0xf0] sm:$0xff]
        %v1627 = vld [vmem:[#allocation9 + $0xf8] sm:$0xf]
        %v1628 = vld [vmem:[#allocation9 + $0xfc] sm:$0xff]
        %v1629 = vld [vmem:[#allocation9 + $0x104] sm:$0xff]
        %v1630 = vld [vmem:[#allocation9 + $0x10c] sm:$0xff]
        %v1631 = vld [vmem:[#allocation9 + $0x114] sm:$0xf]
        %v1632 = vld [vmem:[#allocation9 + $0x118] sm:$0xff]
        %v1633 = vld [vmem:[#allocation9 + $0x120] sm:$0xff]
        %v1634 = vld [vmem:[#allocation9 + $0x128] sm:$0xff]
        %v1635 = vld [vmem:[#allocation9 + $0x130] sm:$0xf]
        %v1636 = vld [vmem:[#allocation9 + $0x134] sm:$0xff]
        %v1637 = vld [vmem:[#allocation9 + $0x13c] sm:$0xff]
        %v1638 = vld [vmem:[#allocation9 + $0x144] sm:$0xff]
        %v1639 = vld [vmem:[#allocation9 + $0x14c] sm:$0xf]
        %v1640 = vld [vmem:[#allocation9 + $0x150] sm:$0xff]
        %v1641 = vld [vmem:[#allocation9 + $0x158] sm:$0xff]
        %v1642 = vld [vmem:[#allocation9 + $0x160] sm:$0xff]
        %v1643 = vld [vmem:[#allocation9 + $0x168] sm:$0xf]
        %v1644 = vld [vmem:[#allocation9 + $0x16c] sm:$0xff]
        %v1645 = vld [vmem:[#allocation9 + $0x174] sm:$0xff]
        %v1646 = vld [vmem:[#allocation9 + $0x17c] sm:$0xff]
        %v1647 = vld [vmem:[#allocation9 + $0x184] sm:$0xf]
        %v1648 = vld [vmem:[#allocation9 + $0x188] sm:$0xff]
        %v1649 = vld [vmem:[#allocation9 + $0x190] sm:$0xff]
        %v1650 = vld [vmem:[#allocation9 + $0x198] sm:$0xff]
        %v1651 = vld [vmem:[#allocation9 + $0x1a0] sm:$0xf]
        %v1652 = vld [vmem:[#allocation9 + $0x1a4] sm:$0xff]
        %v1653 = vld [vmem:[#allocation9 + $0x1ac] sm:$0xff]
        %v1654 = vld [vmem:[#allocation9 + $0x1b4] sm:$0xff]
        %v1655 = vld [vmem:[#allocation9 + $0x1bc] sm:$0xf]
        %v1656 = vld [vmem:[#allocation9 + $0x1c0] sm:$0xff]
        %v1657 = vld [vmem:[#allocation9 + $0x1c8] sm:$0xff]
        %v1658 = vld [vmem:[#allocation9 + $0x1d0] sm:$0xff]
        %v1659 = vld [vmem:[#allocation9 + $0x1d8] sm:$0xf]
        %v1660 = vld [vmem:[#allocation9 + $0x1dc] sm:$0xff]
        %v1661 = vld [vmem:[#allocation9 + $0x1e4] sm:$0xff]
        %v1662 = vld [vmem:[#allocation9 + $0x1ec] sm:$0xff]
        %v1663 = vld [vmem:[#allocation9 + $0x1f4] sm:$0xf]
        %v1664 = vld [vmem:[#allocation9 + $0x1f8] sm:$0xff]
        %v1665 = vld [vmem:[#allocation9 + $0x200] sm:$0xff]
        %v1666 = vld [vmem:[#allocation9 + $0x208] sm:$0xff]
        %v1667 = vld [vmem:[#allocation9 + $0x210] sm:$0xf]
        %v1668 = vld [vmem:[#allocation9 + $0x214] sm:$0xff]
        %v1669 = vld [vmem:[#allocation9 + $0x21c] sm:$0xff]
        %v1670 = vld [vmem:[#allocation9 + $0x224] sm:$0xff]
        %v1671 = vld [vmem:[#allocation9 + $0x22c] sm:$0xf]
        %v1672 = vld [vmem:[#allocation9 + $0x230] sm:$0xff]
        %v1673 = vld [vmem:[#allocation9 + $0x238] sm:$0xff]
        %v1674 = vld [vmem:[#allocation9 + $0x240] sm:$0xff]
        %v1675 = vld [vmem:[#allocation9 + $0x248] sm:$0xf]
        %v1676 = vld [vmem:[#allocation9 + $0x24c] sm:$0xff]
        %v1677 = vld [vmem:[#allocation9 + $0x254] sm:$0xff]
        %v1678 = vld [vmem:[#allocation9 + $0x25c] sm:$0xff]
        %v1679 = vld [vmem:[#allocation9 + $0x264] sm:$0xf]
        %v1680 = vld [vmem:[#allocation9 + $0x268] sm:$0xff]
        %v1681 = vld [vmem:[#allocation9 + $0x270] sm:$0xff]
        %v1682 = vld [vmem:[#allocation9 + $0x278] sm:$0xff]
        %v1683 = vld [vmem:[#allocation9 + $0x280] sm:$0xf]
        %v1684 = vld [vmem:[#allocation9 + $0x284] sm:$0xff]
        %v1685 = vld [vmem:[#allocation9 + $0x28c] sm:$0xff]
        %v1686 = vld [vmem:[#allocation9 + $0x294] sm:$0xff]
        %v1687 = vld [vmem:[#allocation9 + $0x29c] sm:$0xf]
        %v1688 = vld [vmem:[#allocation9 + $0x2a0] sm:$0xff]
        %v1689 = vld [vmem:[#allocation9 + $0x2a8] sm:$0xff]
        %v1690 = vld [vmem:[#allocation9 + $0x2b0] sm:$0xff]
        %v1691 = vld [vmem:[#allocation9 + $0x2b8] sm:$0xf]
        %v1692 = vld [vmem:[#allocation9 + $0x2bc] sm:$0xff]
        %v1693 = vld [vmem:[#allocation9 + $0x2c4] sm:$0xff]
        %v1694 = vld [vmem:[#allocation9 + $0x2cc] sm:$0xff]
        %v1695 = vld [vmem:[#allocation9 + $0x2d4] sm:$0xf]
        %v1696 = vld [vmem:[#allocation9 + $0x2d8] sm:$0xff]
        %v1697 = vld [vmem:[#allocation9 + $0x2e0] sm:$0xff]
        %v1698 = vld [vmem:[#allocation9 + $0x2e8] sm:$0xff]
        %v1699 = vld [vmem:[#allocation9 + $0x2f0] sm:$0xf]
        %v1700 = vld [vmem:[#allocation9 + $0x2f4] sm:$0xff]
        %v1701 = vld [vmem:[#allocation9 + $0x2fc] sm:$0xff]
        %v1702 = vld [vmem:[#allocation9 + $0x304] sm:$0xff]
        %v1703 = vld [vmem:[#allocation9 + $0x30c] sm:$0xf]
        %v1704 = vld [vmem:[#allocation9 + $0x310] sm:$0xff]
        %v1705 = vld [vmem:[#allocation9 + $0x318] sm:$0xff]
        %v1706 = vld [vmem:[#allocation9 + $0x320] sm:$0xff]
        %v1707 = vld [vmem:[#allocation9 + $0x328] sm:$0xf]
        %v1708 = vld [vmem:[#allocation9 + $0x32c] sm:$0xff]
        %v1709 = vld [vmem:[#allocation9 + $0x334] sm:$0xff]
        %v1710 = vld [vmem:[#allocation9 + $0x33c] sm:$0xff]
        %v1711 = vld [vmem:[#allocation9 + $0x344] sm:$0xf]
        %v1712 = vld [vmem:[#allocation9 + $0x348] sm:$0xff]
        %v1713 = vld [vmem:[#allocation9 + $0x350] sm:$0xff]
        %v1714 = vld [vmem:[#allocation9 + $0x358] sm:$0xff]
        %v1715 = vld [vmem:[#allocation9 + $0x360] sm:$0xf]
        %v1716 = vld [vmem:[#allocation9 + $0x364] sm:$0xff]
        %v1717 = vld [vmem:[#allocation9 + $0x36c] sm:$0xff]
        %v1718 = vld [vmem:[#allocation9 + $0x374] sm:$0xff]
        %v1719 = vld [vmem:[#allocation9 + $0x37c] sm:$0xf]
        %v1720 = vld [vmem:[#allocation9 + $0x380] sm:$0xff]
        %v1721 = vld [vmem:[#allocation9 + $0x388] sm:$0xff]
        %v1722 = vld [vmem:[#allocation9 + $0x390] sm:$0xff]
        %v1723 = vld [vmem:[#allocation9 + $0x398] sm:$0xf]
        %v1724 = vld [vmem:[#allocation9 + $0x39c] sm:$0xff]
        %v1725 = vld [vmem:[#allocation9 + $0x3a4] sm:$0xff]
        %v1726 = vld [vmem:[#allocation9 + $0x3ac] sm:$0xff]
        %v1727 = vld [vmem:[#allocation9 + $0x3b4] sm:$0xf]
        %v1728 = vld [vmem:[#allocation9 + $0x3b8] sm:$0xff]
        %v1729 = vld [vmem:[#allocation9 + $0x3c0] sm:$0xff]
        %v1730 = vld [vmem:[#allocation9 + $0x3c8] sm:$0xff]
        %v1731 = vld [vmem:[#allocation9 + $0x3d0] sm:$0xf]
        %v1732 = vld [vmem:[#allocation9 + $0x3d4] sm:$0xff]
        %v1733 = vld [vmem:[#allocation9 + $0x3dc] sm:$0xff]
        %v1734 = vld [vmem:[#allocation9 + $0x3e4] sm:$0xff]
        %v1735 = vld [vmem:[#allocation9 + $0x3ec] sm:$0xf]
        %v1736 = vld [vmem:[#allocation9 + $0x3f0] sm:$0xff]
        %v1737 = vld [vmem:[#allocation9 + $0x3f8] sm:$0xff]
        %v1738 = vld [vmem:[#allocation9 + $0x400] sm:$0xff]
        %v1739 = vld [vmem:[#allocation9 + $0x408] sm:$0xf]
        %v1740 = vld [vmem:[#allocation9 + $0x40c] sm:$0xff]
        %v1741 = vld [vmem:[#allocation9 + $0x414] sm:$0xff]
        %v1742 = vld [vmem:[#allocation9 + $0x41c] sm:$0xff]
        %v1743 = vld [vmem:[#allocation9 + $0x424] sm:$0xf]
        %v1744 = vld [vmem:[#allocation9 + $0x428] sm:$0xff]
        %v1745 = vld [vmem:[#allocation9 + $0x430] sm:$0xff]
        %v1746 = vld [vmem:[#allocation9 + $0x438] sm:$0xff]
        %v1747 = vld [vmem:[#allocation9 + $0x440] sm:$0xf]
        %v1748 = vld [vmem:[#allocation9 + $0x444] sm:$0xff]
        %v1749 = vld [vmem:[#allocation9 + $0x44c] sm:$0xff]
        %v1750 = vld [vmem:[#allocation9 + $0x454] sm:$0xff]
        %v1751 = vld [vmem:[#allocation9 + $0x45c] sm:$0xf]
        %v1752 = vld [vmem:[#allocation9 + $0x460] sm:$0xff]
        %v1753 = vld [vmem:[#allocation9 + $0x468] sm:$0xff]
        %v1754 = vld [vmem:[#allocation9 + $0x470] sm:$0xff]
        %v1755 = vld [vmem:[#allocation9 + $0x478] sm:$0xf]
        %v1756 = vld [vmem:[#allocation9 + $0x47c] sm:$0xff]
        %v1757 = vld [vmem:[#allocation9 + $0x484] sm:$0xff]
        %v1758 = vld [vmem:[#allocation9 + $0x48c] sm:$0xff]
        %v1759 = vld [vmem:[#allocation9 + $0x494] sm:$0xf]
        %v1760 = vld [vmem:[#allocation9 + $0x498] sm:$0xff]
        %v1761 = vld [vmem:[#allocation9 + $0x4a0] sm:$0xff]
        %v1762 = vld [vmem:[#allocation9 + $0x4a8] sm:$0xff]
        %v1763 = vld [vmem:[#allocation9 + $0x4b0] sm:$0xf]
        %v1764 = vld [vmem:[#allocation9 + $0x4b4] sm:$0xff]
        %v1765 = vld [vmem:[#allocation9 + $0x4bc] sm:$0xff]
        %v1766 = vld [vmem:[#allocation9 + $0x4c4] sm:$0xff]
        %v1767 = vld [vmem:[#allocation9 + $0x4cc] sm:$0xf]
        %v1768 = vld [vmem:[#allocation9 + $0x4d0] sm:$0xff]
        %v1769 = vld [vmem:[#allocation9 + $0x4d8] sm:$0xff]
        %v1770 = vld [vmem:[#allocation9 + $0x4e0] sm:$0xff]
        %v1771 = vld [vmem:[#allocation9 + $0x4e8] sm:$0xf]
        %v1772 = vld [vmem:[#allocation9 + $0x4ec] sm:$0xff]
        %v1773 = vld [vmem:[#allocation9 + $0x4f4] sm:$0xff]
        %v1774 = vld [vmem:[#allocation9 + $0x4fc] sm:$0xff]
        %v1775 = vld [vmem:[#allocation9 + $0x504] sm:$0xf]
        %v1776 = vld [vmem:[#allocation9 + $0x508] sm:$0xff]
        %v1777 = vld [vmem:[#allocation9 + $0x510] sm:$0xff]
        %v1778 = vld [vmem:[#allocation9 + $0x518] sm:$0xff]
        %v1779 = vld [vmem:[#allocation9 + $0x520] sm:$0xf]
        %v1780 = vld [vmem:[#allocation9 + $0x524] sm:$0xff]
        %v1781 = vld [vmem:[#allocation9 + $0x52c] sm:$0xff]
        %v1782 = vld [vmem:[#allocation9 + $0x534] sm:$0xff]
        %v1783 = vld [vmem:[#allocation9 + $0x53c] sm:$0xf]
        %v1784 = vld [vmem:[#allocation9 + $0x540] sm:$0xff]
        %v1785 = vld [vmem:[#allocation9 + $0x548] sm:$0xff]
        %v1786 = vld [vmem:[#allocation9 + $0x550] sm:$0xff]
        %v1787 = vld [vmem:[#allocation9 + $0x558] sm:$0xf]
        %v1788 = vld [vmem:[#allocation9 + $0x55c] sm:$0xff]
        %v1789 = vld [vmem:[#allocation9 + $0x564] sm:$0xff]
        %v1790 = vld [vmem:[#allocation9 + $0x56c] sm:$0xff]
        %v1791 = vld [vmem:[#allocation9 + $0x574] sm:$0xf]
        %v1792 = vld [vmem:[#allocation9 + $0x578] sm:$0xff]
        %v1793 = vld [vmem:[#allocation9 + $0x580] sm:$0xff]
        %v1794 = vld [vmem:[#allocation9 + $0x588] sm:$0xff]
        %v1795 = vld [vmem:[#allocation9 + $0x590] sm:$0xf]
        %v1796 = vld [vmem:[#allocation9 + $0x594] sm:$0xff]
        %v1797 = vld [vmem:[#allocation9 + $0x59c] sm:$0xff]
        %v1798 = vld [vmem:[#allocation9 + $0x5a4] sm:$0xff]
        %v1799 = vld [vmem:[#allocation9 + $0x5ac] sm:$0xf]
        %v1800 = vld [vmem:[#allocation9 + $0x5b0] sm:$0xff]
        %v1801 = vld [vmem:[#allocation9 + $0x5b8] sm:$0xff]
        %v1802 = vld [vmem:[#allocation9 + $0x5c0] sm:$0xff]
        %v1803 = vld [vmem:[#allocation9 + $0x5c8] sm:$0xf]
        %v1804 = vld [vmem:[#allocation9 + $0x5cc] sm:$0xff]
        %v1805 = vld [vmem:[#allocation9 + $0x5d4] sm:$0xff]
        %v1806 = vld [vmem:[#allocation9 + $0x5dc] sm:$0xff]
        %v1807 = vld [vmem:[#allocation9 + $0x5e4] sm:$0xf]
        %v1808 = vld [vmem:[#allocation9 + $0x5e8] sm:$0xff]
        %v1809 = vld [vmem:[#allocation9 + $0x5f0] sm:$0xff]
        %v1810 = vld [vmem:[#allocation9 + $0x5f8] sm:$0xff]
        %v1811 = vld [vmem:[#allocation9 + $0x600] sm:$0xf]
        %v1812 = vld [vmem:[#allocation9 + $0x604] sm:$0xff]
        %v1813 = vld [vmem:[#allocation9 + $0x60c] sm:$0xff]
        %v1814 = vld [vmem:[#allocation9 + $0x614] sm:$0xff]
        %v1815 = vld [vmem:[#allocation9 + $0x61c] sm:$0xf]
        %v1816 = vld [vmem:[#allocation9 + $0x620] sm:$0xff]
        %v1817 = vld [vmem:[#allocation9 + $0x628] sm:$0xff]
        %v1818 = vld [vmem:[#allocation9 + $0x630] sm:$0xff]
        %v1819 = vld [vmem:[#allocation9 + $0x638] sm:$0xf]
        %v1820 = vld [vmem:[#allocation9 + $0x63c] sm:$0xff]
        %v1821 = vld [vmem:[#allocation9 + $0x644] sm:$0xff]
        %v1822 = vld [vmem:[#allocation9 + $0x64c] sm:$0xff]
        %v1823 = vld [vmem:[#allocation9 + $0x654] sm:$0xf]
        %v1824 = vld [vmem:[#allocation9 + $0x658] sm:$0xff]
        %v1825 = vld [vmem:[#allocation9 + $0x660] sm:$0xff]
        %v1826 = vld [vmem:[#allocation9 + $0x668] sm:$0xff]
        %v1827 = vld [vmem:[#allocation9 + $0x670] sm:$0xf]
        %v1828 = vld [vmem:[#allocation9 + $0x674] sm:$0xff]
        %v1829 = vld [vmem:[#allocation9 + $0x67c] sm:$0xff]
        %v1830 = vld [vmem:[#allocation9 + $0x684] sm:$0xff]
        %v1831 = vld [vmem:[#allocation9 + $0x68c] sm:$0xf]
        %v1832 = vld [vmem:[#allocation9 + $0x690] sm:$0xff]
        %v1833 = vld [vmem:[#allocation9 + $0x698] sm:$0xff]
        %v1834 = vld [vmem:[#allocation9 + $0x6a0] sm:$0xff]
        %v1835 = vld [vmem:[#allocation9 + $0x6a8] sm:$0xf]
        %v1836 = vld [vmem:[#allocation9 + $0x6ac] sm:$0xff]
        %v1837 = vld [vmem:[#allocation9 + $0x6b4] sm:$0xff]
        %v1838 = vld [vmem:[#allocation9 + $0x6bc] sm:$0xff]
        %v1839 = vld [vmem:[#allocation9 + $0x6c4] sm:$0xf]
        %v1840 = vld [vmem:[#allocation9 + $0x6c8] sm:$0xff]
        %v1841 = vld [vmem:[#allocation9 + $0x6d0] sm:$0xff]
        %v1842 = vld [vmem:[#allocation9 + $0x6d8] sm:$0xff]
        %v1843 = vld [vmem:[#allocation9 + $0x6e0] sm:$0xf]
        %v1844 = vld [vmem:[#allocation9 + $0x6e4] sm:$0xff]
        %v1845 = vld [vmem:[#allocation9 + $0x6ec] sm:$0xff]
        %v1846 = vld [vmem:[#allocation9 + $0x6f4] sm:$0xff]
        %v1847 = vld [vmem:[#allocation9 + $0x6fc] sm:$0xf]
        %v1848 = vld [vmem:[#allocation9 + $0x700] sm:$0xff]
        %v1849 = vld [vmem:[#allocation9 + $0x708] sm:$0xff]
        %v1850 = vld [vmem:[#allocation9 + $0x710] sm:$0xff]
        %v1851 = vld [vmem:[#allocation9 + $0x718] sm:$0xf]
        %v1852 = vld [vmem:[#allocation9 + $0x71c] sm:$0xff]
        %v1853 = vld [vmem:[#allocation9 + $0x724] sm:$0xff]
        %v1854 = vld [vmem:[#allocation9 + $0x72c] sm:$0xff]
        %v1855 = vld [vmem:[#allocation9 + $0x734] sm:$0xf]
        %v1856 = vld [vmem:[#allocation9 + $0x738] sm:$0xff]
        %v1857 = vld [vmem:[#allocation9 + $0x740] sm:$0xff]
        %v1858 = vld [vmem:[#allocation9 + $0x748] sm:$0xff]
        %v1859 = vld [vmem:[#allocation9 + $0x750] sm:$0xf]
        %v1860 = vld [vmem:[#allocation9 + $0x754] sm:$0xff]
        %v1861 = vld [vmem:[#allocation9 + $0x75c] sm:$0xff]
        %v1862 = vld [vmem:[#allocation9 + $0x764] sm:$0xff]
        %v1863 = vld [vmem:[#allocation9 + $0x76c] sm:$0xf]
        %v1864 = vld [vmem:[#allocation9 + $0x770] sm:$0xff]
        %v1865 = vld [vmem:[#allocation9 + $0x778] sm:$0xff]
        %v1866 = vld [vmem:[#allocation9 + $0x780] sm:$0xff]
        %v1867 = vld [vmem:[#allocation9 + $0x788] sm:$0xf]
        %v1868 = vld [vmem:[#allocation9 + $0x78c] sm:$0xff]
        %v1869 = vld [vmem:[#allocation9 + $0x794] sm:$0xff]
        %v1870 = vld [vmem:[#allocation9 + $0x79c] sm:$0xff]
        %v1871 = vld [vmem:[#allocation9 + $0x7a4] sm:$0xf]
        %v1872 = vld [vmem:[#allocation9 + $0x7a8] sm:$0xff]
        %v1873 = vld [vmem:[#allocation9 + $0x7b0] sm:$0xff]
        %v1874 = vld [vmem:[#allocation9 + $0x7b8] sm:$0xff]
        %v1875 = vld [vmem:[#allocation9 + $0x7c0] sm:$0xf]
        %v1876 = vld [vmem:[#allocation9 + $0x7c4] sm:$0xff]
        %v1877 = vld [vmem:[#allocation9 + $0x7cc] sm:$0xff]
        %v1878 = vld [vmem:[#allocation9 + $0x7d4] sm:$0xff]
        %v1879 = vld [vmem:[#allocation9 + $0x7dc] sm:$0xf]
        %v1880 = vld [vmem:[#allocation9 + $0x7e0] sm:$0xff]
        %v1881 = vld [vmem:[#allocation9 + $0x7e8] sm:$0xff]
        %v1882 = vld [vmem:[#allocation9 + $0x7f0] sm:$0xff]
        %v1883 = vld [vmem:[#allocation9 + $0x7f8] sm:$0xf]
        %v1884 = vld [vmem:[#allocation9 + $0x7fc] sm:$0xff]
        %v1885 = vld [vmem:[#allocation9 + $0x804] sm:$0xff]
        %v1886 = vld [vmem:[#allocation9 + $0x80c] sm:$0xff]
        %v1887 = vld [vmem:[#allocation9 + $0x814] sm:$0xf]
        %v1888 = vld [vmem:[#allocation9 + $0x818] sm:$0xff]
        %v1889 = vld [vmem:[#allocation9 + $0x820] sm:$0xff]
        %v1890 = vld [vmem:[#allocation9 + $0x828] sm:$0xff]
        %v1891 = vld [vmem:[#allocation9 + $0x830] sm:$0xf]
        %v1892 = vld [vmem:[#allocation9 + $0x834] sm:$0xff]
        %v1893 = vld [vmem:[#allocation9 + $0x83c] sm:$0xff]
        %v1894 = vld [vmem:[#allocation9 + $0x844] sm:$0xff]
        %v1895 = vld [vmem:[#allocation9 + $0x84c] sm:$0xf]
        %v1896 = vld [vmem:[#allocation9 + $0x850] sm:$0xff]
        %v1897 = vld [vmem:[#allocation9 + $0x858] sm:$0xff]
        %v1898 = vld [vmem:[#allocation9 + $0x860] sm:$0xff]
        %v1899 = vld [vmem:[#allocation9 + $0x868] sm:$0xf]
        %v1900 = vld [vmem:[#allocation9 + $0x86c] sm:$0xff]
        %v1901 = vld [vmem:[#allocation9 + $0x874] sm:$0xff]
        %v1902 = vld [vmem:[#allocation9 + $0x87c] sm:$0xff]
        %v1903 = vld [vmem:[#allocation9 + $0x884] sm:$0xf]
        %v1904 = vld [vmem:[#allocation9 + $0x888] sm:$0xff]
        %v1905 = vld [vmem:[#allocation9 + $0x890] sm:$0xff]
        %v1906 = vld [vmem:[#allocation9 + $0x898] sm:$0xff]
        %v1907 = vld [vmem:[#allocation9 + $0x8a0] sm:$0xf]
        %v1908 = vld [vmem:[#allocation9 + $0x8a4] sm:$0xff]
        %v1909 = vld [vmem:[#allocation9 + $0x8ac] sm:$0xff]
        %v1910 = vld [vmem:[#allocation9 + $0x8b4] sm:$0xff]
        %v1911 = vld [vmem:[#allocation9 + $0x8bc] sm:$0xf]
        %v1912 = vld [vmem:[#allocation9 + $0x8c0] sm:$0xff]
        %v1913 = vld [vmem:[#allocation9 + $0x8c8] sm:$0xff]
        %v1914 = vld [vmem:[#allocation9 + $0x8d0] sm:$0xff]
        %v1915 = vld [vmem:[#allocation9 + $0x8d8] sm:$0xf]
        %v1916 = vld [vmem:[#allocation9 + $0x8dc] sm:$0xff]
        %v1917 = vld [vmem:[#allocation9 + $0x8e4] sm:$0xff]
        %v1918 = vld [vmem:[#allocation9 + $0x8ec] sm:$0xff]
        %v1919 = vld [vmem:[#allocation9 + $0x8f4] sm:$0xf]
        %v1920 = vld [vmem:[#allocation9 + $0x8f8] sm:$0xff]
        %v1921 = vld [vmem:[#allocation9 + $0x900] sm:$0xff]
        %v1922 = vld [vmem:[#allocation9 + $0x908] sm:$0xff]
        %v1923 = vld [vmem:[#allocation9 + $0x910] sm:$0xf]
        %v1924 = vld [vmem:[#allocation9 + $0x914] sm:$0xff]
        %v1925 = vld [vmem:[#allocation9 + $0x91c] sm:$0xff]
        %v1926 = vld [vmem:[#allocation9 + $0x924] sm:$0xff]
        %v1927 = vld [vmem:[#allocation9 + $0x92c] sm:$0xf]
        %v1928 = vld [vmem:[#allocation9 + $0x930] sm:$0xff]
        %v1929 = vld [vmem:[#allocation9 + $0x938] sm:$0xff]
        %v1930 = vld [vmem:[#allocation9 + $0x940] sm:$0xff]
        %v1931 = vld [vmem:[#allocation9 + $0x948] sm:$0xf]
        %v1932 = vld [vmem:[#allocation9 + $0x94c] sm:$0xff]
        %v1933 = vld [vmem:[#allocation9 + $0x954] sm:$0xff]
        %v1934 = vld [vmem:[#allocation9 + $0x95c] sm:$0xff]
        %v1935 = vld [vmem:[#allocation9 + $0x964] sm:$0xf]
        %v1936 = vld [vmem:[#allocation9 + $0x968] sm:$0xff]
        %v1937 = vld [vmem:[#allocation9 + $0x970] sm:$0xff]
        %v1938 = vld [vmem:[#allocation9 + $0x978] sm:$0xff]
        %v1939 = vld [vmem:[#allocation9 + $0x980] sm:$0xf]
        %v1940 = vld [vmem:[#allocation9 + $0x984] sm:$0xff]
        %v1941 = vld [vmem:[#allocation9 + $0x98c] sm:$0xff]
        %v1942 = vld [vmem:[#allocation9 + $0x994] sm:$0xff]
        %v1943 = vld [vmem:[#allocation9 + $0x99c] sm:$0xf]
        %v1944 = vld [vmem:[#allocation9 + $0x9a0] sm:$0xff]
        %v1945 = vld [vmem:[#allocation9 + $0x9a8] sm:$0xff]
        %v1946 = vld [vmem:[#allocation9 + $0x9b0] sm:$0xff]
        %v1947 = vld [vmem:[#allocation9 + $0x9b8] sm:$0xf]
        %v1948 = vld [vmem:[#allocation9 + $0x9bc] sm:$0xff]
        %v1949 = vld [vmem:[#allocation9 + $0x9c4] sm:$0xff]
        %v1950 = vld [vmem:[#allocation9 + $0x9cc] sm:$0xff]
        %v1951 = vld [vmem:[#allocation9 + $0x9d4] sm:$0xf]
        %v1952 = vld [vmem:[#allocation9 + $0x9d8] sm:$0xff]
        %v1953 = vld [vmem:[#allocation9 + $0x9e0] sm:$0xff]
        %v1954 = vld [vmem:[#allocation9 + $0x9e8] sm:$0xff]
        %v1955 = vld [vmem:[#allocation9 + $0x9f0] sm:$0xf]
        %v1956 = vld [vmem:[#allocation9 + $0x9f4] sm:$0xff]
        %v1957 = vld [vmem:[#allocation9 + $0x9fc] sm:$0xff]
        %v1958 = vld [vmem:[#allocation9 + $0xa04] sm:$0xff]
        %v1959 = vld [vmem:[#allocation9 + $0xa0c] sm:$0xf]
        %v1960 = vld [vmem:[#allocation9 + $0xa10] sm:$0xff]
        %v1961 = vld [vmem:[#allocation9 + $0xa18] sm:$0xff]
        %v1962 = vld [vmem:[#allocation9 + $0xa20] sm:$0xff]
        %v1963 = vld [vmem:[#allocation9 + $0xa28] sm:$0xf]
        %v1964 = vld [vmem:[#allocation9 + $0xa2c] sm:$0xff]
        %v1965 = vld [vmem:[#allocation9 + $0xa34] sm:$0xff]
        %v1966 = vld [vmem:[#allocation9 + $0xa3c] sm:$0xff]
        %v1967 = vld [vmem:[#allocation9 + $0xa44] sm:$0xf]
        %v1968 = vld [vmem:[#allocation9 + $0xa48] sm:$0xff]
        %v1969 = vld [vmem:[#allocation9 + $0xa50] sm:$0xff]
        %v1970 = vld [vmem:[#allocation9 + $0xa58] sm:$0xff]
        %v1971 = vld [vmem:[#allocation9 + $0xa60] sm:$0xf]
        %v1972 = vld [vmem:[#allocation9 + $0xa64] sm:$0xff]
        %v1973 = vld [vmem:[#allocation9 + $0xa6c] sm:$0xff]
        %v1974 = vld [vmem:[#allocation9 + $0xa74] sm:$0xff]
        %v1975 = vld [vmem:[#allocation9 + $0xa7c] sm:$0xf]
        %v1976 = vld [vmem:[#allocation9 + $0xa80] sm:$0xff]
        %v1977 = vld [vmem:[#allocation9 + $0xa88] sm:$0xff]
        %v1978 = vld [vmem:[#allocation9 + $0xa90] sm:$0xff]
        %v1979 = vld [vmem:[#allocation9 + $0xa98] sm:$0xf]
        %v1980 = vld [vmem:[#allocation9 + $0xa9c] sm:$0xff]
        %v1981 = vld [vmem:[#allocation9 + $0xaa4] sm:$0xff]
        %v1982 = vld [vmem:[#allocation9 + $0xaac] sm:$0xff]
        %v1983 = vld [vmem:[#allocation9 + $0xab4] sm:$0xf]
        %v1984 = vld [vmem:[#allocation9 + $0xab8] sm:$0xff]
        %v1985 = vld [vmem:[#allocation9 + $0xac0] sm:$0xff]
        %v1986 = vld [vmem:[#allocation9 + $0xac8] sm:$0xff]
        %v1987 = vld [vmem:[#allocation9 + $0xad0] sm:$0xf]
        %v1988 = vld [vmem:[#allocation9 + $0xad4] sm:$0xff]
        %v1989 = vld [vmem:[#allocation9 + $0xadc] sm:$0xff]
        %v1990 = vld [vmem:[#allocation9 + $0xae4] sm:$0xff]
        %v1991 = vld [vmem:[#allocation9 + $0xaec] sm:$0xf]
        %v1992 = vld [vmem:[#allocation9 + $0xaf0] sm:$0xff]
        %v1993 = vld [vmem:[#allocation9 + $0xaf8] sm:$0xff]
        %v1994 = vld [vmem:[#allocation9 + $0xb00] sm:$0xff]
        %v1995 = vld [vmem:[#allocation9 + $0xb08] sm:$0xf]
        %v1996 = vld [vmem:[#allocation9 + $0xb0c] sm:$0xff]
        %v1997 = vld [vmem:[#allocation9 + $0xb14] sm:$0xff]
        %v1998 = vld [vmem:[#allocation9 + $0xb1c] sm:$0xff]
        %v1999 = vld [vmem:[#allocation9 + $0xb24] sm:$0xf]
        %v2000 = vld [vmem:[#allocation9 + $0xb28] sm:$0xff]
        %v2001 = vld [vmem:[#allocation9 + $0xb30] sm:$0xff]
        %v2002 = vld [vmem:[#allocation9 + $0xb38] sm:$0xff]
        %v2003 = vld [vmem:[#allocation9 + $0xb40] sm:$0xf]
        %v2004 = vld [vmem:[#allocation9 + $0xb44] sm:$0xff]
        %v2005 = vld [vmem:[#allocation9 + $0xb4c] sm:$0xff]
        %v2006 = vld [vmem:[#allocation9 + $0xb54] sm:$0xff]
        %v2007 = vld [vmem:[#allocation9 + $0xb5c] sm:$0xf]
        %v2008 = vld [vmem:[#allocation9 + $0xb60] sm:$0xff]
        %v2009 = vld [vmem:[#allocation9 + $0xb68] sm:$0xff]
        %v2010 = vld [vmem:[#allocation9 + $0xb70] sm:$0xff]
        %v2011 = vld [vmem:[#allocation9 + $0xb78] sm:$0xf]
        %v2012 = vld [vmem:[#allocation9 + $0xb7c] sm:$0xff]
        %v2013 = vld [vmem:[#allocation9 + $0xb84] sm:$0xff]
        %v2014 = vld [vmem:[#allocation9 + $0xb8c] sm:$0xff]
        %v2015 = vld [vmem:[#allocation9 + $0xb94] sm:$0xf]
        %v2016 = vld [vmem:[#allocation9 + $0xb98] sm:$0xff]
        %v2017 = vld [vmem:[#allocation9 + $0xba0] sm:$0xff]
        %v2018 = vld [vmem:[#allocation9 + $0xba8] sm:$0xff]
        %v2019 = vld [vmem:[#allocation9 + $0xbb0] sm:$0xf]
        %v2020 = vld [vmem:[#allocation9 + $0xbb4] sm:$0xff]
        %v2021 = vld [vmem:[#allocation9 + $0xbbc] sm:$0xff]
        %v2022 = vld [vmem:[#allocation9 + $0xbc4] sm:$0xff]
        %v2023 = vld [vmem:[#allocation9 + $0xbcc] sm:$0xf]
        %v2024 = vld [vmem:[#allocation9 + $0xbd0] sm:$0xff]
        %v2025 = vld [vmem:[#allocation9 + $0xbd8] sm:$0xff]
        %v2026 = vld [vmem:[#allocation9 + $0xbe0] sm:$0xff]
        %v2027 = vld [vmem:[#allocation9 + $0xbe8] sm:$0xf]
        %v2028 = vld [vmem:[#allocation9 + $0xbec] sm:$0xff]
        %v2029 = vld [vmem:[#allocation9 + $0xbf4] sm:$0xff]
        %v2030 = vld [vmem:[#allocation9 + $0xbfc] sm:$0xff]
        %v2031 = vld [vmem:[#allocation9 + $0xc04] sm:$0xf]
        %v2032 = vld [vmem:[#allocation9 + $0xc08] sm:$0xff]
        %v2033 = vld [vmem:[#allocation9 + $0xc10] sm:$0xff]
        %v2034 = vld [vmem:[#allocation9 + $0xc18] sm:$0xff]
        %v2035 = vld [vmem:[#allocation9 + $0xc20] sm:$0xf]
        %v2036 = vld [vmem:[#allocation9 + $0xc24] sm:$0xff]
        %v2037 = vld [vmem:[#allocation9 + $0xc2c] sm:$0xff]
        %v2038 = vld [vmem:[#allocation9 + $0xc34] sm:$0xff]
        %v2039 = vld [vmem:[#allocation9 + $0xc3c] sm:$0xf]
        %v2040 = vld [vmem:[#allocation11] sm:$0xff]
        %v2042 = vperm.slane %v2040, 0
        %v2043 = vperm.slane %v2040, 1
        %v2044 = vperm.slane %v2040, 2
        %v2045 = vperm.slane %v2040, 3
        %v2046 = vperm.slane %v2040, 4
        %v2047 = vperm.slane %v2040, 5
        %v2048 = vperm.slane %v2040, 6
        %v2504 = vunpack.c.l.b16 %v1592
        %v2505 = vunpack.c.h.b16 %v1592
        %v2506 = vunpack.c.l.b16 %v1593
        %v2507 = vunpack.c.h.b16 %v1593
        %v2508 = vunpack.c.l.b16 %v1594
        %v2509 = vunpack.c.h.b16 %v1594
        %v2510 = vunpack.c.l.b16 %v1595
        %v2511 = vunpack.c.l.b16 %v1596
        %v2512 = vunpack.c.h.b16 %v1596
        %v2513 = vunpack.c.l.b16 %v1597
        %v2514 = vunpack.c.h.b16 %v1597
        %v2515 = vunpack.c.l.b16 %v1598
        %v2516 = vunpack.c.h.b16 %v1598
        %v2517 = vunpack.c.l.b16 %v1599
        %v2518 = vunpack.c.l.b16 %v1600
        %v2519 = vunpack.c.h.b16 %v1600
        %v2520 = vunpack.c.l.b16 %v1601
        %v2521 = vunpack.c.h.b16 %v1601
        %v2522 = vunpack.c.l.b16 %v1602
        %v2523 = vunpack.c.h.b16 %v1602
        %v2524 = vunpack.c.l.b16 %v1603
        %v2525 = vunpack.c.l.b16 %v1604
        %v2526 = vunpack.c.h.b16 %v1604
        %v2527 = vunpack.c.l.b16 %v1605
        %v2528 = vunpack.c.h.b16 %v1605
        %v2529 = vunpack.c.l.b16 %v1606
        %v2530 = vunpack.c.h.b16 %v1606
        %v2531 = vunpack.c.l.b16 %v1607
        %v2532 = vunpack.c.l.b16 %v1608
        %v2533 = vunpack.c.h.b16 %v1608
        %v2534 = vunpack.c.l.b16 %v1609
        %v2535 = vunpack.c.h.b16 %v1609
        %v2536 = vunpack.c.l.b16 %v1610
        %v2537 = vunpack.c.h.b16 %v1610
        %v2538 = vunpack.c.l.b16 %v1611
        %v2539 = vunpack.c.l.b16 %v1612
        %v2540 = vunpack.c.h.b16 %v1612
        %v2541 = vunpack.c.l.b16 %v1613
        %v2542 = vunpack.c.h.b16 %v1613
        %v2543 = vunpack.c.l.b16 %v1614
        %v2544 = vunpack.c.h.b16 %v1614
        %v2545 = vunpack.c.l.b16 %v1615
        %v2546 = vunpack.c.l.b16 %v1616
        %v2547 = vunpack.c.h.b16 %v1616
        %v2548 = vunpack.c.l.b16 %v1617
        %v2549 = vunpack.c.h.b16 %v1617
        %v2550 = vunpack.c.l.b16 %v1618
        %v2551 = vunpack.c.h.b16 %v1618
        %v2552 = vunpack.c.l.b16 %v1619
        %v2553 = vunpack.c.l.b16 %v1620
        %v2554 = vunpack.c.h.b16 %v1620
        %v2555 = vunpack.c.l.b16 %v1621
        %v2556 = vunpack.c.h.b16 %v1621
        %v2557 = vunpack.c.l.b16 %v1622
        %v2558 = vunpack.c.h.b16 %v1622
        %v2559 = vunpack.c.l.b16 %v1623
        %v2560 = vunpack.c.l.b16 %v1624
        %v2561 = vunpack.c.h.b16 %v1624
        %v2562 = vunpack.c.l.b16 %v1625
        %v2563 = vunpack.c.h.b16 %v1625
        %v2564 = vunpack.c.l.b16 %v1626
        %v2565 = vunpack.c.h.b16 %v1626
        %v2566 = vunpack.c.l.b16 %v1627
        %v2567 = vunpack.c.l.b16 %v1628
        %v2568 = vunpack.c.h.b16 %v1628
        %v2569 = vunpack.c.l.b16 %v1629
        %v2570 = vunpack.c.h.b16 %v1629
        %v2571 = vunpack.c.l.b16 %v1630
        %v2572 = vunpack.c.h.b16 %v1630
        %v2573 = vunpack.c.l.b16 %v1631
        %v2574 = vunpack.c.l.b16 %v1632
        %v2575 = vunpack.c.h.b16 %v1632
        %v2576 = vunpack.c.l.b16 %v1633
        %v2577 = vunpack.c.h.b16 %v1633
        %v2578 = vunpack.c.l.b16 %v1634
        %v2579 = vunpack.c.h.b16 %v1634
        %v2580 = vunpack.c.l.b16 %v1635
        %v2581 = vunpack.c.l.b16 %v1636
        %v2582 = vunpack.c.h.b16 %v1636
        %v2583 = vunpack.c.l.b16 %v1637
        %v2584 = vunpack.c.h.b16 %v1637
        %v2585 = vunpack.c.l.b16 %v1638
        %v2586 = vunpack.c.h.b16 %v1638
        %v2587 = vunpack.c.l.b16 %v1639
        %v2588 = vunpack.c.l.b16 %v1640
        %v2589 = vunpack.c.h.b16 %v1640
        %v2590 = vunpack.c.l.b16 %v1641
        %v2591 = vunpack.c.h.b16 %v1641
        %v2592 = vunpack.c.l.b16 %v1642
        %v2593 = vunpack.c.h.b16 %v1642
        %v2594 = vunpack.c.l.b16 %v1643
        %v2595 = vunpack.c.l.b16 %v1644
        %v2596 = vunpack.c.h.b16 %v1644
        %v2597 = vunpack.c.l.b16 %v1645
        %v2598 = vunpack.c.h.b16 %v1645
        %v2599 = vunpack.c.l.b16 %v1646
        %v2600 = vunpack.c.h.b16 %v1646
        %v2601 = vunpack.c.l.b16 %v1647
        %v2602 = vunpack.c.l.b16 %v1648
        %v2603 = vunpack.c.h.b16 %v1648
        %v2604 = vunpack.c.l.b16 %v1649
        %v2605 = vunpack.c.h.b16 %v1649
        %v2606 = vunpack.c.l.b16 %v1650
        %v2607 = vunpack.c.h.b16 %v1650
        %v2608 = vunpack.c.l.b16 %v1651
        %v2609 = vunpack.c.l.b16 %v1652
        %v2610 = vunpack.c.h.b16 %v1652
        %v2611 = vunpack.c.l.b16 %v1653
        %v2612 = vunpack.c.h.b16 %v1653
        %v2613 = vunpack.c.l.b16 %v1654
        %v2614 = vunpack.c.h.b16 %v1654
        %v2615 = vunpack.c.l.b16 %v1655
        %v2616 = vunpack.c.l.b16 %v1656
        %v2617 = vunpack.c.h.b16 %v1656
        %v2618 = vunpack.c.l.b16 %v1657
        %v2619 = vunpack.c.h.b16 %v1657
        %v2620 = vunpack.c.l.b16 %v1658
        %v2621 = vunpack.c.h.b16 %v1658
        %v2622 = vunpack.c.l.b16 %v1659
        %v2623 = vunpack.c.l.b16 %v1660
        %v2624 = vunpack.c.h.b16 %v1660
        %v2625 = vunpack.c.l.b16 %v1661
        %v2626 = vunpack.c.h.b16 %v1661
        %v2627 = vunpack.c.l.b16 %v1662
        %v2628 = vunpack.c.h.b16 %v1662
        %v2629 = vunpack.c.l.b16 %v1663
        %v2630 = vunpack.c.l.b16 %v1664
        %v2631 = vunpack.c.h.b16 %v1664
        %v2632 = vunpack.c.l.b16 %v1665
        %v2633 = vunpack.c.h.b16 %v1665
        %v2634 = vunpack.c.l.b16 %v1666
        %v2635 = vunpack.c.h.b16 %v1666
        %v2636 = vunpack.c.l.b16 %v1667
        %v2637 = vunpack.c.l.b16 %v1668
        %v2638 = vunpack.c.h.b16 %v1668
        %v2639 = vunpack.c.l.b16 %v1669
        %v2640 = vunpack.c.h.b16 %v1669
        %v2641 = vunpack.c.l.b16 %v1670
        %v2642 = vunpack.c.h.b16 %v1670
        %v2643 = vunpack.c.l.b16 %v1671
        %v2644 = vunpack.c.l.b16 %v1672
        %v2645 = vunpack.c.h.b16 %v1672
        %v2646 = vunpack.c.l.b16 %v1673
        %v2647 = vunpack.c.h.b16 %v1673
        %v2648 = vunpack.c.l.b16 %v1674
        %v2649 = vunpack.c.h.b16 %v1674
        %v2650 = vunpack.c.l.b16 %v1675
        %v2651 = vunpack.c.l.b16 %v1676
        %v2652 = vunpack.c.h.b16 %v1676
        %v2653 = vunpack.c.l.b16 %v1677
        %v2654 = vunpack.c.h.b16 %v1677
        %v2655 = vunpack.c.l.b16 %v1678
        %v2656 = vunpack.c.h.b16 %v1678
        %v2657 = vunpack.c.l.b16 %v1679
        %v2658 = vunpack.c.l.b16 %v1680
        %v2659 = vunpack.c.h.b16 %v1680
        %v2660 = vunpack.c.l.b16 %v1681
        %v2661 = vunpack.c.h.b16 %v1681
        %v2662 = vunpack.c.l.b16 %v1682
        %v2663 = vunpack.c.h.b16 %v1682
        %v2664 = vunpack.c.l.b16 %v1683
        %v2665 = vunpack.c.l.b16 %v1684
        %v2666 = vunpack.c.h.b16 %v1684
        %v2667 = vunpack.c.l.b16 %v1685
        %v2668 = vunpack.c.h.b16 %v1685
        %v2669 = vunpack.c.l.b16 %v1686
        %v2670 = vunpack.c.h.b16 %v1686
        %v2671 = vunpack.c.l.b16 %v1687
        %v2672 = vunpack.c.l.b16 %v1688
        %v2673 = vunpack.c.h.b16 %v1688
        %v2674 = vunpack.c.l.b16 %v1689
        %v2675 = vunpack.c.h.b16 %v1689
        %v2676 = vunpack.c.l.b16 %v1690
        %v2677 = vunpack.c.h.b16 %v1690
        %v2678 = vunpack.c.l.b16 %v1691
        %v2679 = vunpack.c.l.b16 %v1692
        %v2680 = vunpack.c.h.b16 %v1692
        %v2681 = vunpack.c.l.b16 %v1693
        %v2682 = vunpack.c.h.b16 %v1693
        %v2683 = vunpack.c.l.b16 %v1694
        %v2684 = vunpack.c.h.b16 %v1694
        %v2685 = vunpack.c.l.b16 %v1695
        %v2686 = vunpack.c.l.b16 %v1696
        %v2687 = vunpack.c.h.b16 %v1696
        %v2688 = vunpack.c.l.b16 %v1697
        %v2689 = vunpack.c.h.b16 %v1697
        %v2690 = vunpack.c.l.b16 %v1698
        %v2691 = vunpack.c.h.b16 %v1698
        %v2692 = vunpack.c.l.b16 %v1699
        %v2693 = vunpack.c.l.b16 %v1700
        %v2694 = vunpack.c.h.b16 %v1700
        %v2695 = vunpack.c.l.b16 %v1701
        %v2696 = vunpack.c.h.b16 %v1701
        %v2697 = vunpack.c.l.b16 %v1702
        %v2698 = vunpack.c.h.b16 %v1702
        %v2699 = vunpack.c.l.b16 %v1703
        %v2700 = vunpack.c.l.b16 %v1704
        %v2701 = vunpack.c.h.b16 %v1704
        %v2702 = vunpack.c.l.b16 %v1705
        %v2703 = vunpack.c.h.b16 %v1705
        %v2704 = vunpack.c.l.b16 %v1706
        %v2705 = vunpack.c.h.b16 %v1706
        %v2706 = vunpack.c.l.b16 %v1707
        %v2707 = vunpack.c.l.b16 %v1708
        %v2708 = vunpack.c.h.b16 %v1708
        %v2709 = vunpack.c.l.b16 %v1709
        %v2710 = vunpack.c.h.b16 %v1709
        %v2711 = vunpack.c.l.b16 %v1710
        %v2712 = vunpack.c.h.b16 %v1710
        %v2713 = vunpack.c.l.b16 %v1711
        %v2714 = vunpack.c.l.b16 %v1712
        %v2715 = vunpack.c.h.b16 %v1712
        %v2716 = vunpack.c.l.b16 %v1713
        %v2717 = vunpack.c.h.b16 %v1713
        %v2718 = vunpack.c.l.b16 %v1714
        %v2719 = vunpack.c.h.b16 %v1714
        %v2720 = vunpack.c.l.b16 %v1715
        %v2721 = vunpack.c.l.b16 %v1716
        %v2722 = vunpack.c.h.b16 %v1716
        %v2723 = vunpack.c.l.b16 %v1717
        %v2724 = vunpack.c.h.b16 %v1717
        %v2725 = vunpack.c.l.b16 %v1718
        %v2726 = vunpack.c.h.b16 %v1718
        %v2727 = vunpack.c.l.b16 %v1719
        %v2728 = vunpack.c.l.b16 %v1720
        %v2729 = vunpack.c.h.b16 %v1720
        %v2730 = vunpack.c.l.b16 %v1721
        %v2731 = vunpack.c.h.b16 %v1721
        %v2732 = vunpack.c.l.b16 %v1722
        %v2733 = vunpack.c.h.b16 %v1722
        %v2734 = vunpack.c.l.b16 %v1723
        %v2735 = vunpack.c.l.b16 %v1724
        %v2736 = vunpack.c.h.b16 %v1724
        %v2737 = vunpack.c.l.b16 %v1725
        %v2738 = vunpack.c.h.b16 %v1725
        %v2739 = vunpack.c.l.b16 %v1726
        %v2740 = vunpack.c.h.b16 %v1726
        %v2741 = vunpack.c.l.b16 %v1727
        %v2742 = vunpack.c.l.b16 %v1728
        %v2743 = vunpack.c.h.b16 %v1728
        %v2744 = vunpack.c.l.b16 %v1729
        %v2745 = vunpack.c.h.b16 %v1729
        %v2746 = vunpack.c.l.b16 %v1730
        %v2747 = vunpack.c.h.b16 %v1730
        %v2748 = vunpack.c.l.b16 %v1731
        %v2749 = vunpack.c.l.b16 %v1732
        %v2750 = vunpack.c.h.b16 %v1732
        %v2751 = vunpack.c.l.b16 %v1733
        %v2752 = vunpack.c.h.b16 %v1733
        %v2753 = vunpack.c.l.b16 %v1734
        %v2754 = vunpack.c.h.b16 %v1734
        %v2755 = vunpack.c.l.b16 %v1735
        %v2756 = vunpack.c.l.b16 %v1736
        %v2757 = vunpack.c.h.b16 %v1736
        %v2758 = vunpack.c.l.b16 %v1737
        %v2759 = vunpack.c.h.b16 %v1737
        %v2760 = vunpack.c.l.b16 %v1738
        %v2761 = vunpack.c.h.b16 %v1738
        %v2762 = vunpack.c.l.b16 %v1739
        %v2763 = vunpack.c.l.b16 %v1740
        %v2764 = vunpack.c.h.b16 %v1740
        %v2765 = vunpack.c.l.b16 %v1741
        %v2766 = vunpack.c.h.b16 %v1741
        %v2767 = vunpack.c.l.b16 %v1742
        %v2768 = vunpack.c.h.b16 %v1742
        %v2769 = vunpack.c.l.b16 %v1743
        %v2770 = vunpack.c.l.b16 %v1744
        %v2771 = vunpack.c.h.b16 %v1744
        %v2772 = vunpack.c.l.b16 %v1745
        %v2773 = vunpack.c.h.b16 %v1745
        %v2774 = vunpack.c.l.b16 %v1746
        %v2775 = vunpack.c.h.b16 %v1746
        %v2776 = vunpack.c.l.b16 %v1747
        %v2777 = vunpack.c.l.b16 %v1748
        %v2778 = vunpack.c.h.b16 %v1748
        %v2779 = vunpack.c.l.b16 %v1749
        %v2780 = vunpack.c.h.b16 %v1749
        %v2781 = vunpack.c.l.b16 %v1750
        %v2782 = vunpack.c.h.b16 %v1750
        %v2783 = vunpack.c.l.b16 %v1751
        %v2784 = vunpack.c.l.b16 %v1752
        %v2785 = vunpack.c.h.b16 %v1752
        %v2786 = vunpack.c.l.b16 %v1753
        %v2787 = vunpack.c.h.b16 %v1753
        %v2788 = vunpack.c.l.b16 %v1754
        %v2789 = vunpack.c.h.b16 %v1754
        %v2790 = vunpack.c.l.b16 %v1755
        %v2791 = vunpack.c.l.b16 %v1756
        %v2792 = vunpack.c.h.b16 %v1756
        %v2793 = vunpack.c.l.b16 %v1757
        %v2794 = vunpack.c.h.b16 %v1757
        %v2795 = vunpack.c.l.b16 %v1758
        %v2796 = vunpack.c.h.b16 %v1758
        %v2797 = vunpack.c.l.b16 %v1759
        %v2798 = vunpack.c.l.b16 %v1760
        %v2799 = vunpack.c.h.b16 %v1760
        %v2800 = vunpack.c.l.b16 %v1761
        %v2801 = vunpack.c.h.b16 %v1761
        %v2802 = vunpack.c.l.b16 %v1762
        %v2803 = vunpack.c.h.b16 %v1762
        %v2804 = vunpack.c.l.b16 %v1763
        %v2805 = vunpack.c.l.b16 %v1764
        %v2806 = vunpack.c.h.b16 %v1764
        %v2807 = vunpack.c.l.b16 %v1765
        %v2808 = vunpack.c.h.b16 %v1765
        %v2809 = vunpack.c.l.b16 %v1766
        %v2810 = vunpack.c.h.b16 %v1766
        %v2811 = vunpack.c.l.b16 %v1767
        %v2812 = vunpack.c.l.b16 %v1768
        %v2813 = vunpack.c.h.b16 %v1768
        %v2814 = vunpack.c.l.b16 %v1769
        %v2815 = vunpack.c.h.b16 %v1769
        %v2816 = vunpack.c.l.b16 %v1770
        %v2817 = vunpack.c.h.b16 %v1770
        %v2818 = vunpack.c.l.b16 %v1771
        %v2819 = vunpack.c.l.b16 %v1772
        %v2820 = vunpack.c.h.b16 %v1772
        %v2821 = vunpack.c.l.b16 %v1773
        %v2822 = vunpack.c.h.b16 %v1773
        %v2823 = vunpack.c.l.b16 %v1774
        %v2824 = vunpack.c.h.b16 %v1774
        %v2825 = vunpack.c.l.b16 %v1775
        %v2826 = vunpack.c.l.b16 %v1776
        %v2827 = vunpack.c.h.b16 %v1776
        %v2828 = vunpack.c.l.b16 %v1777
        %v2829 = vunpack.c.h.b16 %v1777
        %v2830 = vunpack.c.l.b16 %v1778
        %v2831 = vunpack.c.h.b16 %v1778
        %v2832 = vunpack.c.l.b16 %v1779
        %v2833 = vunpack.c.l.b16 %v1780
        %v2834 = vunpack.c.h.b16 %v1780
        %v2835 = vunpack.c.l.b16 %v1781
        %v2836 = vunpack.c.h.b16 %v1781
        %v2837 = vunpack.c.l.b16 %v1782
        %v2838 = vunpack.c.h.b16 %v1782
        %v2839 = vunpack.c.l.b16 %v1783
        %v2840 = vunpack.c.l.b16 %v1784
        %v2841 = vunpack.c.h.b16 %v1784
        %v2842 = vunpack.c.l.b16 %v1785
        %v2843 = vunpack.c.h.b16 %v1785
        %v2844 = vunpack.c.l.b16 %v1786
        %v2845 = vunpack.c.h.b16 %v1786
        %v2846 = vunpack.c.l.b16 %v1787
        %v2847 = vunpack.c.l.b16 %v1788
        %v2848 = vunpack.c.h.b16 %v1788
        %v2849 = vunpack.c.l.b16 %v1789
        %v2850 = vunpack.c.h.b16 %v1789
        %v2851 = vunpack.c.l.b16 %v1790
        %v2852 = vunpack.c.h.b16 %v1790
        %v2853 = vunpack.c.l.b16 %v1791
        %v2854 = vunpack.c.l.b16 %v1792
        %v2855 = vunpack.c.h.b16 %v1792
        %v2856 = vunpack.c.l.b16 %v1793
        %v2857 = vunpack.c.h.b16 %v1793
        %v2858 = vunpack.c.l.b16 %v1794
        %v2859 = vunpack.c.h.b16 %v1794
        %v2860 = vunpack.c.l.b16 %v1795
        %v2861 = vunpack.c.l.b16 %v1796
        %v2862 = vunpack.c.h.b16 %v1796
        %v2863 = vunpack.c.l.b16 %v1797
        %v2864 = vunpack.c.h.b16 %v1797
        %v2865 = vunpack.c.l.b16 %v1798
        %v2866 = vunpack.c.h.b16 %v1798
        %v2867 = vunpack.c.l.b16 %v1799
        %v2868 = vunpack.c.l.b16 %v1800
        %v2869 = vunpack.c.h.b16 %v1800
        %v2870 = vunpack.c.l.b16 %v1801
        %v2871 = vunpack.c.h.b16 %v1801
        %v2872 = vunpack.c.l.b16 %v1802
        %v2873 = vunpack.c.h.b16 %v1802
        %v2874 = vunpack.c.l.b16 %v1803
        %v2875 = vunpack.c.l.b16 %v1804
        %v2876 = vunpack.c.h.b16 %v1804
        %v2877 = vunpack.c.l.b16 %v1805
        %v2878 = vunpack.c.h.b16 %v1805
        %v2879 = vunpack.c.l.b16 %v1806
        %v2880 = vunpack.c.h.b16 %v1806
        %v2881 = vunpack.c.l.b16 %v1807
        %v2882 = vunpack.c.l.b16 %v1808
        %v2883 = vunpack.c.h.b16 %v1808
        %v2884 = vunpack.c.l.b16 %v1809
        %v2885 = vunpack.c.h.b16 %v1809
        %v2886 = vunpack.c.l.b16 %v1810
        %v2887 = vunpack.c.h.b16 %v1810
        %v2888 = vunpack.c.l.b16 %v1811
        %v2889 = vunpack.c.l.b16 %v1812
        %v2890 = vunpack.c.h.b16 %v1812
        %v2891 = vunpack.c.l.b16 %v1813
        %v2892 = vunpack.c.h.b16 %v1813
        %v2893 = vunpack.c.l.b16 %v1814
        %v2894 = vunpack.c.h.b16 %v1814
        %v2895 = vunpack.c.l.b16 %v1815
        %v2896 = vunpack.c.l.b16 %v1816
        %v2897 = vunpack.c.h.b16 %v1816
        %v2898 = vunpack.c.l.b16 %v1817
        %v2899 = vunpack.c.h.b16 %v1817
        %v2900 = vunpack.c.l.b16 %v1818
        %v2901 = vunpack.c.h.b16 %v1818
        %v2902 = vunpack.c.l.b16 %v1819
        %v2903 = vunpack.c.l.b16 %v1820
        %v2904 = vunpack.c.h.b16 %v1820
        %v2905 = vunpack.c.l.b16 %v1821
        %v2906 = vunpack.c.h.b16 %v1821
        %v2907 = vunpack.c.l.b16 %v1822
        %v2908 = vunpack.c.h.b16 %v1822
        %v2909 = vunpack.c.l.b16 %v1823
        %v2910 = vunpack.c.l.b16 %v1824
        %v2911 = vunpack.c.h.b16 %v1824
        %v2912 = vunpack.c.l.b16 %v1825
        %v2913 = vunpack.c.h.b16 %v1825
        %v2914 = vunpack.c.l.b16 %v1826
        %v2915 = vunpack.c.h.b16 %v1826
        %v2916 = vunpack.c.l.b16 %v1827
        %v2917 = vunpack.c.l.b16 %v1828
        %v2918 = vunpack.c.h.b16 %v1828
        %v2919 = vunpack.c.l.b16 %v1829
        %v2920 = vunpack.c.h.b16 %v1829
        %v2921 = vunpack.c.l.b16 %v1830
        %v2922 = vunpack.c.h.b16 %v1830
        %v2923 = vunpack.c.l.b16 %v1831
        %v2924 = vunpack.c.l.b16 %v1832
        %v2925 = vunpack.c.h.b16 %v1832
        %v2926 = vunpack.c.l.b16 %v1833
        %v2927 = vunpack.c.h.b16 %v1833
        %v2928 = vunpack.c.l.b16 %v1834
        %v2929 = vunpack.c.h.b16 %v1834
        %v2930 = vunpack.c.l.b16 %v1835
        %v2931 = vunpack.c.l.b16 %v1836
        %v2932 = vunpack.c.h.b16 %v1836
        %v2933 = vunpack.c.l.b16 %v1837
        %v2934 = vunpack.c.h.b16 %v1837
        %v2935 = vunpack.c.l.b16 %v1838
        %v2936 = vunpack.c.h.b16 %v1838
        %v2937 = vunpack.c.l.b16 %v1839
        %v2938 = vunpack.c.l.b16 %v1840
        %v2939 = vunpack.c.h.b16 %v1840
        %v2940 = vunpack.c.l.b16 %v1841
        %v2941 = vunpack.c.h.b16 %v1841
        %v2942 = vunpack.c.l.b16 %v1842
        %v2943 = vunpack.c.h.b16 %v1842
        %v2944 = vunpack.c.l.b16 %v1843
        %v2945 = vunpack.c.l.b16 %v1844
        %v2946 = vunpack.c.h.b16 %v1844
        %v2947 = vunpack.c.l.b16 %v1845
        %v2948 = vunpack.c.h.b16 %v1845
        %v2949 = vunpack.c.l.b16 %v1846
        %v2950 = vunpack.c.h.b16 %v1846
        %v2951 = vunpack.c.l.b16 %v1847
        %v2952 = vunpack.c.l.b16 %v1848
        %v2953 = vunpack.c.h.b16 %v1848
        %v2954 = vunpack.c.l.b16 %v1849
        %v2955 = vunpack.c.h.b16 %v1849
        %v2956 = vunpack.c.l.b16 %v1850
        %v2957 = vunpack.c.h.b16 %v1850
        %v2958 = vunpack.c.l.b16 %v1851
        %v2959 = vunpack.c.l.b16 %v1852
        %v2960 = vunpack.c.h.b16 %v1852
        %v2961 = vunpack.c.l.b16 %v1853
        %v2962 = vunpack.c.h.b16 %v1853
        %v2963 = vunpack.c.l.b16 %v1854
        %v2964 = vunpack.c.h.b16 %v1854
        %v2965 = vunpack.c.l.b16 %v1855
        %v2966 = vunpack.c.l.b16 %v1856
        %v2967 = vunpack.c.h.b16 %v1856
        %v2968 = vunpack.c.l.b16 %v1857
        %v2969 = vunpack.c.h.b16 %v1857
        %v2970 = vunpack.c.l.b16 %v1858
        %v2971 = vunpack.c.h.b16 %v1858
        %v2972 = vunpack.c.l.b16 %v1859
        %v2973 = vunpack.c.l.b16 %v1860
        %v2974 = vunpack.c.h.b16 %v1860
        %v2975 = vunpack.c.l.b16 %v1861
        %v2976 = vunpack.c.h.b16 %v1861
        %v2977 = vunpack.c.l.b16 %v1862
        %v2978 = vunpack.c.h.b16 %v1862
        %v2979 = vunpack.c.l.b16 %v1863
        %v2980 = vunpack.c.l.b16 %v1864
        %v2981 = vunpack.c.h.b16 %v1864
        %v2982 = vunpack.c.l.b16 %v1865
        %v2983 = vunpack.c.h.b16 %v1865
        %v2984 = vunpack.c.l.b16 %v1866
        %v2985 = vunpack.c.h.b16 %v1866
        %v2986 = vunpack.c.l.b16 %v1867
        %v2987 = vunpack.c.l.b16 %v1868
        %v2988 = vunpack.c.h.b16 %v1868
        %v2989 = vunpack.c.l.b16 %v1869
        %v2990 = vunpack.c.h.b16 %v1869
        %v2991 = vunpack.c.l.b16 %v1870
        %v2992 = vunpack.c.h.b16 %v1870
        %v2993 = vunpack.c.l.b16 %v1871
        %v2994 = vunpack.c.l.b16 %v1872
        %v2995 = vunpack.c.h.b16 %v1872
        %v2996 = vunpack.c.l.b16 %v1873
        %v2997 = vunpack.c.h.b16 %v1873
        %v2998 = vunpack.c.l.b16 %v1874
        %v2999 = vunpack.c.h.b16 %v1874
        %v3000 = vunpack.c.l.b16 %v1875
        %v3001 = vunpack.c.l.b16 %v1876
        %v3002 = vunpack.c.h.b16 %v1876
        %v3003 = vunpack.c.l.b16 %v1877
        %v3004 = vunpack.c.h.b16 %v1877
        %v3005 = vunpack.c.l.b16 %v1878
        %v3006 = vunpack.c.h.b16 %v1878
        %v3007 = vunpack.c.l.b16 %v1879
        %v3008 = vunpack.c.l.b16 %v1880
        %v3009 = vunpack.c.h.b16 %v1880
        %v3010 = vunpack.c.l.b16 %v1881
        %v3011 = vunpack.c.h.b16 %v1881
        %v3012 = vunpack.c.l.b16 %v1882
        %v3013 = vunpack.c.h.b16 %v1882
        %v3014 = vunpack.c.l.b16 %v1883
        %v3015 = vunpack.c.l.b16 %v1884
        %v3016 = vunpack.c.h.b16 %v1884
        %v3017 = vunpack.c.l.b16 %v1885
        %v3018 = vunpack.c.h.b16 %v1885
        %v3019 = vunpack.c.l.b16 %v1886
        %v3020 = vunpack.c.h.b16 %v1886
        %v3021 = vunpack.c.l.b16 %v1887
        %v3022 = vunpack.c.l.b16 %v1888
        %v3023 = vunpack.c.h.b16 %v1888
        %v3024 = vunpack.c.l.b16 %v1889
        %v3025 = vunpack.c.h.b16 %v1889
        %v3026 = vunpack.c.l.b16 %v1890
        %v3027 = vunpack.c.h.b16 %v1890
        %v3028 = vunpack.c.l.b16 %v1891
        %v3029 = vunpack.c.l.b16 %v1892
        %v3030 = vunpack.c.h.b16 %v1892
        %v3031 = vunpack.c.l.b16 %v1893
        %v3032 = vunpack.c.h.b16 %v1893
        %v3033 = vunpack.c.l.b16 %v1894
        %v3034 = vunpack.c.h.b16 %v1894
        %v3035 = vunpack.c.l.b16 %v1895
        %v3036 = vunpack.c.l.b16 %v1896
        %v3037 = vunpack.c.h.b16 %v1896
        %v3038 = vunpack.c.l.b16 %v1897
        %v3039 = vunpack.c.h.b16 %v1897
        %v3040 = vunpack.c.l.b16 %v1898
        %v3041 = vunpack.c.h.b16 %v1898
        %v3042 = vunpack.c.l.b16 %v1899
        %v3043 = vunpack.c.l.b16 %v1900
        %v3044 = vunpack.c.h.b16 %v1900
        %v3045 = vunpack.c.l.b16 %v1901
        %v3046 = vunpack.c.h.b16 %v1901
        %v3047 = vunpack.c.l.b16 %v1902
        %v3048 = vunpack.c.h.b16 %v1902
        %v3049 = vunpack.c.l.b16 %v1903
        %v3050 = vunpack.c.l.b16 %v1904
        %v3051 = vunpack.c.h.b16 %v1904
        %v3052 = vunpack.c.l.b16 %v1905
        %v3053 = vunpack.c.h.b16 %v1905
        %v3054 = vunpack.c.l.b16 %v1906
        %v3055 = vunpack.c.h.b16 %v1906
        %v3056 = vunpack.c.l.b16 %v1907
        %v3057 = vunpack.c.l.b16 %v1908
        %v3058 = vunpack.c.h.b16 %v1908
        %v3059 = vunpack.c.l.b16 %v1909
        %v3060 = vunpack.c.h.b16 %v1909
        %v3061 = vunpack.c.l.b16 %v1910
        %v3062 = vunpack.c.h.b16 %v1910
        %v3063 = vunpack.c.l.b16 %v1911
        %v3064 = vunpack.c.l.b16 %v1912
        %v3065 = vunpack.c.h.b16 %v1912
        %v3066 = vunpack.c.l.b16 %v1913
        %v3067 = vunpack.c.h.b16 %v1913
        %v3068 = vunpack.c.l.b16 %v1914
        %v3069 = vunpack.c.h.b16 %v1914
        %v3070 = vunpack.c.l.b16 %v1915
        %v3071 = vunpack.c.l.b16 %v1916
        %v3072 = vunpack.c.h.b16 %v1916
        %v3073 = vunpack.c.l.b16 %v1917
        %v3074 = vunpack.c.h.b16 %v1917
        %v3075 = vunpack.c.l.b16 %v1918
        %v3076 = vunpack.c.h.b16 %v1918
        %v3077 = vunpack.c.l.b16 %v1919
        %v3078 = vunpack.c.l.b16 %v1920
        %v3079 = vunpack.c.h.b16 %v1920
        %v3080 = vunpack.c.l.b16 %v1921
        %v3081 = vunpack.c.h.b16 %v1921
        %v3082 = vunpack.c.l.b16 %v1922
        %v3083 = vunpack.c.h.b16 %v1922
        %v3084 = vunpack.c.l.b16 %v1923
        %v3085 = vunpack.c.l.b16 %v1924
        %v3086 = vunpack.c.h.b16 %v1924
        %v3087 = vunpack.c.l.b16 %v1925
        %v3088 = vunpack.c.h.b16 %v1925
        %v3089 = vunpack.c.l.b16 %v1926
        %v3090 = vunpack.c.h.b16 %v1926
        %v3091 = vunpack.c.l.b16 %v1927
        %v3092 = vunpack.c.l.b16 %v1928
        %v3093 = vunpack.c.h.b16 %v1928
        %v3094 = vunpack.c.l.b16 %v1929
        %v3095 = vunpack.c.h.b16 %v1929
        %v3096 = vunpack.c.l.b16 %v1930
        %v3097 = vunpack.c.h.b16 %v1930
        %v3098 = vunpack.c.l.b16 %v1931
        %v3099 = vunpack.c.l.b16 %v1932
        %v3100 = vunpack.c.h.b16 %v1932
        %v3101 = vunpack.c.l.b16 %v1933
        %v3102 = vunpack.c.h.b16 %v1933
        %v3103 = vunpack.c.l.b16 %v1934
        %v3104 = vunpack.c.h.b16 %v1934
        %v3105 = vunpack.c.l.b16 %v1935
        %v3106 = vunpack.c.l.b16 %v1936
        %v3107 = vunpack.c.h.b16 %v1936
        %v3108 = vunpack.c.l.b16 %v1937
        %v3109 = vunpack.c.h.b16 %v1937
        %v3110 = vunpack.c.l.b16 %v1938
        %v3111 = vunpack.c.h.b16 %v1938
        %v3112 = vunpack.c.l.b16 %v1939
        %v3113 = vunpack.c.l.b16 %v1940
        %v3114 = vunpack.c.h.b16 %v1940
        %v3115 = vunpack.c.l.b16 %v1941
        %v3116 = vunpack.c.h.b16 %v1941
        %v3117 = vunpack.c.l.b16 %v1942
        %v3118 = vunpack.c.h.b16 %v1942
        %v3119 = vunpack.c.l.b16 %v1943
        %v3120 = vunpack.c.l.b16 %v1944
        %v3121 = vunpack.c.h.b16 %v1944
        %v3122 = vunpack.c.l.b16 %v1945
        %v3123 = vunpack.c.h.b16 %v1945
        %v3124 = vunpack.c.l.b16 %v1946
        %v3125 = vunpack.c.h.b16 %v1946
        %v3126 = vunpack.c.l.b16 %v1947
        %v3127 = vunpack.c.l.b16 %v1948
        %v3128 = vunpack.c.h.b16 %v1948
        %v3129 = vunpack.c.l.b16 %v1949
        %v3130 = vunpack.c.h.b16 %v1949
        %v3131 = vunpack.c.l.b16 %v1950
        %v3132 = vunpack.c.h.b16 %v1950
        %v3133 = vunpack.c.l.b16 %v1951
        %v3134 = vunpack.c.l.b16 %v1952
        %v3135 = vunpack.c.h.b16 %v1952
        %v3136 = vunpack.c.l.b16 %v1953
        %v3137 = vunpack.c.h.b16 %v1953
        %v3138 = vunpack.c.l.b16 %v1954
        %v3139 = vunpack.c.h.b16 %v1954
        %v3140 = vunpack.c.l.b16 %v1955
        %v3141 = vunpack.c.l.b16 %v1956
        %v3142 = vunpack.c.h.b16 %v1956
        %v3143 = vunpack.c.l.b16 %v1957
        %v3144 = vunpack.c.h.b16 %v1957
        %v3145 = vunpack.c.l.b16 %v1958
        %v3146 = vunpack.c.h.b16 %v1958
        %v3147 = vunpack.c.l.b16 %v1959
        %v3148 = vunpack.c.l.b16 %v1960
        %v3149 = vunpack.c.h.b16 %v1960
        %v3150 = vunpack.c.l.b16 %v1961
        %v3151 = vunpack.c.h.b16 %v1961
        %v3152 = vunpack.c.l.b16 %v1962
        %v3153 = vunpack.c.h.b16 %v1962
        %v3154 = vunpack.c.l.b16 %v1963
        %v3155 = vunpack.c.l.b16 %v1964
        %v3156 = vunpack.c.h.b16 %v1964
        %v3157 = vunpack.c.l.b16 %v1965
        %v3158 = vunpack.c.h.b16 %v1965
        %v3159 = vunpack.c.l.b16 %v1966
        %v3160 = vunpack.c.h.b16 %v1966
        %v3161 = vunpack.c.l.b16 %v1967
        %v3162 = vunpack.c.l.b16 %v1968
        %v3163 = vunpack.c.h.b16 %v1968
        %v3164 = vunpack.c.l.b16 %v1969
        %v3165 = vunpack.c.h.b16 %v1969
        %v3166 = vunpack.c.l.b16 %v1970
        %v3167 = vunpack.c.h.b16 %v1970
        %v3168 = vunpack.c.l.b16 %v1971
        %v3169 = vunpack.c.l.b16 %v1972
        %v3170 = vunpack.c.h.b16 %v1972
        %v3171 = vunpack.c.l.b16 %v1973
        %v3172 = vunpack.c.h.b16 %v1973
        %v3173 = vunpack.c.l.b16 %v1974
        %v3174 = vunpack.c.h.b16 %v1974
        %v3175 = vunpack.c.l.b16 %v1975
        %v3176 = vunpack.c.l.b16 %v1976
        %v3177 = vunpack.c.h.b16 %v1976
        %v3178 = vunpack.c.l.b16 %v1977
        %v3179 = vunpack.c.h.b16 %v1977
        %v3180 = vunpack.c.l.b16 %v1978
        %v3181 = vunpack.c.h.b16 %v1978
        %v3182 = vunpack.c.l.b16 %v1979
        %v3183 = vunpack.c.l.b16 %v1980
        %v3184 = vunpack.c.h.b16 %v1980
        %v3185 = vunpack.c.l.b16 %v1981
        %v3186 = vunpack.c.h.b16 %v1981
        %v3187 = vunpack.c.l.b16 %v1982
        %v3188 = vunpack.c.h.b16 %v1982
        %v3189 = vunpack.c.l.b16 %v1983
        %v3190 = vunpack.c.l.b16 %v1984
        %v3191 = vunpack.c.h.b16 %v1984
        %v3192 = vunpack.c.l.b16 %v1985
        %v3193 = vunpack.c.h.b16 %v1985
        %v3194 = vunpack.c.l.b16 %v1986
        %v3195 = vunpack.c.h.b16 %v1986
        %v3196 = vunpack.c.l.b16 %v1987
        %v3197 = vunpack.c.l.b16 %v1988
        %v3198 = vunpack.c.h.b16 %v1988
        %v3199 = vunpack.c.l.b16 %v1989
        %v3200 = vunpack.c.h.b16 %v1989
        %v3201 = vunpack.c.l.b16 %v1990
        %v3202 = vunpack.c.h.b16 %v1990
        %v3203 = vunpack.c.l.b16 %v1991
        %v3204 = vunpack.c.l.b16 %v1992
        %v3205 = vunpack.c.h.b16 %v1992
        %v3206 = vunpack.c.l.b16 %v1993
        %v3207 = vunpack.c.h.b16 %v1993
        %v3208 = vunpack.c.l.b16 %v1994
        %v3209 = vunpack.c.h.b16 %v1994
        %v3210 = vunpack.c.l.b16 %v1995
        %v3211 = vunpack.c.l.b16 %v1996
        %v3212 = vunpack.c.h.b16 %v1996
        %v3213 = vunpack.c.l.b16 %v1997
        %v3214 = vunpack.c.h.b16 %v1997
        %v3215 = vunpack.c.l.b16 %v1998
        %v3216 = vunpack.c.h.b16 %v1998
        %v3217 = vunpack.c.l.b16 %v1999
        %v3218 = vunpack.c.l.b16 %v2000
        %v3219 = vunpack.c.h.b16 %v2000
        %v3220 = vunpack.c.l.b16 %v2001
        %v3221 = vunpack.c.h.b16 %v2001
        %v3222 = vunpack.c.l.b16 %v2002
        %v3223 = vunpack.c.h.b16 %v2002
        %v3224 = vunpack.c.l.b16 %v2003
        %v3225 = vunpack.c.l.b16 %v2004
        %v3226 = vunpack.c.h.b16 %v2004
        %v3227 = vunpack.c.l.b16 %v2005
        %v3228 = vunpack.c.h.b16 %v2005
        %v3229 = vunpack.c.l.b16 %v2006
        %v3230 = vunpack.c.h.b16 %v2006
        %v3231 = vunpack.c.l.b16 %v2007
        %v3232 = vunpack.c.l.b16 %v2008
        %v3233 = vunpack.c.h.b16 %v2008
        %v3234 = vunpack.c.l.b16 %v2009
        %v3235 = vunpack.c.h.b16 %v2009
        %v3236 = vunpack.c.l.b16 %v2010
        %v3237 = vunpack.c.h.b16 %v2010
        %v3238 = vunpack.c.l.b16 %v2011
        %v3239 = vunpack.c.l.b16 %v2012
        %v3240 = vunpack.c.h.b16 %v2012
        %v3241 = vunpack.c.l.b16 %v2013
        %v3242 = vunpack.c.h.b16 %v2013
        %v3243 = vunpack.c.l.b16 %v2014
        %v3244 = vunpack.c.h.b16 %v2014
        %v3245 = vunpack.c.l.b16 %v2015
        %v3246 = vunpack.c.l.b16 %v2016
        %v3247 = vunpack.c.h.b16 %v2016
        %v3248 = vunpack.c.l.b16 %v2017
        %v3249 = vunpack.c.h.b16 %v2017
        %v3250 = vunpack.c.l.b16 %v2018
        %v3251 = vunpack.c.h.b16 %v2018
        %v3252 = vunpack.c.l.b16 %v2019
        %v3253 = vunpack.c.l.b16 %v2020
        %v3254 = vunpack.c.h.b16 %v2020
        %v3255 = vunpack.c.l.b16 %v2021
        %v3256 = vunpack.c.h.b16 %v2021
        %v3257 = vunpack.c.l.b16 %v2022
        %v3258 = vunpack.c.h.b16 %v2022
        %v3259 = vunpack.c.l.b16 %v2023
        %v3260 = vunpack.c.l.b16 %v2024
        %v3261 = vunpack.c.h.b16 %v2024
        %v3262 = vunpack.c.l.b16 %v2025
        %v3263 = vunpack.c.h.b16 %v2025
        %v3264 = vunpack.c.l.b16 %v2026
        %v3265 = vunpack.c.h.b16 %v2026
        %v3266 = vunpack.c.l.b16 %v2027
        %v3267 = vunpack.c.l.b16 %v2028
        %v3268 = vunpack.c.h.b16 %v2028
        %v3269 = vunpack.c.l.b16 %v2029
        %v3270 = vunpack.c.h.b16 %v2029
        %v3271 = vunpack.c.l.b16 %v2030
        %v3272 = vunpack.c.h.b16 %v2030
        %v3273 = vunpack.c.l.b16 %v2031
        %v3274 = vunpack.c.l.b16 %v2032
        %v3275 = vunpack.c.h.b16 %v2032
        %v3276 = vunpack.c.l.b16 %v2033
        %v3277 = vunpack.c.h.b16 %v2033
        %v3278 = vunpack.c.l.b16 %v2034
        %v3279 = vunpack.c.h.b16 %v2034
        %v3280 = vunpack.c.l.b16 %v2035
        %v3281 = vunpack.c.l.b16 %v2036
        %v3282 = vunpack.c.h.b16 %v2036
        %v3283 = vunpack.c.l.b16 %v2037
        %v3284 = vunpack.c.h.b16 %v2037
        %v3285 = vunpack.c.l.b16 %v2038
        %v3286 = vunpack.c.h.b16 %v2038
        %v3287 = vunpack.c.l.b16 %v2039
        %v3288 = vpack.c.b16 %v2511, %v2504
        %v3289 = vpack.c.b16 %v2512, %v2505
        %v3290 = vpack.c.b16 %v2513, %v2506
        %v3291 = vpack.c.b16 %v2514, %v2507
        %v3292 = vpack.c.b16 %v2515, %v2508
        %v3293 = vpack.c.b16 %v2516, %v2509
        %v3294 = vpack.c.b16 %v2517, %v2510
        %v3295 = vpack.c.b16 %v2525, %v2518
        %v3296 = vpack.c.b16 %v2526, %v2519
        %v3297 = vpack.c.b16 %v2527, %v2520
        %v3298 = vpack.c.b16 %v2528, %v2521
        %v3299 = vpack.c.b16 %v2529, %v2522
        %v3300 = vpack.c.b16 %v2530, %v2523
        %v3301 = vpack.c.b16 %v2531, %v2524
        %v3302 = vpack.c.b16 %v2539, %v2532
        %v3303 = vpack.c.b16 %v2540, %v2533
        %v3304 = vpack.c.b16 %v2541, %v2534
        %v3305 = vpack.c.b16 %v2542, %v2535
        %v3306 = vpack.c.b16 %v2543, %v2536
        %v3307 = vpack.c.b16 %v2544, %v2537
        %v3308 = vpack.c.b16 %v2545, %v2538
        %v3309 = vpack.c.b16 %v2553, %v2546
        %v3310 = vpack.c.b16 %v2554, %v2547
        %v3311 = vpack.c.b16 %v2555, %v2548
        %v3312 = vpack.c.b16 %v2556, %v2549
        %v3313 = vpack.c.b16 %v2557, %v2550
        %v3314 = vpack.c.b16 %v2558, %v2551
        %v3315 = vpack.c.b16 %v2559, %v2552
        %v3316 = vpack.c.b16 %v2567, %v2560
        %v3317 = vpack.c.b16 %v2568, %v2561
        %v3318 = vpack.c.b16 %v2569, %v2562
        %v3319 = vpack.c.b16 %v2570, %v2563
        %v3320 = vpack.c.b16 %v2571, %v2564
        %v3321 = vpack.c.b16 %v2572, %v2565
        %v3322 = vpack.c.b16 %v2573, %v2566
        %v3323 = vpack.c.b16 %v2581, %v2574
        %v3324 = vpack.c.b16 %v2582, %v2575
        %v3325 = vpack.c.b16 %v2583, %v2576
        %v3326 = vpack.c.b16 %v2584, %v2577
        %v3327 = vpack.c.b16 %v2585, %v2578
        %v3328 = vpack.c.b16 %v2586, %v2579
        %v3329 = vpack.c.b16 %v2587, %v2580
        %v3330 = vpack.c.b16 %v2595, %v2588
        %v3331 = vpack.c.b16 %v2596, %v2589
        %v3332 = vpack.c.b16 %v2597, %v2590
        %v3333 = vpack.c.b16 %v2598, %v2591
        %v3334 = vpack.c.b16 %v2599, %v2592
        %v3335 = vpack.c.b16 %v2600, %v2593
        %v3336 = vpack.c.b16 %v2601, %v2594
        %v3337 = vpack.c.b16 %v2609, %v2602
        %v3338 = vpack.c.b16 %v2610, %v2603
        %v3339 = vpack.c.b16 %v2611, %v2604
        %v3340 = vpack.c.b16 %v2612, %v2605
        %v3341 = vpack.c.b16 %v2613, %v2606
        %v3342 = vpack.c.b16 %v2614, %v2607
        %v3343 = vpack.c.b16 %v2615, %v2608
        %v3344 = vpack.c.b16 %v2623, %v2616
        %v3345 = vpack.c.b16 %v2624, %v2617
        %v3346 = vpack.c.b16 %v2625, %v2618
        %v3347 = vpack.c.b16 %v2626, %v2619
        %v3348 = vpack.c.b16 %v2627, %v2620
        %v3349 = vpack.c.b16 %v2628, %v2621
        %v3350 = vpack.c.b16 %v2629, %v2622
        %v3351 = vpack.c.b16 %v2637, %v2630
        %v3352 = vpack.c.b16 %v2638, %v2631
        %v3353 = vpack.c.b16 %v2639, %v2632
        %v3354 = vpack.c.b16 %v2640, %v2633
        %v3355 = vpack.c.b16 %v2641, %v2634
        %v3356 = vpack.c.b16 %v2642, %v2635
        %v3357 = vpack.c.b16 %v2643, %v2636
        %v3358 = vpack.c.b16 %v2651, %v2644
        %v3359 = vpack.c.b16 %v2652, %v2645
        %v3360 = vpack.c.b16 %v2653, %v2646
        %v3361 = vpack.c.b16 %v2654, %v2647
        %v3362 = vpack.c.b16 %v2655, %v2648
        %v3363 = vpack.c.b16 %v2656, %v2649
        %v3364 = vpack.c.b16 %v2657, %v2650
        %v3365 = vpack.c.b16 %v2665, %v2658
        %v3366 = vpack.c.b16 %v2666, %v2659
        %v3367 = vpack.c.b16 %v2667, %v2660
        %v3368 = vpack.c.b16 %v2668, %v2661
        %v3369 = vpack.c.b16 %v2669, %v2662
        %v3370 = vpack.c.b16 %v2670, %v2663
        %v3371 = vpack.c.b16 %v2671, %v2664
        %v3372 = vpack.c.b16 %v2679, %v2672
        %v3373 = vpack.c.b16 %v2680, %v2673
        %v3374 = vpack.c.b16 %v2681, %v2674
        %v3375 = vpack.c.b16 %v2682, %v2675
        %v3376 = vpack.c.b16 %v2683, %v2676
        %v3377 = vpack.c.b16 %v2684, %v2677
        %v3378 = vpack.c.b16 %v2685, %v2678
        %v3379 = vpack.c.b16 %v2693, %v2686
        %v3380 = vpack.c.b16 %v2694, %v2687
        %v3381 = vpack.c.b16 %v2695, %v2688
        %v3382 = vpack.c.b16 %v2696, %v2689
        %v3383 = vpack.c.b16 %v2697, %v2690
        %v3384 = vpack.c.b16 %v2698, %v2691
        %v3385 = vpack.c.b16 %v2699, %v2692
        %v3386 = vpack.c.b16 %v2707, %v2700
        %v3387 = vpack.c.b16 %v2708, %v2701
        %v3388 = vpack.c.b16 %v2709, %v2702
        %v3389 = vpack.c.b16 %v2710, %v2703
        %v3390 = vpack.c.b16 %v2711, %v2704
        %v3391 = vpack.c.b16 %v2712, %v2705
        %v3392 = vpack.c.b16 %v2713, %v2706
        %v3393 = vpack.c.b16 %v2721, %v2714
        %v3394 = vpack.c.b16 %v2722, %v2715
        %v3395 = vpack.c.b16 %v2723, %v2716
        %v3396 = vpack.c.b16 %v2724, %v2717
        %v3397 = vpack.c.b16 %v2725, %v2718
        %v3398 = vpack.c.b16 %v2726, %v2719
        %v3399 = vpack.c.b16 %v2727, %v2720
        %v3400 = vpack.c.b16 %v2735, %v2728
        %v3401 = vpack.c.b16 %v2736, %v2729
        %v3402 = vpack.c.b16 %v2737, %v2730
        %v3403 = vpack.c.b16 %v2738, %v2731
        %v3404 = vpack.c.b16 %v2739, %v2732
        %v3405 = vpack.c.b16 %v2740, %v2733
        %v3406 = vpack.c.b16 %v2741, %v2734
        %v3407 = vpack.c.b16 %v2749, %v2742
        %v3408 = vpack.c.b16 %v2750, %v2743
        %v3409 = vpack.c.b16 %v2751, %v2744
        %v3410 = vpack.c.b16 %v2752, %v2745
        %v3411 = vpack.c.b16 %v2753, %v2746
        %v3412 = vpack.c.b16 %v2754, %v2747
        %v3413 = vpack.c.b16 %v2755, %v2748
        %v3414 = vpack.c.b16 %v2763, %v2756
        %v3415 = vpack.c.b16 %v2764, %v2757
        %v3416 = vpack.c.b16 %v2765, %v2758
        %v3417 = vpack.c.b16 %v2766, %v2759
        %v3418 = vpack.c.b16 %v2767, %v2760
        %v3419 = vpack.c.b16 %v2768, %v2761
        %v3420 = vpack.c.b16 %v2769, %v2762
        %v3421 = vpack.c.b16 %v2777, %v2770
        %v3422 = vpack.c.b16 %v2778, %v2771
        %v3423 = vpack.c.b16 %v2779, %v2772
        %v3424 = vpack.c.b16 %v2780, %v2773
        %v3425 = vpack.c.b16 %v2781, %v2774
        %v3426 = vpack.c.b16 %v2782, %v2775
        %v3427 = vpack.c.b16 %v2783, %v2776
        %v3428 = vpack.c.b16 %v2791, %v2784
        %v3429 = vpack.c.b16 %v2792, %v2785
        %v3430 = vpack.c.b16 %v2793, %v2786
        %v3431 = vpack.c.b16 %v2794, %v2787
        %v3432 = vpack.c.b16 %v2795, %v2788
        %v3433 = vpack.c.b16 %v2796, %v2789
        %v3434 = vpack.c.b16 %v2797, %v2790
        %v3435 = vpack.c.b16 %v2805, %v2798
        %v3436 = vpack.c.b16 %v2806, %v2799
        %v3437 = vpack.c.b16 %v2807, %v2800
        %v3438 = vpack.c.b16 %v2808, %v2801
        %v3439 = vpack.c.b16 %v2809, %v2802
        %v3440 = vpack.c.b16 %v2810, %v2803
        %v3441 = vpack.c.b16 %v2811, %v2804
        %v3442 = vpack.c.b16 %v2819, %v2812
        %v3443 = vpack.c.b16 %v2820, %v2813
        %v3444 = vpack.c.b16 %v2821, %v2814
        %v3445 = vpack.c.b16 %v2822, %v2815
        %v3446 = vpack.c.b16 %v2823, %v2816
        %v3447 = vpack.c.b16 %v2824, %v2817
        %v3448 = vpack.c.b16 %v2825, %v2818
        %v3449 = vpack.c.b16 %v2833, %v2826
        %v3450 = vpack.c.b16 %v2834, %v2827
        %v3451 = vpack.c.b16 %v2835, %v2828
        %v3452 = vpack.c.b16 %v2836, %v2829
        %v3453 = vpack.c.b16 %v2837, %v2830
        %v3454 = vpack.c.b16 %v2838, %v2831
        %v3455 = vpack.c.b16 %v2839, %v2832
        %v3456 = vpack.c.b16 %v2847, %v2840
        %v3457 = vpack.c.b16 %v2848, %v2841
        %v3458 = vpack.c.b16 %v2849, %v2842
        %v3459 = vpack.c.b16 %v2850, %v2843
        %v3460 = vpack.c.b16 %v2851, %v2844
        %v3461 = vpack.c.b16 %v2852, %v2845
        %v3462 = vpack.c.b16 %v2853, %v2846
        %v3463 = vpack.c.b16 %v2861, %v2854
        %v3464 = vpack.c.b16 %v2862, %v2855
        %v3465 = vpack.c.b16 %v2863, %v2856
        %v3466 = vpack.c.b16 %v2864, %v2857
        %v3467 = vpack.c.b16 %v2865, %v2858
        %v3468 = vpack.c.b16 %v2866, %v2859
        %v3469 = vpack.c.b16 %v2867, %v2860
        %v3470 = vpack.c.b16 %v2875, %v2868
        %v3471 = vpack.c.b16 %v2876, %v2869
        %v3472 = vpack.c.b16 %v2877, %v2870
        %v3473 = vpack.c.b16 %v2878, %v2871
        %v3474 = vpack.c.b16 %v2879, %v2872
        %v3475 = vpack.c.b16 %v2880, %v2873
        %v3476 = vpack.c.b16 %v2881, %v2874
        %v3477 = vpack.c.b16 %v2889, %v2882
        %v3478 = vpack.c.b16 %v2890, %v2883
        %v3479 = vpack.c.b16 %v2891, %v2884
        %v3480 = vpack.c.b16 %v2892, %v2885
        %v3481 = vpack.c.b16 %v2893, %v2886
        %v3482 = vpack.c.b16 %v2894, %v2887
        %v3483 = vpack.c.b16 %v2895, %v2888
        %v3484 = vpack.c.b16 %v2903, %v2896
        %v3485 = vpack.c.b16 %v2904, %v2897
        %v3486 = vpack.c.b16 %v2905, %v2898
        %v3487 = vpack.c.b16 %v2906, %v2899
        %v3488 = vpack.c.b16 %v2907, %v2900
        %v3489 = vpack.c.b16 %v2908, %v2901
        %v3490 = vpack.c.b16 %v2909, %v2902
        %v3491 = vpack.c.b16 %v2917, %v2910
        %v3492 = vpack.c.b16 %v2918, %v2911
        %v3493 = vpack.c.b16 %v2919, %v2912
        %v3494 = vpack.c.b16 %v2920, %v2913
        %v3495 = vpack.c.b16 %v2921, %v2914
        %v3496 = vpack.c.b16 %v2922, %v2915
        %v3497 = vpack.c.b16 %v2923, %v2916
        %v3498 = vpack.c.b16 %v2931, %v2924
        %v3499 = vpack.c.b16 %v2932, %v2925
        %v3500 = vpack.c.b16 %v2933, %v2926
        %v3501 = vpack.c.b16 %v2934, %v2927
        %v3502 = vpack.c.b16 %v2935, %v2928
        %v3503 = vpack.c.b16 %v2936, %v2929
        %v3504 = vpack.c.b16 %v2937, %v2930
        %v3505 = vpack.c.b16 %v2945, %v2938
        %v3506 = vpack.c.b16 %v2946, %v2939
        %v3507 = vpack.c.b16 %v2947, %v2940
        %v3508 = vpack.c.b16 %v2948, %v2941
        %v3509 = vpack.c.b16 %v2949, %v2942
        %v3510 = vpack.c.b16 %v2950, %v2943
        %v3511 = vpack.c.b16 %v2951, %v2944
        %v3512 = vpack.c.b16 %v2959, %v2952
        %v3513 = vpack.c.b16 %v2960, %v2953
        %v3514 = vpack.c.b16 %v2961, %v2954
        %v3515 = vpack.c.b16 %v2962, %v2955
        %v3516 = vpack.c.b16 %v2963, %v2956
        %v3517 = vpack.c.b16 %v2964, %v2957
        %v3518 = vpack.c.b16 %v2965, %v2958
        %v3519 = vpack.c.b16 %v2973, %v2966
        %v3520 = vpack.c.b16 %v2974, %v2967
        %v3521 = vpack.c.b16 %v2975, %v2968
        %v3522 = vpack.c.b16 %v2976, %v2969
        %v3523 = vpack.c.b16 %v2977, %v2970
        %v3524 = vpack.c.b16 %v2978, %v2971
        %v3525 = vpack.c.b16 %v2979, %v2972
        %v3526 = vpack.c.b16 %v2987, %v2980
        %v3527 = vpack.c.b16 %v2988, %v2981
        %v3528 = vpack.c.b16 %v2989, %v2982
        %v3529 = vpack.c.b16 %v2990, %v2983
        %v3530 = vpack.c.b16 %v2991, %v2984
        %v3531 = vpack.c.b16 %v2992, %v2985
        %v3532 = vpack.c.b16 %v2993, %v2986
        %v3533 = vpack.c.b16 %v3001, %v2994
        %v3534 = vpack.c.b16 %v3002, %v2995
        %v3535 = vpack.c.b16 %v3003, %v2996
        %v3536 = vpack.c.b16 %v3004, %v2997
        %v3537 = vpack.c.b16 %v3005, %v2998
        %v3538 = vpack.c.b16 %v3006, %v2999
        %v3539 = vpack.c.b16 %v3007, %v3000
        %v3540 = vpack.c.b16 %v3015, %v3008
        %v3541 = vpack.c.b16 %v3016, %v3009
        %v3542 = vpack.c.b16 %v3017, %v3010
        %v3543 = vpack.c.b16 %v3018, %v3011
        %v3544 = vpack.c.b16 %v3019, %v3012
        %v3545 = vpack.c.b16 %v3020, %v3013
        %v3546 = vpack.c.b16 %v3021, %v3014
        %v3547 = vpack.c.b16 %v3029, %v3022
        %v3548 = vpack.c.b16 %v3030, %v3023
        %v3549 = vpack.c.b16 %v3031, %v3024
        %v3550 = vpack.c.b16 %v3032, %v3025
        %v3551 = vpack.c.b16 %v3033, %v3026
        %v3552 = vpack.c.b16 %v3034, %v3027
        %v3553 = vpack.c.b16 %v3035, %v3028
        %v3554 = vpack.c.b16 %v3043, %v3036
        %v3555 = vpack.c.b16 %v3044, %v3037
        %v3556 = vpack.c.b16 %v3045, %v3038
        %v3557 = vpack.c.b16 %v3046, %v3039
        %v3558 = vpack.c.b16 %v3047, %v3040
        %v3559 = vpack.c.b16 %v3048, %v3041
        %v3560 = vpack.c.b16 %v3049, %v3042
        %v3561 = vpack.c.b16 %v3057, %v3050
        %v3562 = vpack.c.b16 %v3058, %v3051
        %v3563 = vpack.c.b16 %v3059, %v3052
        %v3564 = vpack.c.b16 %v3060, %v3053
        %v3565 = vpack.c.b16 %v3061, %v3054
        %v3566 = vpack.c.b16 %v3062, %v3055
        %v3567 = vpack.c.b16 %v3063, %v3056
        %v3568 = vpack.c.b16 %v3071, %v3064
        %v3569 = vpack.c.b16 %v3072, %v3065
        %v3570 = vpack.c.b16 %v3073, %v3066
        %v3571 = vpack.c.b16 %v3074, %v3067
        %v3572 = vpack.c.b16 %v3075, %v3068
        %v3573 = vpack.c.b16 %v3076, %v3069
        %v3574 = vpack.c.b16 %v3077, %v3070
        %v3575 = vpack.c.b16 %v3085, %v3078
        %v3576 = vpack.c.b16 %v3086, %v3079
        %v3577 = vpack.c.b16 %v3087, %v3080
        %v3578 = vpack.c.b16 %v3088, %v3081
        %v3579 = vpack.c.b16 %v3089, %v3082
        %v3580 = vpack.c.b16 %v3090, %v3083
        %v3581 = vpack.c.b16 %v3091, %v3084
        %v3582 = vpack.c.b16 %v3099, %v3092
        %v3583 = vpack.c.b16 %v3100, %v3093
        %v3584 = vpack.c.b16 %v3101, %v3094
        %v3585 = vpack.c.b16 %v3102, %v3095
        %v3586 = vpack.c.b16 %v3103, %v3096
        %v3587 = vpack.c.b16 %v3104, %v3097
        %v3588 = vpack.c.b16 %v3105, %v3098
        %v3589 = vpack.c.b16 %v3113, %v3106
        %v3590 = vpack.c.b16 %v3114, %v3107
        %v3591 = vpack.c.b16 %v3115, %v3108
        %v3592 = vpack.c.b16 %v3116, %v3109
        %v3593 = vpack.c.b16 %v3117, %v3110
        %v3594 = vpack.c.b16 %v3118, %v3111
        %v3595 = vpack.c.b16 %v3119, %v3112
        %v3596 = vpack.c.b16 %v3127, %v3120
        %v3597 = vpack.c.b16 %v3128, %v3121
        %v3598 = vpack.c.b16 %v3129, %v3122
        %v3599 = vpack.c.b16 %v3130, %v3123
        %v3600 = vpack.c.b16 %v3131, %v3124
        %v3601 = vpack.c.b16 %v3132, %v3125
        %v3602 = vpack.c.b16 %v3133, %v3126
        %v3603 = vpack.c.b16 %v3141, %v3134
        %v3604 = vpack.c.b16 %v3142, %v3135
        %v3605 = vpack.c.b16 %v3143, %v3136
        %v3606 = vpack.c.b16 %v3144, %v3137
        %v3607 = vpack.c.b16 %v3145, %v3138
        %v3608 = vpack.c.b16 %v3146, %v3139
        %v3609 = vpack.c.b16 %v3147, %v3140
        %v3610 = vpack.c.b16 %v3155, %v3148
        %v3611 = vpack.c.b16 %v3156, %v3149
        %v3612 = vpack.c.b16 %v3157, %v3150
        %v3613 = vpack.c.b16 %v3158, %v3151
        %v3614 = vpack.c.b16 %v3159, %v3152
        %v3615 = vpack.c.b16 %v3160, %v3153
        %v3616 = vpack.c.b16 %v3161, %v3154
        %v3617 = vpack.c.b16 %v3169, %v3162
        %v3618 = vpack.c.b16 %v3170, %v3163
        %v3619 = vpack.c.b16 %v3171, %v3164
        %v3620 = vpack.c.b16 %v3172, %v3165
        %v3621 = vpack.c.b16 %v3173, %v3166
        %v3622 = vpack.c.b16 %v3174, %v3167
        %v3623 = vpack.c.b16 %v3175, %v3168
        %v3624 = vpack.c.b16 %v3183, %v3176
        %v3625 = vpack.c.b16 %v3184, %v3177
        %v3626 = vpack.c.b16 %v3185, %v3178
        %v3627 = vpack.c.b16 %v3186, %v3179
        %v3628 = vpack.c.b16 %v3187, %v3180
        %v3629 = vpack.c.b16 %v3188, %v3181
        %v3630 = vpack.c.b16 %v3189, %v3182
        %v3631 = vpack.c.b16 %v3197, %v3190
        %v3632 = vpack.c.b16 %v3198, %v3191
        %v3633 = vpack.c.b16 %v3199, %v3192
        %v3634 = vpack.c.b16 %v3200, %v3193
        %v3635 = vpack.c.b16 %v3201, %v3194
        %v3636 = vpack.c.b16 %v3202, %v3195
        %v3637 = vpack.c.b16 %v3203, %v3196
        %v3638 = vpack.c.b16 %v3211, %v3204
        %v3639 = vpack.c.b16 %v3212, %v3205
        %v3640 = vpack.c.b16 %v3213, %v3206
        %v3641 = vpack.c.b16 %v3214, %v3207
        %v3642 = vpack.c.b16 %v3215, %v3208
        %v3643 = vpack.c.b16 %v3216, %v3209
        %v3644 = vpack.c.b16 %v3217, %v3210
        %v3645 = vpack.c.b16 %v3225, %v3218
        %v3646 = vpack.c.b16 %v3226, %v3219
        %v3647 = vpack.c.b16 %v3227, %v3220
        %v3648 = vpack.c.b16 %v3228, %v3221
        %v3649 = vpack.c.b16 %v3229, %v3222
        %v3650 = vpack.c.b16 %v3230, %v3223
        %v3651 = vpack.c.b16 %v3231, %v3224
        %v3652 = vpack.c.b16 %v3239, %v3232
        %v3653 = vpack.c.b16 %v3240, %v3233
        %v3654 = vpack.c.b16 %v3241, %v3234
        %v3655 = vpack.c.b16 %v3242, %v3235
        %v3656 = vpack.c.b16 %v3243, %v3236
        %v3657 = vpack.c.b16 %v3244, %v3237
        %v3658 = vpack.c.b16 %v3245, %v3238
        %v3659 = vpack.c.b16 %v3253, %v3246
        %v3660 = vpack.c.b16 %v3254, %v3247
        %v3661 = vpack.c.b16 %v3255, %v3248
        %v3662 = vpack.c.b16 %v3256, %v3249
        %v3663 = vpack.c.b16 %v3257, %v3250
        %v3664 = vpack.c.b16 %v3258, %v3251
        %v3665 = vpack.c.b16 %v3259, %v3252
        %v3666 = vpack.c.b16 %v3267, %v3260
        %v3667 = vpack.c.b16 %v3268, %v3261
        %v3668 = vpack.c.b16 %v3269, %v3262
        %v3669 = vpack.c.b16 %v3270, %v3263
        %v3670 = vpack.c.b16 %v3271, %v3264
        %v3671 = vpack.c.b16 %v3272, %v3265
        %v3672 = vpack.c.b16 %v3273, %v3266
        %v3673 = vpack.c.b16 %v3281, %v3274
        %v3674 = vpack.c.b16 %v3282, %v3275
        %v3675 = vpack.c.b16 %v3283, %v3276
        %v3676 = vpack.c.b16 %v3284, %v3277
        %v3677 = vpack.c.b16 %v3285, %v3278
        %v3678 = vpack.c.b16 %v3286, %v3279
        %v3679 = vpack.c.b16 %v3287, %v3280
        %4072 = vmatpush.bf16.msra.mxu0 %v3337
        %4073 = vmatpush.bf16.msra.mxu0 %v3330
        %4074 = vmatpush.bf16.msra.mxu0 %v3323
        %4075 = vmatpush.bf16.msra.mxu0 %v3316
        %4076 = vmatpush.bf16.msra.mxu0 %v3309
        %4077 = vmatpush.bf16.msra.mxu0 %v3302
        %4078 = vmatpush.bf16.msra.mxu0 %v3295
        %4079 = vmatpush.bf16.msra.mxu0 %v3288
        %4080 = vmatmul.bf16.gmra.mxu0 %v1585
        %v4081 = vpop.f32.mrf.mxu0
        %v4082 = vadd.f32 %v2042, %v4081
        %v4083 = vpop.f32.mrf.mxu0
        %4084 = vdwg.mxu0
        %4085 = vmatpush.bf16.msra.mxu0 %v3393
        %4086 = vmatpush.bf16.msra.mxu0 %v3386
        %4087 = vmatpush.bf16.msra.mxu0 %v3379
        %4088 = vmatpush.bf16.msra.mxu0 %v3372
        %4089 = vmatpush.bf16.msra.mxu0 %v3365
        %4090 = vmatpush.bf16.msra.mxu0 %v3358
        %4091 = vmatpush.bf16.msra.mxu0 %v3351
        %4092 = vmatpush.bf16.msra.mxu0 %v3344
        %4093 = vmatmul.bf16.gmra.mxu0 %v1586
        %v4094 = vpop.f32.mrf.mxu0
        %v4095 = vadd.f32 %v4082, %v4094
        %v4096 = vpop.f32.mrf.mxu0
        %4097 = vdwg.mxu0
        %4098 = vmatpush.bf16.msra.mxu0 %v3449
        %4099 = vmatpush.bf16.msra.mxu0 %v3442
        %4100 = vmatpush.bf16.msra.mxu0 %v3435
        %4101 = vmatpush.bf16.msra.mxu0 %v3428
        %4102 = vmatpush.bf16.msra.mxu0 %v3421
        %4103 = vmatpush.bf16.msra.mxu0 %v3414
        %4104 = vmatpush.bf16.msra.mxu0 %v3407
        %4105 = vmatpush.bf16.msra.mxu0 %v3400
        %4106 = vmatmul.bf16.gmra.mxu0 %v1587
        %v4107 = vpop.f32.mrf.mxu0
        %v4108 = vadd.f32 %v4095, %v4107
        %v4109 = vpop.f32.mrf.mxu0
        %4110 = vdwg.mxu0
        %4111 = vmatpush.bf16.msra.mxu0 %v3505
        %4112 = vmatpush.bf16.msra.mxu0 %v3498
        %4113 = vmatpush.bf16.msra.mxu0 %v3491
        %4114 = vmatpush.bf16.msra.mxu0 %v3484
        %4115 = vmatpush.bf16.msra.mxu0 %v3477
        %4116 = vmatpush.bf16.msra.mxu0 %v3470
        %4117 = vmatpush.bf16.msra.mxu0 %v3463
        %4118 = vmatpush.bf16.msra.mxu0 %v3456
        %4119 = vmatmul.bf16.gmra.mxu0 %v1588
        %v4120 = vpop.f32.mrf.mxu0
        %v4121 = vadd.f32 %v4108, %v4120
        %v4122 = vpop.f32.mrf.mxu0
        %4123 = vdwg.mxu0
        %4124 = vmatpush.bf16.msra.mxu0 %v3561
        %4125 = vmatpush.bf16.msra.mxu0 %v3554
        %4126 = vmatpush.bf16.msra.mxu0 %v3547
        %4127 = vmatpush.bf16.msra.mxu0 %v3540
        %4128 = vmatpush.bf16.msra.mxu0 %v3533
        %4129 = vmatpush.bf16.msra.mxu0 %v3526
        %4130 = vmatpush.bf16.msra.mxu0 %v3519
        %4131 = vmatpush.bf16.msra.mxu0 %v3512
        %4132 = vmatmul.bf16.gmra.mxu0 %v1589
        %v4133 = vpop.f32.mrf.mxu0
        %v4134 = vadd.f32 %v4121, %v4133
        %v4135 = vpop.f32.mrf.mxu0
        %4136 = vdwg.mxu0
        %4137 = vmatpush.bf16.msra.mxu0 %v3617
        %4138 = vmatpush.bf16.msra.mxu0 %v3610
        %4139 = vmatpush.bf16.msra.mxu0 %v3603
        %4140 = vmatpush.bf16.msra.mxu0 %v3596
        %4141 = vmatpush.bf16.msra.mxu0 %v3589
        %4142 = vmatpush.bf16.msra.mxu0 %v3582
        %4143 = vmatpush.bf16.msra.mxu0 %v3575
        %4144 = vmatpush.bf16.msra.mxu0 %v3568
        %4145 = vmatmul.bf16.gmra.mxu0 %v1590
        %v4146 = vpop.f32.mrf.mxu0
        %v4147 = vadd.f32 %v4134, %v4146
        %v4148 = vpop.f32.mrf.mxu0
        %4149 = vdwg.mxu0
        %4150 = vmatpush.bf16.msra.mxu0 %v3673
        %4151 = vmatpush.bf16.msra.mxu0 %v3666
        %4152 = vmatpush.bf16.msra.mxu0 %v3659
        %4153 = vmatpush.bf16.msra.mxu0 %v3652
        %4154 = vmatpush.bf16.msra.mxu0 %v3645
        %4155 = vmatpush.bf16.msra.mxu0 %v3638
        %4156 = vmatpush.bf16.msra.mxu0 %v3631
        %4157 = vmatpush.bf16.msra.mxu0 %v3624
        %4158 = vmatmul.bf16.gmra.mxu0 %v1591
        %v4159 = vpop.f32.mrf.mxu0
        %v4160 = vadd.f32 %v4147, %v4159
        %v4161 = vpop.f32.mrf.mxu0
        %4162 = vdwg.mxu0
        %4163 = vmatpush.bf16.msra.mxu0 %v3338
        %4164 = vmatpush.bf16.msra.mxu0 %v3331
        %4165 = vmatpush.bf16.msra.mxu0 %v3324
        %4166 = vmatpush.bf16.msra.mxu0 %v3317
        %4167 = vmatpush.bf16.msra.mxu0 %v3310
        %4168 = vmatpush.bf16.msra.mxu0 %v3303
        %4169 = vmatpush.bf16.msra.mxu0 %v3296
        %4170 = vmatpush.bf16.msra.mxu0 %v3289
        %4171 = vmatmul.bf16.gmra.mxu0 %v1585
        %v4172 = vpop.f32.mrf.mxu0
        %v4173 = vadd.f32 %v2043, %v4172
        %v4174 = vpop.f32.mrf.mxu0
        %4175 = vdwg.mxu0
        %4176 = vmatpush.bf16.msra.mxu0 %v3394
        %4177 = vmatpush.bf16.msra.mxu0 %v3387
        %4178 = vmatpush.bf16.msra.mxu0 %v3380
        %4179 = vmatpush.bf16.msra.mxu0 %v3373
        %4180 = vmatpush.bf16.msra.mxu0 %v3366
        %4181 = vmatpush.bf16.msra.mxu0 %v3359
        %4182 = vmatpush.bf16.msra.mxu0 %v3352
        %4183 = vmatpush.bf16.msra.mxu0 %v3345
        %4184 = vmatmul.bf16.gmra.mxu0 %v1586
        %v4185 = vpop.f32.mrf.mxu0
        %v4186 = vadd.f32 %v4173, %v4185
        %v4187 = vpop.f32.mrf.mxu0
        %4188 = vdwg.mxu0
        %4189 = vmatpush.bf16.msra.mxu0 %v3450
        %4190 = vmatpush.bf16.msra.mxu0 %v3443
        %4191 = vmatpush.bf16.msra.mxu0 %v3436
        %4192 = vmatpush.bf16.msra.mxu0 %v3429
        %4193 = vmatpush.bf16.msra.mxu0 %v3422
        %4194 = vmatpush.bf16.msra.mxu0 %v3415
        %4195 = vmatpush.bf16.msra.mxu0 %v3408
        %4196 = vmatpush.bf16.msra.mxu0 %v3401
        %4197 = vmatmul.bf16.gmra.mxu0 %v1587
        %v4198 = vpop.f32.mrf.mxu0
        %v4199 = vadd.f32 %v4186, %v4198
        %v4200 = vpop.f32.mrf.mxu0
        %4201 = vdwg.mxu0
        %4202 = vmatpush.bf16.msra.mxu0 %v3506
        %4203 = vmatpush.bf16.msra.mxu0 %v3499
        %4204 = vmatpush.bf16.msra.mxu0 %v3492
        %4205 = vmatpush.bf16.msra.mxu0 %v3485
        %4206 = vmatpush.bf16.msra.mxu0 %v3478
        %4207 = vmatpush.bf16.msra.mxu0 %v3471
        %4208 = vmatpush.bf16.msra.mxu0 %v3464
        %4209 = vmatpush.bf16.msra.mxu0 %v3457
        %4210 = vmatmul.bf16.gmra.mxu0 %v1588
        %v4211 = vpop.f32.mrf.mxu0
        %v4212 = vadd.f32 %v4199, %v4211
        %v4213 = vpop.f32.mrf.mxu0
        %4214 = vdwg.mxu0
        %4215 = vmatpush.bf16.msra.mxu0 %v3562
        %4216 = vmatpush.bf16.msra.mxu0 %v3555
        %4217 = vmatpush.bf16.msra.mxu0 %v3548
        %4218 = vmatpush.bf16.msra.mxu0 %v3541
        %4219 = vmatpush.bf16.msra.mxu0 %v3534
        %4220 = vmatpush.bf16.msra.mxu0 %v3527
        %4221 = vmatpush.bf16.msra.mxu0 %v3520
        %4222 = vmatpush.bf16.msra.mxu0 %v3513
        %4223 = vmatmul.bf16.gmra.mxu0 %v1589
        %v4224 = vpop.f32.mrf.mxu0
        %v4225 = vadd.f32 %v4212, %v4224
        %v4226 = vpop.f32.mrf.mxu0
        %4227 = vdwg.mxu0
        %4228 = vmatpush.bf16.msra.mxu0 %v3618
        %4229 = vmatpush.bf16.msra.mxu0 %v3611
        %4230 = vmatpush.bf16.msra.mxu0 %v3604
        %4231 = vmatpush.bf16.msra.mxu0 %v3597
        %4232 = vmatpush.bf16.msra.mxu0 %v3590
        %4233 = vmatpush.bf16.msra.mxu0 %v3583
        %4234 = vmatpush.bf16.msra.mxu0 %v3576
        %4235 = vmatpush.bf16.msra.mxu0 %v3569
        %4236 = vmatmul.bf16.gmra.mxu0 %v1590
        %v4237 = vpop.f32.mrf.mxu0
        %v4238 = vadd.f32 %v4225, %v4237
        %v4239 = vpop.f32.mrf.mxu0
        %4240 = vdwg.mxu0
        %4241 = vmatpush.bf16.msra.mxu0 %v3674
        %4242 = vmatpush.bf16.msra.mxu0 %v3667
        %4243 = vmatpush.bf16.msra.mxu0 %v3660
        %4244 = vmatpush.bf16.msra.mxu0 %v3653
        %4245 = vmatpush.bf16.msra.mxu0 %v3646
        %4246 = vmatpush.bf16.msra.mxu0 %v3639
        %4247 = vmatpush.bf16.msra.mxu0 %v3632
        %4248 = vmatpush.bf16.msra.mxu0 %v3625
        %4249 = vmatmul.bf16.gmra.mxu0 %v1591
        %v4250 = vpop.f32.mrf.mxu0
        %v4251 = vadd.f32 %v4238, %v4250
        %v4252 = vpop.f32.mrf.mxu0
        %4253 = vdwg.mxu0
        %4254 = vmatpush.bf16.msra.mxu0 %v3339
        %4255 = vmatpush.bf16.msra.mxu0 %v3332
        %4256 = vmatpush.bf16.msra.mxu0 %v3325
        %4257 = vmatpush.bf16.msra.mxu0 %v3318
        %4258 = vmatpush.bf16.msra.mxu0 %v3311
        %4259 = vmatpush.bf16.msra.mxu0 %v3304
        %4260 = vmatpush.bf16.msra.mxu0 %v3297
        %4261 = vmatpush.bf16.msra.mxu0 %v3290
        %4262 = vmatmul.bf16.gmra.mxu0 %v1585
        %v4263 = vpop.f32.mrf.mxu0
        %v4264 = vadd.f32 %v2044, %v4263
        %v4265 = vpop.f32.mrf.mxu0
        %4266 = vdwg.mxu0
        %4267 = vmatpush.bf16.msra.mxu0 %v3395
        %4268 = vmatpush.bf16.msra.mxu0 %v3388
        %4269 = vmatpush.bf16.msra.mxu0 %v3381
        %4270 = vmatpush.bf16.msra.mxu0 %v3374
        %4271 = vmatpush.bf16.msra.mxu0 %v3367
        %4272 = vmatpush.bf16.msra.mxu0 %v3360
        %4273 = vmatpush.bf16.msra.mxu0 %v3353
        %4274 = vmatpush.bf16.msra.mxu0 %v3346
        %4275 = vmatmul.bf16.gmra.mxu0 %v1586
        %v4276 = vpop.f32.mrf.mxu0
        %v4277 = vadd.f32 %v4264, %v4276
        %v4278 = vpop.f32.mrf.mxu0
        %4279 = vdwg.mxu0
        %4280 = vmatpush.bf16.msra.mxu0 %v3451
        %4281 = vmatpush.bf16.msra.mxu0 %v3444
        %4282 = vmatpush.bf16.msra.mxu0 %v3437
        %4283 = vmatpush.bf16.msra.mxu0 %v3430
        %4284 = vmatpush.bf16.msra.mxu0 %v3423
        %4285 = vmatpush.bf16.msra.mxu0 %v3416
        %4286 = vmatpush.bf16.msra.mxu0 %v3409
        %4287 = vmatpush.bf16.msra.mxu0 %v3402
        %4288 = vmatmul.bf16.gmra.mxu0 %v1587
        %v4289 = vpop.f32.mrf.mxu0
        %v4290 = vadd.f32 %v4277, %v4289
        %v4291 = vpop.f32.mrf.mxu0
        %4292 = vdwg.mxu0
        %4293 = vmatpush.bf16.msra.mxu0 %v3507
        %4294 = vmatpush.bf16.msra.mxu0 %v3500
        %4295 = vmatpush.bf16.msra.mxu0 %v3493
        %4296 = vmatpush.bf16.msra.mxu0 %v3486
        %4297 = vmatpush.bf16.msra.mxu0 %v3479
        %4298 = vmatpush.bf16.msra.mxu0 %v3472
        %4299 = vmatpush.bf16.msra.mxu0 %v3465
        %4300 = vmatpush.bf16.msra.mxu0 %v3458
        %4301 = vmatmul.bf16.gmra.mxu0 %v1588
        %v4302 = vpop.f32.mrf.mxu0
        %v4303 = vadd.f32 %v4290, %v4302
        %v4304 = vpop.f32.mrf.mxu0
        %4305 = vdwg.mxu0
        %4306 = vmatpush.bf16.msra.mxu0 %v3563
        %4307 = vmatpush.bf16.msra.mxu0 %v3556
        %4308 = vmatpush.bf16.msra.mxu0 %v3549
        %4309 = vmatpush.bf16.msra.mxu0 %v3542
        %4310 = vmatpush.bf16.msra.mxu0 %v3535
        %4311 = vmatpush.bf16.msra.mxu0 %v3528
        %4312 = vmatpush.bf16.msra.mxu0 %v3521
        %4313 = vmatpush.bf16.msra.mxu0 %v3514
        %4314 = vmatmul.bf16.gmra.mxu0 %v1589
        %v4315 = vpop.f32.mrf.mxu0
        %v4316 = vadd.f32 %v4303, %v4315
        %v4317 = vpop.f32.mrf.mxu0
        %4318 = vdwg.mxu0
        %4319 = vmatpush.bf16.msra.mxu0 %v3619
        %4320 = vmatpush.bf16.msra.mxu0 %v3612
        %4321 = vmatpush.bf16.msra.mxu0 %v3605
        %4322 = vmatpush.bf16.msra.mxu0 %v3598
        %4323 = vmatpush.bf16.msra.mxu0 %v3591
        %4324 = vmatpush.bf16.msra.mxu0 %v3584
        %4325 = vmatpush.bf16.msra.mxu0 %v3577
        %4326 = vmatpush.bf16.msra.mxu0 %v3570
        %4327 = vmatmul.bf16.gmra.mxu0 %v1590
        %v4328 = vpop.f32.mrf.mxu0
        %v4329 = vadd.f32 %v4316, %v4328
        %v4330 = vpop.f32.mrf.mxu0
        %4331 = vdwg.mxu0
        %4332 = vmatpush.bf16.msra.mxu0 %v3675
        %4333 = vmatpush.bf16.msra.mxu0 %v3668
        %4334 = vmatpush.bf16.msra.mxu0 %v3661
        %4335 = vmatpush.bf16.msra.mxu0 %v3654
        %4336 = vmatpush.bf16.msra.mxu0 %v3647
        %4337 = vmatpush.bf16.msra.mxu0 %v3640
        %4338 = vmatpush.bf16.msra.mxu0 %v3633
        %4339 = vmatpush.bf16.msra.mxu0 %v3626
        %4340 = vmatmul.bf16.gmra.mxu0 %v1591
        %v4341 = vpop.f32.mrf.mxu0
        %v4342 = vadd.f32 %v4329, %v4341
        %v4343 = vpop.f32.mrf.mxu0
        %4344 = vdwg.mxu0
        %4345 = vmatpush.bf16.msra.mxu0 %v3340
        %4346 = vmatpush.bf16.msra.mxu0 %v3333
        %4347 = vmatpush.bf16.msra.mxu0 %v3326
        %4348 = vmatpush.bf16.msra.mxu0 %v3319
        %4349 = vmatpush.bf16.msra.mxu0 %v3312
        %4350 = vmatpush.bf16.msra.mxu0 %v3305
        %4351 = vmatpush.bf16.msra.mxu0 %v3298
        %4352 = vmatpush.bf16.msra.mxu0 %v3291
        %4353 = vmatmul.bf16.gmra.mxu0 %v1585
        %v4354 = vpop.f32.mrf.mxu0
        %v4355 = vadd.f32 %v2045, %v4354
        %v4356 = vpop.f32.mrf.mxu0
        %4357 = vdwg.mxu0
        %4358 = vmatpush.bf16.msra.mxu0 %v3396
        %4359 = vmatpush.bf16.msra.mxu0 %v3389
        %4360 = vmatpush.bf16.msra.mxu0 %v3382
        %4361 = vmatpush.bf16.msra.mxu0 %v3375
        %4362 = vmatpush.bf16.msra.mxu0 %v3368
        %4363 = vmatpush.bf16.msra.mxu0 %v3361
        %4364 = vmatpush.bf16.msra.mxu0 %v3354
        %4365 = vmatpush.bf16.msra.mxu0 %v3347
        %4366 = vmatmul.bf16.gmra.mxu0 %v1586
        %v4367 = vpop.f32.mrf.mxu0
        %v4368 = vadd.f32 %v4355, %v4367
        %v4369 = vpop.f32.mrf.mxu0
        %4370 = vdwg.mxu0
        %4371 = vmatpush.bf16.msra.mxu0 %v3452
        %4372 = vmatpush.bf16.msra.mxu0 %v3445
        %4373 = vmatpush.bf16.msra.mxu0 %v3438
        %4374 = vmatpush.bf16.msra.mxu0 %v3431
        %4375 = vmatpush.bf16.msra.mxu0 %v3424
        %4376 = vmatpush.bf16.msra.mxu0 %v3417
        %4377 = vmatpush.bf16.msra.mxu0 %v3410
        %4378 = vmatpush.bf16.msra.mxu0 %v3403
        %4379 = vmatmul.bf16.gmra.mxu0 %v1587
        %v4380 = vpop.f32.mrf.mxu0
        %v4381 = vadd.f32 %v4368, %v4380
        %v4382 = vpop.f32.mrf.mxu0
        %4383 = vdwg.mxu0
        %4384 = vmatpush.bf16.msra.mxu0 %v3508
        %4385 = vmatpush.bf16.msra.mxu0 %v3501
        %4386 = vmatpush.bf16.msra.mxu0 %v3494
        %4387 = vmatpush.bf16.msra.mxu0 %v3487
        %4388 = vmatpush.bf16.msra.mxu0 %v3480
        %4389 = vmatpush.bf16.msra.mxu0 %v3473
        %4390 = vmatpush.bf16.msra.mxu0 %v3466
        %4391 = vmatpush.bf16.msra.mxu0 %v3459
        %4392 = vmatmul.bf16.gmra.mxu0 %v1588
        %v4393 = vpop.f32.mrf.mxu0
        %v4394 = vadd.f32 %v4381, %v4393
        %v4395 = vpop.f32.mrf.mxu0
        %4396 = vdwg.mxu0
        %4397 = vmatpush.bf16.msra.mxu0 %v3564
        %4398 = vmatpush.bf16.msra.mxu0 %v3557
        %4399 = vmatpush.bf16.msra.mxu0 %v3550
        %4400 = vmatpush.bf16.msra.mxu0 %v3543
        %4401 = vmatpush.bf16.msra.mxu0 %v3536
        %4402 = vmatpush.bf16.msra.mxu0 %v3529
        %4403 = vmatpush.bf16.msra.mxu0 %v3522
        %4404 = vmatpush.bf16.msra.mxu0 %v3515
        %4405 = vmatmul.bf16.gmra.mxu0 %v1589
        %v4406 = vpop.f32.mrf.mxu0
        %v4407 = vadd.f32 %v4394, %v4406
        %v4408 = vpop.f32.mrf.mxu0
        %4409 = vdwg.mxu0
        %4410 = vmatpush.bf16.msra.mxu0 %v3620
        %4411 = vmatpush.bf16.msra.mxu0 %v3613
        %4412 = vmatpush.bf16.msra.mxu0 %v3606
        %4413 = vmatpush.bf16.msra.mxu0 %v3599
        %4414 = vmatpush.bf16.msra.mxu0 %v3592
        %4415 = vmatpush.bf16.msra.mxu0 %v3585
        %4416 = vmatpush.bf16.msra.mxu0 %v3578
        %4417 = vmatpush.bf16.msra.mxu0 %v3571
        %4418 = vmatmul.bf16.gmra.mxu0 %v1590
        %v4419 = vpop.f32.mrf.mxu0
        %v4420 = vadd.f32 %v4407, %v4419
        %v4421 = vpop.f32.mrf.mxu0
        %4422 = vdwg.mxu0
        %4423 = vmatpush.bf16.msra.mxu0 %v3676
        %4424 = vmatpush.bf16.msra.mxu0 %v3669
        %4425 = vmatpush.bf16.msra.mxu0 %v3662
        %4426 = vmatpush.bf16.msra.mxu0 %v3655
        %4427 = vmatpush.bf16.msra.mxu0 %v3648
        %4428 = vmatpush.bf16.msra.mxu0 %v3641
        %4429 = vmatpush.bf16.msra.mxu0 %v3634
        %4430 = vmatpush.bf16.msra.mxu0 %v3627
        %4431 = vmatmul.bf16.gmra.mxu0 %v1591
        %v4432 = vpop.f32.mrf.mxu0
        %v4433 = vadd.f32 %v4420, %v4432
        %v4434 = vpop.f32.mrf.mxu0
        %4435 = vdwg.mxu0
        %4436 = vmatpush.bf16.msra.mxu0 %v3341
        %4437 = vmatpush.bf16.msra.mxu0 %v3334
        %4438 = vmatpush.bf16.msra.mxu0 %v3327
        %4439 = vmatpush.bf16.msra.mxu0 %v3320
        %4440 = vmatpush.bf16.msra.mxu0 %v3313
        %4441 = vmatpush.bf16.msra.mxu0 %v3306
        %4442 = vmatpush.bf16.msra.mxu0 %v3299
        %4443 = vmatpush.bf16.msra.mxu0 %v3292
        %4444 = vmatmul.bf16.gmra.mxu0 %v1585
        %v4445 = vpop.f32.mrf.mxu0
        %v4446 = vadd.f32 %v2046, %v4445
        %v4447 = vpop.f32.mrf.mxu0
        %4448 = vdwg.mxu0
        %4449 = vmatpush.bf16.msra.mxu0 %v3397
        %4450 = vmatpush.bf16.msra.mxu0 %v3390
        %4451 = vmatpush.bf16.msra.mxu0 %v3383
        %4452 = vmatpush.bf16.msra.mxu0 %v3376
        %4453 = vmatpush.bf16.msra.mxu0 %v3369
        %4454 = vmatpush.bf16.msra.mxu0 %v3362
        %4455 = vmatpush.bf16.msra.mxu0 %v3355
        %4456 = vmatpush.bf16.msra.mxu0 %v3348
        %4457 = vmatmul.bf16.gmra.mxu0 %v1586
        %v4458 = vpop.f32.mrf.mxu0
        %v4459 = vadd.f32 %v4446, %v4458
        %v4460 = vpop.f32.mrf.mxu0
        %4461 = vdwg.mxu0
        %4462 = vmatpush.bf16.msra.mxu0 %v3453
        %4463 = vmatpush.bf16.msra.mxu0 %v3446
        %4464 = vmatpush.bf16.msra.mxu0 %v3439
        %4465 = vmatpush.bf16.msra.mxu0 %v3432
        %4466 = vmatpush.bf16.msra.mxu0 %v3425
        %4467 = vmatpush.bf16.msra.mxu0 %v3418
        %4468 = vmatpush.bf16.msra.mxu0 %v3411
        %4469 = vmatpush.bf16.msra.mxu0 %v3404
        %4470 = vmatmul.bf16.gmra.mxu0 %v1587
        %v4471 = vpop.f32.mrf.mxu0
        %v4472 = vadd.f32 %v4459, %v4471
        %v4473 = vpop.f32.mrf.mxu0
        %4474 = vdwg.mxu0
        %4475 = vmatpush.bf16.msra.mxu0 %v3509
        %4476 = vmatpush.bf16.msra.mxu0 %v3502
        %4477 = vmatpush.bf16.msra.mxu0 %v3495
        %4478 = vmatpush.bf16.msra.mxu0 %v3488
        %4479 = vmatpush.bf16.msra.mxu0 %v3481
        %4480 = vmatpush.bf16.msra.mxu0 %v3474
        %4481 = vmatpush.bf16.msra.mxu0 %v3467
        %4482 = vmatpush.bf16.msra.mxu0 %v3460
        %4483 = vmatmul.bf16.gmra.mxu0 %v1588
        %v4484 = vpop.f32.mrf.mxu0
        %v4485 = vadd.f32 %v4472, %v4484
        %v4486 = vpop.f32.mrf.mxu0
        %4487 = vdwg.mxu0
        %4488 = vmatpush.bf16.msra.mxu0 %v3565
        %4489 = vmatpush.bf16.msra.mxu0 %v3558
        %4490 = vmatpush.bf16.msra.mxu0 %v3551
        %4491 = vmatpush.bf16.msra.mxu0 %v3544
        %4492 = vmatpush.bf16.msra.mxu0 %v3537
        %4493 = vmatpush.bf16.msra.mxu0 %v3530
        %4494 = vmatpush.bf16.msra.mxu0 %v3523
        %4495 = vmatpush.bf16.msra.mxu0 %v3516
        %4496 = vmatmul.bf16.gmra.mxu0 %v1589
        %v4497 = vpop.f32.mrf.mxu0
        %v4498 = vadd.f32 %v4485, %v4497
        %v4499 = vpop.f32.mrf.mxu0
        %4500 = vdwg.mxu0
        %4501 = vmatpush.bf16.msra.mxu0 %v3621
        %4502 = vmatpush.bf16.msra.mxu0 %v3614
        %4503 = vmatpush.bf16.msra.mxu0 %v3607
        %4504 = vmatpush.bf16.msra.mxu0 %v3600
        %4505 = vmatpush.bf16.msra.mxu0 %v3593
        %4506 = vmatpush.bf16.msra.mxu0 %v3586
        %4507 = vmatpush.bf16.msra.mxu0 %v3579
        %4508 = vmatpush.bf16.msra.mxu0 %v3572
        %4509 = vmatmul.bf16.gmra.mxu0 %v1590
        %v4510 = vpop.f32.mrf.mxu0
        %v4511 = vadd.f32 %v4498, %v4510
        %v4512 = vpop.f32.mrf.mxu0
        %4513 = vdwg.mxu0
        %4514 = vmatpush.bf16.msra.mxu0 %v3677
        %4515 = vmatpush.bf16.msra.mxu0 %v3670
        %4516 = vmatpush.bf16.msra.mxu0 %v3663
        %4517 = vmatpush.bf16.msra.mxu0 %v3656
        %4518 = vmatpush.bf16.msra.mxu0 %v3649
        %4519 = vmatpush.bf16.msra.mxu0 %v3642
        %4520 = vmatpush.bf16.msra.mxu0 %v3635
        %4521 = vmatpush.bf16.msra.mxu0 %v3628
        %4522 = vmatmul.bf16.gmra.mxu0 %v1591
        %v4523 = vpop.f32.mrf.mxu0
        %v4524 = vadd.f32 %v4511, %v4523
        %v4525 = vpop.f32.mrf.mxu0
        %4526 = vdwg.mxu0
        %4527 = vmatpush.bf16.msra.mxu0 %v3342
        %4528 = vmatpush.bf16.msra.mxu0 %v3335
        %4529 = vmatpush.bf16.msra.mxu0 %v3328
        %4530 = vmatpush.bf16.msra.mxu0 %v3321
        %4531 = vmatpush.bf16.msra.mxu0 %v3314
        %4532 = vmatpush.bf16.msra.mxu0 %v3307
        %4533 = vmatpush.bf16.msra.mxu0 %v3300
        %4534 = vmatpush.bf16.msra.mxu0 %v3293
        %4535 = vmatmul.bf16.gmra.mxu0 %v1585
        %v4536 = vpop.f32.mrf.mxu0
        %v4537 = vadd.f32 %v2047, %v4536
        %v4538 = vpop.f32.mrf.mxu0
        %4539 = vdwg.mxu0
        %4540 = vmatpush.bf16.msra.mxu0 %v3398
        %4541 = vmatpush.bf16.msra.mxu0 %v3391
        %4542 = vmatpush.bf16.msra.mxu0 %v3384
        %4543 = vmatpush.bf16.msra.mxu0 %v3377
        %4544 = vmatpush.bf16.msra.mxu0 %v3370
        %4545 = vmatpush.bf16.msra.mxu0 %v3363
        %4546 = vmatpush.bf16.msra.mxu0 %v3356
        %4547 = vmatpush.bf16.msra.mxu0 %v3349
        %4548 = vmatmul.bf16.gmra.mxu0 %v1586
        %v4549 = vpop.f32.mrf.mxu0
        %v4550 = vadd.f32 %v4537, %v4549
        %v4551 = vpop.f32.mrf.mxu0
        %4552 = vdwg.mxu0
        %4553 = vmatpush.bf16.msra.mxu0 %v3454
        %4554 = vmatpush.bf16.msra.mxu0 %v3447
        %4555 = vmatpush.bf16.msra.mxu0 %v3440
        %4556 = vmatpush.bf16.msra.mxu0 %v3433
        %4557 = vmatpush.bf16.msra.mxu0 %v3426
        %4558 = vmatpush.bf16.msra.mxu0 %v3419
        %4559 = vmatpush.bf16.msra.mxu0 %v3412
        %4560 = vmatpush.bf16.msra.mxu0 %v3405
        %4561 = vmatmul.bf16.gmra.mxu0 %v1587
        %v4562 = vpop.f32.mrf.mxu0
        %v4563 = vadd.f32 %v4550, %v4562
        %v4564 = vpop.f32.mrf.mxu0
        %4565 = vdwg.mxu0
        %4566 = vmatpush.bf16.msra.mxu0 %v3510
        %4567 = vmatpush.bf16.msra.mxu0 %v3503
        %4568 = vmatpush.bf16.msra.mxu0 %v3496
        %4569 = vmatpush.bf16.msra.mxu0 %v3489
        %4570 = vmatpush.bf16.msra.mxu0 %v3482
        %4571 = vmatpush.bf16.msra.mxu0 %v3475
        %4572 = vmatpush.bf16.msra.mxu0 %v3468
        %4573 = vmatpush.bf16.msra.mxu0 %v3461
        %4574 = vmatmul.bf16.gmra.mxu0 %v1588
        %v4575 = vpop.f32.mrf.mxu0
        %v4576 = vadd.f32 %v4563, %v4575
        %v4577 = vpop.f32.mrf.mxu0
        %4578 = vdwg.mxu0
        %4579 = vmatpush.bf16.msra.mxu0 %v3566
        %4580 = vmatpush.bf16.msra.mxu0 %v3559
        %4581 = vmatpush.bf16.msra.mxu0 %v3552
        %4582 = vmatpush.bf16.msra.mxu0 %v3545
        %4583 = vmatpush.bf16.msra.mxu0 %v3538
        %4584 = vmatpush.bf16.msra.mxu0 %v3531
        %4585 = vmatpush.bf16.msra.mxu0 %v3524
        %4586 = vmatpush.bf16.msra.mxu0 %v3517
        %4587 = vmatmul.bf16.gmra.mxu0 %v1589
        %v4588 = vpop.f32.mrf.mxu0
        %v4589 = vadd.f32 %v4576, %v4588
        %v4590 = vpop.f32.mrf.mxu0
        %4591 = vdwg.mxu0
        %4592 = vmatpush.bf16.msra.mxu0 %v3622
        %4593 = vmatpush.bf16.msra.mxu0 %v3615
        %4594 = vmatpush.bf16.msra.mxu0 %v3608
        %4595 = vmatpush.bf16.msra.mxu0 %v3601
        %4596 = vmatpush.bf16.msra.mxu0 %v3594
        %4597 = vmatpush.bf16.msra.mxu0 %v3587
        %4598 = vmatpush.bf16.msra.mxu0 %v3580
        %4599 = vmatpush.bf16.msra.mxu0 %v3573
        %4600 = vmatmul.bf16.gmra.mxu0 %v1590
        %v4601 = vpop.f32.mrf.mxu0
        %v4602 = vadd.f32 %v4589, %v4601
        %v4603 = vpop.f32.mrf.mxu0
        %4604 = vdwg.mxu0
        %4605 = vmatpush.bf16.msra.mxu0 %v3678
        %4606 = vmatpush.bf16.msra.mxu0 %v3671
        %4607 = vmatpush.bf16.msra.mxu0 %v3664
        %4608 = vmatpush.bf16.msra.mxu0 %v3657
        %4609 = vmatpush.bf16.msra.mxu0 %v3650
        %4610 = vmatpush.bf16.msra.mxu0 %v3643
        %4611 = vmatpush.bf16.msra.mxu0 %v3636
        %4612 = vmatpush.bf16.msra.mxu0 %v3629
        %4613 = vmatmul.bf16.gmra.mxu0 %v1591
        %v4614 = vpop.f32.mrf.mxu0
        %v4615 = vadd.f32 %v4602, %v4614
        %v4616 = vpop.f32.mrf.mxu0
        %4617 = vdwg.mxu0
        %4618 = vmatpush.bf16.msra.mxu0 %v3343
        %4619 = vmatpush.bf16.msra.mxu0 %v3336
        %4620 = vmatpush.bf16.msra.mxu0 %v3329
        %4621 = vmatpush.bf16.msra.mxu0 %v3322
        %4622 = vmatpush.bf16.msra.mxu0 %v3315
        %4623 = vmatpush.bf16.msra.mxu0 %v3308
        %4624 = vmatpush.bf16.msra.mxu0 %v3301
        %4625 = vmatpush.bf16.msra.mxu0 %v3294
        %4626 = vmatmul.bf16.gmra.mxu0 %v1585
        %v4627 = vpop.f32.mrf.mxu0
        %v4628 = vadd.f32 %v2048, %v4627
        %v4629 = vpop.f32.mrf.mxu0
        %4630 = vdwg.mxu0
        %4631 = vmatpush.bf16.msra.mxu0 %v3399
        %4632 = vmatpush.bf16.msra.mxu0 %v3392
        %4633 = vmatpush.bf16.msra.mxu0 %v3385
        %4634 = vmatpush.bf16.msra.mxu0 %v3378
        %4635 = vmatpush.bf16.msra.mxu0 %v3371
        %4636 = vmatpush.bf16.msra.mxu0 %v3364
        %4637 = vmatpush.bf16.msra.mxu0 %v3357
        %4638 = vmatpush.bf16.msra.mxu0 %v3350
        %4639 = vmatmul.bf16.gmra.mxu0 %v1586
        %v4640 = vpop.f32.mrf.mxu0
        %v4641 = vadd.f32 %v4628, %v4640
        %v4642 = vpop.f32.mrf.mxu0
        %4643 = vdwg.mxu0
        %4644 = vmatpush.bf16.msra.mxu0 %v3455
        %4645 = vmatpush.bf16.msra.mxu0 %v3448
        %4646 = vmatpush.bf16.msra.mxu0 %v3441
        %4647 = vmatpush.bf16.msra.mxu0 %v3434
        %4648 = vmatpush.bf16.msra.mxu0 %v3427
        %4649 = vmatpush.bf16.msra.mxu0 %v3420
        %4650 = vmatpush.bf16.msra.mxu0 %v3413
        %4651 = vmatpush.bf16.msra.mxu0 %v3406
        %4652 = vmatmul.bf16.gmra.mxu0 %v1587
        %v4653 = vpop.f32.mrf.mxu0
        %v4654 = vadd.f32 %v4641, %v4653
        %v4655 = vpop.f32.mrf.mxu0
        %4656 = vdwg.mxu0
        %4657 = vmatpush.bf16.msra.mxu0 %v3511
        %4658 = vmatpush.bf16.msra.mxu0 %v3504
        %4659 = vmatpush.bf16.msra.mxu0 %v3497
        %4660 = vmatpush.bf16.msra.mxu0 %v3490
        %4661 = vmatpush.bf16.msra.mxu0 %v3483
        %4662 = vmatpush.bf16.msra.mxu0 %v3476
        %4663 = vmatpush.bf16.msra.mxu0 %v3469
        %4664 = vmatpush.bf16.msra.mxu0 %v3462
        %4665 = vmatmul.bf16.gmra.mxu0 %v1588
        %v4666 = vpop.f32.mrf.mxu0
        %v4667 = vadd.f32 %v4654, %v4666
        %v4668 = vpop.f32.mrf.mxu0
        %4669 = vdwg.mxu0
        %4670 = vmatpush.bf16.msra.mxu0 %v3567
        %4671 = vmatpush.bf16.msra.mxu0 %v3560
        %4672 = vmatpush.bf16.msra.mxu0 %v3553
        %4673 = vmatpush.bf16.msra.mxu0 %v3546
        %4674 = vmatpush.bf16.msra.mxu0 %v3539
        %4675 = vmatpush.bf16.msra.mxu0 %v3532
        %4676 = vmatpush.bf16.msra.mxu0 %v3525
        %4677 = vmatpush.bf16.msra.mxu0 %v3518
        %4678 = vmatmul.bf16.gmra.mxu0 %v1589
        %v4679 = vpop.f32.mrf.mxu0
        %v4680 = vadd.f32 %v4667, %v4679
        %v4681 = vpop.f32.mrf.mxu0
        %4682 = vdwg.mxu0
        %4683 = vmatpush.bf16.msra.mxu0 %v3623
        %4684 = vmatpush.bf16.msra.mxu0 %v3616
        %4685 = vmatpush.bf16.msra.mxu0 %v3609
        %4686 = vmatpush.bf16.msra.mxu0 %v3602
        %4687 = vmatpush.bf16.msra.mxu0 %v3595
        %4688 = vmatpush.bf16.msra.mxu0 %v3588
        %4689 = vmatpush.bf16.msra.mxu0 %v3581
        %4690 = vmatpush.bf16.msra.mxu0 %v3574
        %4691 = vmatmul.bf16.gmra.mxu0 %v1590
        %v4692 = vpop.f32.mrf.mxu0
        %v4693 = vadd.f32 %v4680, %v4692
        %v4694 = vpop.f32.mrf.mxu0
        %4695 = vdwg.mxu0
        %4696 = vmatpush.bf16.msra.mxu0 %v3679
        %4697 = vmatpush.bf16.msra.mxu0 %v3672
        %4698 = vmatpush.bf16.msra.mxu0 %v3665
        %4699 = vmatpush.bf16.msra.mxu0 %v3658
        %4700 = vmatpush.bf16.msra.mxu0 %v3651
        %4701 = vmatpush.bf16.msra.mxu0 %v3644
        %4702 = vmatpush.bf16.msra.mxu0 %v3637
        %4703 = vmatpush.bf16.msra.mxu0 %v3630
        %4704 = vmatmul.bf16.gmra.mxu0 %v1591
        %v4705 = vpop.f32.mrf.mxu0
        %v4706 = vadd.f32 %v4693, %v4705
        %v4707 = vpop.f32.mrf.mxu0
        %4708 = vdwg.mxu0
        %v4709 = vmax.f32 %v4160, 0.0
        %v4710 = vmax.f32 %v4251, 0.0
        %v4711 = vmax.f32 %v4342, 0.0
        %v4712 = vmax.f32 %v4433, 0.0
        %v4713 = vmax.f32 %v4524, 0.0
        %v4714 = vmax.f32 %v4615, 0.0
        %v4715 = vmax.f32 %v4706, 0.0
        %v4716 = vpack.c.bf16 %v4709, %v4709
        %v4717 = vpack.c.bf16 %v4710, %v4710
        %v4718 = vpack.c.bf16 %v4711, %v4711
        %v4719 = vpack.c.bf16 %v4712, %v4712
        %v4720 = vpack.c.bf16 %v4713, %v4713
        %v4721 = vpack.c.bf16 %v4714, %v4714
        %v4722 = vpack.c.bf16 %v4715, %v4715
        %v4723 = vld [vmem:[%s5] sm:$0xf]
        %v4724 = vld [vmem:[%s5 + $0x4] sm:$0xf]
        %v4725 = vld [vmem:[%s5 + $0x8] sm:$0xf]
        %v4726 = vld [vmem:[%s5 + $0xc] sm:$0xf]
        %v4727 = vld [vmem:[%s5 + $0x10] sm:$0xf]
        %v4728 = vld [vmem:[%s5 + $0x14] sm:$0xf]
        %v4729 = vld [vmem:[%s5 + $0x18] sm:$0xf]
        %v4730 = vld [vmem:[%s5 + $0x1c] sm:$0xf]
        %v4731 = vld [vmem:[%s5 + $0x20] sm:$0xf]
        %v4732 = vld [vmem:[%s5 + $0x24] sm:$0xf]
        %v4733 = vld [vmem:[%s5 + $0x28] sm:$0xf]
        %v4734 = vld [vmem:[%s5 + $0x2c] sm:$0xf]
        %v4735 = vld [vmem:[%s5 + $0x30] sm:$0xf]
        %v4736 = vld [vmem:[%s5 + $0x34] sm:$0xf]
        %v4737 = vld [vmem:[%s5 + $0x38] sm:$0xf]
        %v4738 = vld [vmem:[%s5 + $0x3c] sm:$0xf]
        %v4739 = vld [vmem:[%s5 + $0x40] sm:$0xf]
        %v4740 = vld [vmem:[%s5 + $0x44] sm:$0xf]
        %v4741 = vld [vmem:[%s5 + $0x48] sm:$0xf]
        %v4742 = vld [vmem:[%s5 + $0x4c] sm:$0xf]
        %v4743 = vld [vmem:[%s5 + $0x50] sm:$0xf]
        %v4744 = vld [vmem:[%s5 + $0x54] sm:$0xf]
        %v4745 = vld [vmem:[%s5 + $0x58] sm:$0xf]
        %v4746 = vld [vmem:[%s5 + $0x5c] sm:$0xf]
        %v4747 = vld [vmem:[%s5 + $0x60] sm:$0xf]
        %v4748 = vld [vmem:[%s5 + $0x64] sm:$0xf]
        %v4749 = vld [vmem:[%s5 + $0x68] sm:$0xf]
        %v4750 = vld [vmem:[%s5 + $0x6c] sm:$0xf]
        %v4751 = vld [vmem:[%s5 + $0x70] sm:$0xf]
        %v4752 = vld [vmem:[%s5 + $0x74] sm:$0xf]
        %v4753 = vld [vmem:[%s5 + $0x78] sm:$0xf]
        %v4754 = vld [vmem:[%s5 + $0x7c] sm:$0xf]
        %v4755 = vld [vmem:[%s5 + $0x80] sm:$0xf]
        %v4756 = vld [vmem:[%s5 + $0x84] sm:$0xf]
        %v4757 = vld [vmem:[%s5 + $0x88] sm:$0xf]
        %v4758 = vld [vmem:[%s5 + $0x8c] sm:$0xf]
        %v4759 = vld [vmem:[%s5 + $0x90] sm:$0xf]
        %v4760 = vld [vmem:[%s5 + $0x94] sm:$0xf]
        %v4761 = vld [vmem:[%s5 + $0x98] sm:$0xf]
        %v4762 = vld [vmem:[%s5 + $0x9c] sm:$0xf]
        %v4763 = vld [vmem:[%s5 + $0xa0] sm:$0xf]
        %v4764 = vld [vmem:[%s5 + $0xa4] sm:$0xf]
        %v4765 = vld [vmem:[%s5 + $0xa8] sm:$0xf]
        %v4766 = vld [vmem:[%s5 + $0xac] sm:$0xf]
        %v4767 = vld [vmem:[%s5 + $0xb0] sm:$0xf]
        %v4768 = vld [vmem:[%s5 + $0xb4] sm:$0xf]
        %v4769 = vld [vmem:[%s5 + $0xb8] sm:$0xf]
        %v4770 = vld [vmem:[%s5 + $0xbc] sm:$0xf]
        %v4771 = vld [vmem:[%s5 + $0xc0] sm:$0xf]
        %v4772 = vld [vmem:[%s5 + $0xc4] sm:$0xf]
        %v4773 = vld [vmem:[%s5 + $0xc8] sm:$0xf]
        %v4774 = vld [vmem:[%s5 + $0xcc] sm:$0xf]
        %v4775 = vld [vmem:[%s5 + $0xd0] sm:$0xf]
        %v4776 = vld [vmem:[%s5 + $0xd4] sm:$0xf]
        %v4777 = vld [vmem:[%s5 + $0xd8] sm:$0xf]
        %v4778 = vld [vmem:[%s5 + $0xdc] sm:$0xf]
        %v4779 = vld [vmem:[%s5 + $0xe0] sm:$0xf]
        %v4780 = vld [vmem:[%s5 + $0xe4] sm:$0xf]
        %v4781 = vld [vmem:[%s5 + $0xe8] sm:$0xf]
        %v4782 = vld [vmem:[%s5 + $0xec] sm:$0xf]
        %v4783 = vld [vmem:[%s5 + $0xf0] sm:$0xf]
        %v4784 = vld [vmem:[%s5 + $0xf4] sm:$0xf]
        %v4785 = vld [vmem:[%s5 + $0xf8] sm:$0xf]
        %v4786 = vld [vmem:[%s5 + $0xfc] sm:$0xf]
        %v4787 = vld [vmem:[%s5 + $0x100] sm:$0xf]
        %v4788 = vld [vmem:[%s5 + $0x104] sm:$0xf]
        %v4789 = vld [vmem:[%s5 + $0x108] sm:$0xf]
        %v4790 = vld [vmem:[%s5 + $0x10c] sm:$0xf]
        %v4791 = vld [vmem:[%s5 + $0x110] sm:$0xf]
        %v4792 = vld [vmem:[%s5 + $0x114] sm:$0xf]
        %v4793 = vld [vmem:[%s5 + $0x118] sm:$0xf]
        %v4794 = vld [vmem:[%s5 + $0x11c] sm:$0xf]
        %v4795 = vld [vmem:[%s5 + $0x120] sm:$0xf]
        %v4796 = vld [vmem:[%s5 + $0x124] sm:$0xf]
        %v4797 = vld [vmem:[%s5 + $0x128] sm:$0xf]
        %v4798 = vld [vmem:[%s5 + $0x12c] sm:$0xf]
        %v4799 = vld [vmem:[%s5 + $0x130] sm:$0xf]
        %v4800 = vld [vmem:[%s5 + $0x134] sm:$0xf]
        %v4801 = vld [vmem:[%s5 + $0x138] sm:$0xf]
        %v4802 = vld [vmem:[%s5 + $0x13c] sm:$0xf]
        %v4803 = vld [vmem:[%s5 + $0x140] sm:$0xf]
        %v4804 = vld [vmem:[%s5 + $0x144] sm:$0xf]
        %v4805 = vld [vmem:[%s5 + $0x148] sm:$0xf]
        %v4806 = vld [vmem:[%s5 + $0x14c] sm:$0xf]
        %v4807 = vld [vmem:[%s5 + $0x150] sm:$0xf]
        %v4808 = vld [vmem:[%s5 + $0x154] sm:$0xf]
        %v4809 = vld [vmem:[%s5 + $0x158] sm:$0xf]
        %v4810 = vld [vmem:[%s5 + $0x15c] sm:$0xf]
        %v4811 = vld [vmem:[%s5 + $0x160] sm:$0xf]
        %v4812 = vld [vmem:[%s5 + $0x164] sm:$0xf]
        %v4813 = vld [vmem:[%s5 + $0x168] sm:$0xf]
        %v4814 = vld [vmem:[%s5 + $0x16c] sm:$0xf]
        %v4815 = vld [vmem:[%s5 + $0x170] sm:$0xf]
        %v4816 = vld [vmem:[%s5 + $0x174] sm:$0xf]
        %v4817 = vld [vmem:[%s5 + $0x178] sm:$0xf]
        %v4818 = vld [vmem:[%s5 + $0x17c] sm:$0xf]
        %v4819 = vld [vmem:[%s5 + $0x180] sm:$0xf]
        %v4820 = vld [vmem:[%s5 + $0x184] sm:$0xf]
        %v4821 = vld [vmem:[%s5 + $0x188] sm:$0xf]
        %v4822 = vld [vmem:[%s5 + $0x18c] sm:$0xf]
        %v4823 = vld [vmem:[%s5 + $0x190] sm:$0xf]
        %v4824 = vld [vmem:[%s5 + $0x194] sm:$0xf]
        %v4825 = vld [vmem:[%s5 + $0x198] sm:$0xf]
        %v4826 = vld [vmem:[%s5 + $0x19c] sm:$0xf]
        %v4827 = vld [vmem:[%s5 + $0x1a0] sm:$0xf]
        %v4828 = vld [vmem:[%s5 + $0x1a4] sm:$0xf]
        %v4829 = vld [vmem:[%s5 + $0x1a8] sm:$0xf]
        %v4830 = vld [vmem:[%s5 + $0x1ac] sm:$0xf]
        %v4831 = vld [vmem:[%s5 + $0x1b0] sm:$0xf]
        %v4832 = vld [vmem:[%s5 + $0x1b4] sm:$0xf]
        %v4833 = vld [vmem:[%s5 + $0x1b8] sm:$0xf]
        %v4834 = vld [vmem:[%s5 + $0x1bc] sm:$0xf]
        %v4835 = vld [vmem:[#allocation12] sm:$0x1]
        %v4837 = vperm.slane %v4835, 0
        %v4951 = vunpack.c.l.b16 %v4723
        %v4952 = vunpack.c.l.b16 %v4724
        %v4953 = vunpack.c.l.b16 %v4725
        %v4954 = vunpack.c.l.b16 %v4726
        %v4955 = vunpack.c.l.b16 %v4727
        %v4956 = vunpack.c.l.b16 %v4728
        %v4957 = vunpack.c.l.b16 %v4729
        %v4958 = vunpack.c.l.b16 %v4730
        %v4959 = vunpack.c.l.b16 %v4731
        %v4960 = vunpack.c.l.b16 %v4732
        %v4961 = vunpack.c.l.b16 %v4733
        %v4962 = vunpack.c.l.b16 %v4734
        %v4963 = vunpack.c.l.b16 %v4735
        %v4964 = vunpack.c.l.b16 %v4736
        %v4965 = vunpack.c.l.b16 %v4737
        %v4966 = vunpack.c.l.b16 %v4738
        %v4967 = vunpack.c.l.b16 %v4739
        %v4968 = vunpack.c.l.b16 %v4740
        %v4969 = vunpack.c.l.b16 %v4741
        %v4970 = vunpack.c.l.b16 %v4742
        %v4971 = vunpack.c.l.b16 %v4743
        %v4972 = vunpack.c.l.b16 %v4744
        %v4973 = vunpack.c.l.b16 %v4745
        %v4974 = vunpack.c.l.b16 %v4746
        %v4975 = vunpack.c.l.b16 %v4747
        %v4976 = vunpack.c.l.b16 %v4748
        %v4977 = vunpack.c.l.b16 %v4749
        %v4978 = vunpack.c.l.b16 %v4750
        %v4979 = vunpack.c.l.b16 %v4751
        %v4980 = vunpack.c.l.b16 %v4752
        %v4981 = vunpack.c.l.b16 %v4753
        %v4982 = vunpack.c.l.b16 %v4754
        %v4983 = vunpack.c.l.b16 %v4755
        %v4984 = vunpack.c.l.b16 %v4756
        %v4985 = vunpack.c.l.b16 %v4757
        %v4986 = vunpack.c.l.b16 %v4758
        %v4987 = vunpack.c.l.b16 %v4759
        %v4988 = vunpack.c.l.b16 %v4760
        %v4989 = vunpack.c.l.b16 %v4761
        %v4990 = vunpack.c.l.b16 %v4762
        %v4991 = vunpack.c.l.b16 %v4763
        %v4992 = vunpack.c.l.b16 %v4764
        %v4993 = vunpack.c.l.b16 %v4765
        %v4994 = vunpack.c.l.b16 %v4766
        %v4995 = vunpack.c.l.b16 %v4767
        %v4996 = vunpack.c.l.b16 %v4768
        %v4997 = vunpack.c.l.b16 %v4769
        %v4998 = vunpack.c.l.b16 %v4770
        %v4999 = vunpack.c.l.b16 %v4771
        %v5000 = vunpack.c.l.b16 %v4772
        %v5001 = vunpack.c.l.b16 %v4773
        %v5002 = vunpack.c.l.b16 %v4774
        %v5003 = vunpack.c.l.b16 %v4775
        %v5004 = vunpack.c.l.b16 %v4776
        %v5005 = vunpack.c.l.b16 %v4777
        %v5006 = vunpack.c.l.b16 %v4778
        %v5007 = vunpack.c.l.b16 %v4779
        %v5008 = vunpack.c.l.b16 %v4780
        %v5009 = vunpack.c.l.b16 %v4781
        %v5010 = vunpack.c.l.b16 %v4782
        %v5011 = vunpack.c.l.b16 %v4783
        %v5012 = vunpack.c.l.b16 %v4784
        %v5013 = vunpack.c.l.b16 %v4785
        %v5014 = vunpack.c.l.b16 %v4786
        %v5015 = vunpack.c.l.b16 %v4787
        %v5016 = vunpack.c.l.b16 %v4788
        %v5017 = vunpack.c.l.b16 %v4789
        %v5018 = vunpack.c.l.b16 %v4790
        %v5019 = vunpack.c.l.b16 %v4791
        %v5020 = vunpack.c.l.b16 %v4792
        %v5021 = vunpack.c.l.b16 %v4793
        %v5022 = vunpack.c.l.b16 %v4794
        %v5023 = vunpack.c.l.b16 %v4795
        %v5024 = vunpack.c.l.b16 %v4796
        %v5025 = vunpack.c.l.b16 %v4797
        %v5026 = vunpack.c.l.b16 %v4798
        %v5027 = vunpack.c.l.b16 %v4799
        %v5028 = vunpack.c.l.b16 %v4800
        %v5029 = vunpack.c.l.b16 %v4801
        %v5030 = vunpack.c.l.b16 %v4802
        %v5031 = vunpack.c.l.b16 %v4803
        %v5032 = vunpack.c.l.b16 %v4804
        %v5033 = vunpack.c.l.b16 %v4805
        %v5034 = vunpack.c.l.b16 %v4806
        %v5035 = vunpack.c.l.b16 %v4807
        %v5036 = vunpack.c.l.b16 %v4808
        %v5037 = vunpack.c.l.b16 %v4809
        %v5038 = vunpack.c.l.b16 %v4810
        %v5039 = vunpack.c.l.b16 %v4811
        %v5040 = vunpack.c.l.b16 %v4812
        %v5041 = vunpack.c.l.b16 %v4813
        %v5042 = vunpack.c.l.b16 %v4814
        %v5043 = vunpack.c.l.b16 %v4815
        %v5044 = vunpack.c.l.b16 %v4816
        %v5045 = vunpack.c.l.b16 %v4817
        %v5046 = vunpack.c.l.b16 %v4818
        %v5047 = vunpack.c.l.b16 %v4819
        %v5048 = vunpack.c.l.b16 %v4820
        %v5049 = vunpack.c.l.b16 %v4821
        %v5050 = vunpack.c.l.b16 %v4822
        %v5051 = vunpack.c.l.b16 %v4823
        %v5052 = vunpack.c.l.b16 %v4824
        %v5053 = vunpack.c.l.b16 %v4825
        %v5054 = vunpack.c.l.b16 %v4826
        %v5055 = vunpack.c.l.b16 %v4827
        %v5056 = vunpack.c.l.b16 %v4828
        %v5057 = vunpack.c.l.b16 %v4829
        %v5058 = vunpack.c.l.b16 %v4830
        %v5059 = vunpack.c.l.b16 %v4831
        %v5060 = vunpack.c.l.b16 %v4832
        %v5061 = vunpack.c.l.b16 %v4833
        %v5062 = vunpack.c.l.b16 %v4834
        %v5063 = vpack.c.b16 %v4952, %v4951
        %v5064 = vpack.c.b16 %v4954, %v4953
        %v5065 = vpack.c.b16 %v4956, %v4955
        %v5066 = vpack.c.b16 %v4958, %v4957
        %v5067 = vpack.c.b16 %v4960, %v4959
        %v5068 = vpack.c.b16 %v4962, %v4961
        %v5069 = vpack.c.b16 %v4964, %v4963
        %v5070 = vpack.c.b16 %v4966, %v4965
        %v5071 = vpack.c.b16 %v4968, %v4967
        %v5072 = vpack.c.b16 %v4970, %v4969
        %v5073 = vpack.c.b16 %v4972, %v4971
        %v5074 = vpack.c.b16 %v4974, %v4973
        %v5075 = vpack.c.b16 %v4976, %v4975
        %v5076 = vpack.c.b16 %v4978, %v4977
        %v5077 = vpack.c.b16 %v4980, %v4979
        %v5078 = vpack.c.b16 %v4982, %v4981
        %v5079 = vpack.c.b16 %v4984, %v4983
        %v5080 = vpack.c.b16 %v4986, %v4985
        %v5081 = vpack.c.b16 %v4988, %v4987
        %v5082 = vpack.c.b16 %v4990, %v4989
        %v5083 = vpack.c.b16 %v4992, %v4991
        %v5084 = vpack.c.b16 %v4994, %v4993
        %v5085 = vpack.c.b16 %v4996, %v4995
        %v5086 = vpack.c.b16 %v4998, %v4997
        %v5087 = vpack.c.b16 %v5000, %v4999
        %v5088 = vpack.c.b16 %v5002, %v5001
        %v5089 = vpack.c.b16 %v5004, %v5003
        %v5090 = vpack.c.b16 %v5006, %v5005
        %v5091 = vpack.c.b16 %v5008, %v5007
        %v5092 = vpack.c.b16 %v5010, %v5009
        %v5093 = vpack.c.b16 %v5012, %v5011
        %v5094 = vpack.c.b16 %v5014, %v5013
        %v5095 = vpack.c.b16 %v5016, %v5015
        %v5096 = vpack.c.b16 %v5018, %v5017
        %v5097 = vpack.c.b16 %v5020, %v5019
        %v5098 = vpack.c.b16 %v5022, %v5021
        %v5099 = vpack.c.b16 %v5024, %v5023
        %v5100 = vpack.c.b16 %v5026, %v5025
        %v5101 = vpack.c.b16 %v5028, %v5027
        %v5102 = vpack.c.b16 %v5030, %v5029
        %v5103 = vpack.c.b16 %v5032, %v5031
        %v5104 = vpack.c.b16 %v5034, %v5033
        %v5105 = vpack.c.b16 %v5036, %v5035
        %v5106 = vpack.c.b16 %v5038, %v5037
        %v5107 = vpack.c.b16 %v5040, %v5039
        %v5108 = vpack.c.b16 %v5042, %v5041
        %v5109 = vpack.c.b16 %v5044, %v5043
        %v5110 = vpack.c.b16 %v5046, %v5045
        %v5111 = vpack.c.b16 %v5048, %v5047
        %v5112 = vpack.c.b16 %v5050, %v5049
        %v5113 = vpack.c.b16 %v5052, %v5051
        %v5114 = vpack.c.b16 %v5054, %v5053
        %v5115 = vpack.c.b16 %v5056, %v5055
        %v5116 = vpack.c.b16 %v5058, %v5057
        %v5117 = vpack.c.b16 %v5060, %v5059
        %v5118 = vpack.c.b16 %v5062, %v5061
        %5175 = vmatpush.bf16.msra.mxu0 %v5070
        %5176 = vmatpush.bf16.msra.mxu0 %v5069
        %5177 = vmatpush.bf16.msra.mxu0 %v5068
        %5178 = vmatpush.bf16.msra.mxu0 %v5067
        %5179 = vmatpush.bf16.msra.mxu0 %v5066
        %5180 = vmatpush.bf16.msra.mxu0 %v5065
        %5181 = vmatpush.bf16.msra.mxu0 %v5064
        %5182 = vmatpush.bf16.msra.mxu0 %v5063
        %5183 = vmatmul.bf16.gmra.mxu0 %v4716
        %v5184 = vpop.f32.mrf.mxu0
        %v5185 = vadd.f32 %v4837, %v5184
        %v5186 = vpop.f32.mrf.mxu0
        %5187 = vdwg.mxu0
        %5188 = vmatpush.bf16.msra.mxu0 %v5078
        %5189 = vmatpush.bf16.msra.mxu0 %v5077
        %5190 = vmatpush.bf16.msra.mxu0 %v5076
        %5191 = vmatpush.bf16.msra.mxu0 %v5075
        %5192 = vmatpush.bf16.msra.mxu0 %v5074
        %5193 = vmatpush.bf16.msra.mxu0 %v5073
        %5194 = vmatpush.bf16.msra.mxu0 %v5072
        %5195 = vmatpush.bf16.msra.mxu0 %v5071
        %5196 = vmatmul.bf16.gmra.mxu0 %v4717
        %v5197 = vpop.f32.mrf.mxu0
        %v5198 = vadd.f32 %v5185, %v5197
        %v5199 = vpop.f32.mrf.mxu0
        %5200 = vdwg.mxu0
        %5201 = vmatpush.bf16.msra.mxu0 %v5086
        %5202 = vmatpush.bf16.msra.mxu0 %v5085
        %5203 = vmatpush.bf16.msra.mxu0 %v5084
        %5204 = vmatpush.bf16.msra.mxu0 %v5083
        %5205 = vmatpush.bf16.msra.mxu0 %v5082
        %5206 = vmatpush.bf16.msra.mxu0 %v5081
        %5207 = vmatpush.bf16.msra.mxu0 %v5080
        %5208 = vmatpush.bf16.msra.mxu0 %v5079
        %5209 = vmatmul.bf16.gmra.mxu0 %v4718
        %v5210 = vpop.f32.mrf.mxu0
        %v5211 = vadd.f32 %v5198, %v5210
        %v5212 = vpop.f32.mrf.mxu0
        %5213 = vdwg.mxu0
        %5214 = vmatpush.bf16.msra.mxu0 %v5094
        %5215 = vmatpush.bf16.msra.mxu0 %v5093
        %5216 = vmatpush.bf16.msra.mxu0 %v5092
        %5217 = vmatpush.bf16.msra.mxu0 %v5091
        %5218 = vmatpush.bf16.msra.mxu0 %v5090
        %5219 = vmatpush.bf16.msra.mxu0 %v5089
        %5220 = vmatpush.bf16.msra.mxu0 %v5088
        %5221 = vmatpush.bf16.msra.mxu0 %v5087
        %5222 = vmatmul.bf16.gmra.mxu0 %v4719
        %v5223 = vpop.f32.mrf.mxu0
        %v5224 = vadd.f32 %v5211, %v5223
        %v5225 = vpop.f32.mrf.mxu0
        %5226 = vdwg.mxu0
        %5227 = vmatpush.bf16.msra.mxu0 %v5102
        %5228 = vmatpush.bf16.msra.mxu0 %v5101
        %5229 = vmatpush.bf16.msra.mxu0 %v5100
        %5230 = vmatpush.bf16.msra.mxu0 %v5099
        %5231 = vmatpush.bf16.msra.mxu0 %v5098
        %5232 = vmatpush.bf16.msra.mxu0 %v5097
        %5233 = vmatpush.bf16.msra.mxu0 %v5096
        %5234 = vmatpush.bf16.msra.mxu0 %v5095
        %5235 = vmatmul.bf16.gmra.mxu0 %v4720
        %v5236 = vpop.f32.mrf.mxu0
        %v5237 = vadd.f32 %v5224, %v5236
        %v5238 = vpop.f32.mrf.mxu0
        %5239 = vdwg.mxu0
        %5240 = vmatpush.bf16.msra.mxu0 %v5110
        %5241 = vmatpush.bf16.msra.mxu0 %v5109
        %5242 = vmatpush.bf16.msra.mxu0 %v5108
        %5243 = vmatpush.bf16.msra.mxu0 %v5107
        %5244 = vmatpush.bf16.msra.mxu0 %v5106
        %5245 = vmatpush.bf16.msra.mxu0 %v5105
        %5246 = vmatpush.bf16.msra.mxu0 %v5104
        %5247 = vmatpush.bf16.msra.mxu0 %v5103
        %5248 = vmatmul.bf16.gmra.mxu0 %v4721
        %v5249 = vpop.f32.mrf.mxu0
        %v5250 = vadd.f32 %v5237, %v5249
        %v5251 = vpop.f32.mrf.mxu0
        %5252 = vdwg.mxu0
        %5253 = vmatpush.bf16.msra.mxu0 %v5118
        %5254 = vmatpush.bf16.msra.mxu0 %v5117
        %5255 = vmatpush.bf16.msra.mxu0 %v5116
        %5256 = vmatpush.bf16.msra.mxu0 %v5115
        %5257 = vmatpush.bf16.msra.mxu0 %v5114
        %5258 = vmatpush.bf16.msra.mxu0 %v5113
        %5259 = vmatpush.bf16.msra.mxu0 %v5112
        %5260 = vmatpush.bf16.msra.mxu0 %v5111
        %5261 = vmatmul.bf16.gmra.mxu0 %v4722
        %v5262 = vpop.f32.mrf.mxu0
        %v5263 = vadd.f32 %v5250, %v5262
        %v5264 = vpop.f32.mrf.mxu0
        %5265 = vdwg.mxu0
        %v5266 = vmul.f32 %v5263, 0.5
        %v5267 = vmul.f32 %v5266, 1.442695
        %v5268 = vpow.pop %v5267
        %v5269 = vld [vmem:[%s595] sm:$0xff]
        %5271 = vrot.lane.b32.xlu0 %v5268, 96
        %v5272 = vpop.permute.xlu0 %5271
        %v5274 = vmul.f32 %v5269, %v5272
        %v5275 = vadd.f32 %v5274, %v5263
        %v5276 = vpack.c.bf16 %v5275, %v5275
        %v5277 = vld [vmem:[#allocation15] sm:$0xff]
        %v5278 = vld [vmem:[#allocation15 + $0x8] sm:$0xff]
        %v5279 = vld [vmem:[#allocation15 + $0x10] sm:$0xff]
        %v5280 = vld [vmem:[#allocation15 + $0x18] sm:$0xff]
        %v5281 = vld [vmem:[#allocation16] sm:$0x3]
        %v5283 = vperm.slane %v5281, 0
        %v5284 = vperm.slane %v5281, 1
        %v5291 = vunpack.c.l.b16 %v5277
        %v5292 = vunpack.c.h.b16 %v5277
        %v5293 = vunpack.c.l.b16 %v5278
        %v5294 = vunpack.c.h.b16 %v5278
        %v5295 = vunpack.c.l.b16 %v5279
        %v5296 = vunpack.c.h.b16 %v5279
        %v5297 = vunpack.c.l.b16 %v5280
        %v5298 = vunpack.c.h.b16 %v5280
        %v5299 = vpack.c.b16 %v5293, %v5291
        %v5300 = vpack.c.b16 %v5294, %v5292
        %v5301 = vpack.c.b16 %v5297, %v5295
        %v5302 = vpack.c.b16 %v5298, %v5296
        %vm5307 = vcmask 261120
        %v5309 = vsel %vm5307, %v5276, 0
        %5311 = vmatpush.bf16.msra.mxu0 0
        %5312 = vmatpush.bf16.msra.mxu0 0
        %5313 = vmatpush.bf16.msra.mxu0 0
        %5314 = vmatpush.bf16.msra.mxu0 0
        %5315 = vmatpush.bf16.msra.mxu0 0
        %5316 = vmatpush.bf16.msra.mxu0 0
        %5317 = vmatpush.bf16.msra.mxu0 %v5301
        %5318 = vmatpush.bf16.msra.mxu0 %v5299
        %5319 = vmatmul.bf16.gmra.mxu0 %v5309
        %v5320 = vpop.f32.mrf.mxu0
        %v5321 = vadd.f32 %v5283, %v5320
        %v5322 = vpop.f32.mrf.mxu0
        %5323 = vdwg.mxu0
        %5324 = vmatpush.bf16.msra.mxu0 0
        %5325 = vmatpush.bf16.msra.mxu0 0
        %5326 = vmatpush.bf16.msra.mxu0 0
        %5327 = vmatpush.bf16.msra.mxu0 0
        %5328 = vmatpush.bf16.msra.mxu0 0
        %5329 = vmatpush.bf16.msra.mxu0 0
        %5330 = vmatpush.bf16.msra.mxu0 %v5302
        %5331 = vmatpush.bf16.msra.mxu0 %v5300
        %5332 = vmatmul.bf16.gmra.mxu0 %v5309
        %v5333 = vpop.f32.mrf.mxu0
        %v5334 = vadd.f32 %v5284, %v5333
        %v5335 = vpop.f32.mrf.mxu0
        %5336 = vdwg.mxu0
        %5337 = vst [vmem:[%s663] sm:$0xff] %v5321
        %5338 = vst [vmem:[%s663 + $0x8] sm:$0xff] %v5334
        %v5339 = vld [vmem:[#allocation17] sm:$0x1]
        %v5341 = vperm.slane %v5339, 0
        %v5343 = vmul.f32 %v5275, %v5341
        %v5344 = vsel %vm5307, %v5343, 0.0
        %5345 = vadd.xlane.f32.xlu0 %v5344
        %v5346 = vpop.xlane.xlu0 %5345
        %v5347 = vld [vmem:[#allocation2] sm:$0x1]
        %v5349 = vperm.slane %v5347, 0
        %v5351 = vadd.f32 %v5346, %v5349
        %v5352 = vmax.f32 %v5351, 0.0
        %v5353 = vld [vmem:[#allocation18] sm:$0x1]
        %v5355 = vperm.slane %v5353, 0
        %5358 = vset.pattern.permute.xlu0 0
        %5359 = vperm.xlu0 %5358, %v5352
        %v5360 = vpop.permute.xlu0 %5359
        %v5362 = vsub.f32 %v5355, %v5360
        %v5363 = vxor.u32 %v5362, 2147483648
        %v5364 = vmul.f32 %v5363, 1.442695
        %v5365 = vpow.pop %v5364
        %v5366 = vadd.f32 %v5365, 1.0
        %v5367 = vrcp.pop %v5366
        %v5368 = vmul.f32 %v5366, %v5367
        %v5369 = vsub.f32 1.0, %v5368
        %v5370 = vmul.f32 %v5367, %v5369
        %v5371 = vadd.f32 %v5367, %v5370
        %vm5372 = vweird.f32 %v5366
        %vm5373 = vweird.f32 %v5367
        %vm5374 = vmor %vm5372, %vm5373
        %v5375 = vsel %vm5374, %v5367, %v5371
        %v5376 = vand.u32 2147483647, %v5366
        %vm5377 = vcmp.eq.f32.partialorder %v5376, 8.507059e+37
        %v5378 = vand.u32 %v5366, 2147483648
        %v5379 = vor.u32 1.1754944e-38, %v5378
        %v5380 = vsel %vm5377, %v5379, %v5375
        %v5381 = vmul.f32 1.0, %v5380
        %5383 = vrot.lane.b32.xlu0 %v5381, 1
        %v5384 = vpop.permute.xlu0 %5383
        %v5386 = vsub.f32 %v5381, %v5384
        %5387 = vst [vmem:[%s670] sm:$0xff] 0.0
        %vm5388 = vcmask 523264
        %5389 = vst.msk [vmem:[%s670] sm:$0xff] %vm5388, %v5263
        %5391 = vrot.lane.b32.xlu0 %v5386, 63
        %v5392 = vpop.permute.xlu0 %5391
        %vm5394 = vcmask 597504
        %5395 = vst.msk [vmem:[%s670] sm:$0xff] %vm5394, %v5392
        %s5396 = sand.u32 %s332, 1
        %s5397 = scalar_lea.sflag [#allocation5], %s5396
        %s5398 = sand.u32 %s332, 1
        %s5399 = smul.addr %s5398, 16
        %s5400 = scalar_lea.vmem [#allocation20], %s5399
        %s5401 = sand.u32 %s358, 1
        %s5402 = scalar_lea.sflag [#allocation22], %s5401
        %s5403 = sand.u32 %s358, 1
        %s5404 = smul.addr %s5403, 8
        %s5405 = scalar_lea.vmem [#allocation21], %s5404
        // Predicated region
        $region117: #{tpu_custom_call.1} parent=71 // pred_check
          %p5406 = pneg %p342
        $region118: #{tpu_custom_call.1} parent=71 // pred_check_branch
          %5408 = sbr.rel (%p5406) target = $region120
        $region119: #{tpu_custom_call.1} parent=71 // pred_region
          %5410 = vsyncadd %s5397, 0
          %s5411 = smul.addr %s41, 2
          %s5412 = smul.addr %s5411, 8
          %s5413 = scalar_lea.hbm %s13, %s5412
          %s5415 = sshll.u32 %s5400, 4
          %s5416 = int_to_ptr.vmem [resolvable:$true] %s5415
          %s5417 = sshll.u32 %s5413, 4
          %s5418 = int_to_ptr.hbm [resolvable:$true] %s5417
          %5420 = dma.vmem_to_hbm [thread:$0]  %s5416, 256, %s5418, %s5397
        $region120: #{tpu_custom_call.1} parent=71 // pred_fallthru
          _
        // Predicated region
        $region121: #{tpu_custom_call.1} parent=71 // pred_check
          %p5421 = pneg %p368
        $region122: #{tpu_custom_call.1} parent=71 // pred_check_branch
          %5423 = sbr.rel (%p5421) target = $region124
        $region123: #{tpu_custom_call.1} parent=71 // pred_region
          %5425 = vsyncadd %s5402, 0
          %s5426 = smul.addr %s41, 8
          %s5427 = scalar_lea.hbm %s14, %s5426
          %s5429 = sshll.u32 %s5405, 4
          %s5430 = int_to_ptr.vmem [resolvable:$true] %s5429
          %s5431 = sshll.u32 %s5427, 4
          %s5432 = int_to_ptr.hbm [resolvable:$true] %s5431
          %5434 = dma.vmem_to_hbm [thread:$0]  %s5430, 128, %s5432, %s5402
        $region124: #{tpu_custom_call.1} parent=71 // pred_fallthru
          _
      $region72: #{tpu_custom_call.1} parent=5 // pred_fallthru
        _
      %p5435 = scmp.le.s32.totalorder 2, %s36
      // Predicated region
      $region125: #{tpu_custom_call.1} parent=5 // pred_check
        %p5436 = pneg %p5435
      $region126: #{tpu_custom_call.1} parent=5 // pred_check_branch
        %5438 = sbr.rel (%p5436) target = $region128
      $region127: #{tpu_custom_call.1} parent=5 // pred_region
        %s5439 = ssub.s32 %s36, 2
        // Predicated region
        $region129: #{tpu_custom_call.1} parent=127 // pred_check
          %p5440 = pneg %p348
        $region130: #{tpu_custom_call.1} parent=127 // pred_check_branch
          %5442 = sbr.rel (%p5440) target = $region132
        $region131: #{tpu_custom_call.1} parent=127 // pred_region
          %s5443 = sand.u32 %s333, 1
          %s5444 = scalar_lea.sflag [#allocation5], %s5443
          %s5445 = sand.u32 %s333, 1
          %s5446 = smul.addr %s5445, 16
          %s5447 = scalar_lea.vmem [#allocation20], %s5446
          %5449 = dma.done %s5444, 256
        $region132: #{tpu_custom_call.1} parent=127 // pred_fallthru
          _
        // Predicated region
        $region133: #{tpu_custom_call.1} parent=127 // pred_check
          %p5450 = pneg %p374
        $region134: #{tpu_custom_call.1} parent=127 // pred_check_branch
          %5452 = sbr.rel (%p5450) target = $region136
        $region135: #{tpu_custom_call.1} parent=127 // pred_region
          %s5453 = sand.u32 %s359, 1
          %s5454 = scalar_lea.sflag [#allocation22], %s5453
          %s5455 = sand.u32 %s359, 1
          %s5456 = smul.addr %s5455, 8
          %s5457 = scalar_lea.vmem [#allocation21], %s5456
          %5459 = dma.done %s5454, 128
        $region136: #{tpu_custom_call.1} parent=127 // pred_fallthru
          _
      $region128: #{tpu_custom_call.1} parent=5 // pred_fallthru
        _
    $region6: #{tpu_custom_call.1} parent=1 // loop_footer
      %s40 = sadd.s32 1, %s36
    $region7: #{tpu_custom_call.1} parent=1 // loop_footer_branch
      %35 = sbr.rel target = $region3
    $region8: #{tpu_custom_call.1} parent=1 // loop_exit
      _
    %5460 = vsyncpa [#allocation4], 1
    %s5461 = scalar_lea.sflag [#allocation4], 1
    %5462 = vsyncpa %s5461, 1
    %5463 = vsyncpa [#allocation7], 1
    %5464 = vsyncpa [#allocation10], 1
    %5465 = vsyncpa [#allocation13], 1
    %5466 = vsyncpa [#allocation19], 1
    %5467 = vsyncpa [#allocation5], 1
    %s5468 = scalar_lea.sflag [#allocation5], 1
    %5469 = vsyncpa %s5468, 1
    %5470 = vsyncpa [#allocation22], 1
    %s5471 = scalar_lea.sflag [#allocation22], 1
    %5472 = vsyncpa %s5471, 1

</llo_original>
